<compile_context>
chip_gen: v7x
topology: tpu7x:2x2x1
jax: 0.10.0
libtpu: 0.0.40
codegen_flags: <defaults>
</compile_context>

<pallas_src>
from functools import partial

import jax
import jax.numpy as jnp
from jax import lax
from jax.experimental import pallas as pl
from jax.experimental.pallas import tpu as pltpu

EPS = 1e-5
LANE = 128
VMEM_LIMIT = 48 * 1024 * 1024   # > v5e/v6e/v7x scoped defaults, < every physical


# ----------------------------- Pallas kernels ------------------------------ #

def _conv3x3_kernel(x_ref, w_ref, y_ref, s_ref, q_ref, acc_ref, *,
                    stride, Ho, Wo, Cin):
    """9-tap accumulating matmul for one image + f32 per-image BN-stat partials.

    x_ref : (stride*stride, Hq, Wq, Cin)  phase-split zero-padded input (bf16)
    w_ref : (3, 3, Cin, Cp)               per-tap weights (bf16)
    y_ref : (1, Ho, Wo, Cp)               conv output (bf16)
    s_ref, q_ref : (1, 1, 1, Cp)          per-image sum / sum-of-squares (f32)
    acc_ref : VMEM scratch (Ho*Wo, Cp) f32
    """
    acc_ref[...] = jnp.zeros_like(acc_ref)
    for kh in range(3):
        for kw in range(3):
            ph = (kh % stride) * stride + (kw % stride)
            win = x_ref[ph,
                        kh // stride: kh // stride + Ho,
                        kw // stride: kw // stride + Wo, :].reshape(Ho * Wo, Cin)
            acc_ref[...] += jnp.dot(win, w_ref[kh, kw],
                                    preferred_element_type=jnp.float32)
    acc = acc_ref[...]
    y_ref[...] = acc.reshape(1, Ho, Wo, -1).astype(y_ref.dtype)
    s_ref[...] = jnp.sum(acc, axis=0).reshape(1, 1, 1, -1)
    q_ref[...] = jnp.sum(acc * acc, axis=0).reshape(1, 1, 1, -1)


def _conv3x3_sc_kernel(x_ref, w_ref, ws_ref, y_ref, ysc_ref,
                       s_ref, q_ref, ss_ref, qs_ref, acc_ref, *,
                       stride, Ho, Wo, Cin):
    """conv1 + fused 1x1-stride-s shortcut conv (reuses the centre-tap window)."""
    acc_ref[...] = jnp.zeros_like(acc_ref)
    win_center = None
    for kh in range(3):
        for kw in range(3):
            ph = (kh % stride) * stride + (kw % stride)
            win = x_ref[ph,
                        kh // stride: kh // stride + Ho,
                        kw // stride: kw // stride + Wo, :].reshape(Ho * Wo, Cin)
            if kh == 1 and kw == 1:
                win_center = win          # exactly the 1x1-conv input window
            acc_ref[...] += jnp.dot(win, w_ref[kh, kw],
                                    preferred_element_type=jnp.float32)
    acc = acc_ref[...]
    y_ref[...] = acc.reshape(1, Ho, Wo, -1).astype(y_ref.dtype)
    s_ref[...] = jnp.sum(acc, axis=0).reshape(1, 1, 1, -1)
    q_ref[...] = jnp.sum(acc * acc, axis=0).reshape(1, 1, 1, -1)

    ysc = jnp.dot(win_center, ws_ref[...], preferred_element_type=jnp.float32)
    ysc_ref[...] = ysc.reshape(1, Ho, Wo, -1).astype(ysc_ref.dtype)
    ss_ref[...] = jnp.sum(ysc, axis=0).reshape(1, 1, 1, -1)
    qs_ref[...] = jnp.sum(ysc * ysc, axis=0).reshape(1, 1, 1, -1)


def _bn_add_relu_kernel(y_ref, r_ref, s2_ref, b2_ref, sr_ref, br_ref, o_ref):
    pre = (y_ref[...].astype(jnp.float32) * s2_ref[...] + b2_ref[...]
           + r_ref[...].astype(jnp.float32) * sr_ref[...] + br_ref[...])
    o_ref[...] = jnp.maximum(pre, 0.0)


def _bn_add_relu_preact_kernel(y_ref, r_ref, s2_ref, b2_ref, sr_ref, br_ref,
                               o_ref, p_ref):
    pre = (y_ref[...].astype(jnp.float32) * s2_ref[...] + b2_ref[...]
           + r_ref[...].astype(jnp.float32) * sr_ref[...] + br_ref[...])
    p_ref[...] = pre
    o_ref[...] = jnp.maximum(pre, 0.0)


# --------------------------- pallas_call wrappers --------------------------- #

def _conv3x3_bnstats(xsplit, w_tap, stride, Ho, Wo, w_sc=None):
    """Per-image grid conv; returns bf16 conv output(s) + f32 partial stats."""
    nphase, Hq, Wq, Cin = xsplit.shape
    s2 = stride * stride
    N = nphase // s2
    Cp = w_tap.shape[-1]

    y_sh = jax.ShapeDtypeStruct((N, Ho, Wo, Cp), jnp.bfloat16)
    st_sh = jax.ShapeDtypeStruct((N, 1, 1, Cp), jnp.float32)
    x_spec = pl.BlockSpec((s2, Hq, Wq, Cin), lambda n: (n, 0, 0, 0))
    w_spec = pl.BlockSpec((3, 3, Cin, Cp), lambda n: (0, 0, 0, 0))   # resident
    y_spec = pl.BlockSpec((1, Ho, Wo, Cp), lambda n: (n, 0, 0, 0))
    st_spec = pl.BlockSpec((1, 1, 1, Cp), lambda n: (n, 0, 0, 0))
    cp = pltpu.CompilerParams(dimension_semantics=("parallel",),
                              vmem_limit_bytes=VMEM_LIMIT)
    scratch = [pltpu.VMEM((Ho * Wo, Cp), jnp.float32)]

    if w_sc is None:
        kern = partial(_conv3x3_kernel, stride=stride, Ho=Ho, Wo=Wo, Cin=Cin)
        return pl.pallas_call(
            kern,
            out_shape=(y_sh, st_sh, st_sh),
            grid=(N,),
            in_specs=[x_spec, w_spec],
            out_specs=(y_spec, st_spec, st_spec),
            scratch_shapes=scratch,
            compiler_params=cp,
        )(xsplit, w_tap)

    ws_spec = pl.BlockSpec((Cin, Cp), lambda n: (0, 0))              # resident
    kern = partial(_conv3x3_sc_kernel, stride=stride, Ho=Ho, Wo=Wo, Cin=Cin)
    return pl.pallas_call(
        kern,
        out_shape=(y_sh, y_sh, st_sh, st_sh, st_sh, st_sh),
        grid=(N,),
        in_specs=[x_spec, w_spec, ws_spec],
        out_specs=(y_spec, y_spec, st_spec, st_spec, st_spec, st_spec),
        scratch_shapes=scratch,
        compiler_params=cp,
    )(xsplit, w_tap, w_sc)


def _bn_add_relu(y, res, scale2, bias2, scale_r, bias_r, want_preact):
    N, Ho, Wo, Cp = y.shape
    tile = pl.BlockSpec((1, Ho, Wo, Cp), lambda n: (n, 0, 0, 0))
    vec = pl.BlockSpec((1, Cp), lambda n: (0, 0))
    cp = pltpu.CompilerParams(dimension_semantics=("parallel",),
                              vmem_limit_bytes=VMEM_LIMIT)
    out_sh = jax.ShapeDtypeStruct((N, Ho, Wo, Cp), jnp.float32)
    if want_preact:
        return pl.pallas_call(
            _bn_add_relu_preact_kernel,
            out_shape=(out_sh, out_sh),
            grid=(N,),
            in_specs=[tile, tile, vec, vec, vec, vec],
            out_specs=(tile, tile),
            compiler_params=cp,
        )(y, res, scale2, bias2, scale_r, bias_r)
    return pl.pallas_call(
        _bn_add_relu_kernel,
        out_shape=out_sh,
        grid=(N,),
        in_specs=[tile, tile, vec, vec, vec, vec],
        out_specs=tile,
        compiler_params=cp,
    )(y, res, scale2, bias2, scale_r, bias_r)


# ------------------------------- JAX glue ---------------------------------- #

def _round_up(x, m):
    return (x + m - 1) // m * m


def _pad_and_split(x_nhwc, pad, stride):
    """Zero-pad H/W by `pad` and split into stride*stride phases.

    Returns xs of shape (N*stride*stride, Hq, Wq, C) with
      xs[n*stride^2 + rh*stride + rw, i, j, c] == x_padded[n, i*stride+rh,
                                                              j*stride+rw, c]
    so that conv tap (kh, kw) at output (ho, wo) reads the contiguous slice
      xs[(kh%stride)*stride + kw%stride, kh//stride + ho, kw//stride + wo, :].
    """
    N, H, W, C = x_nhwc.shape
    Hq = -(-(H + 2 * pad) // stride)
    Wq = -(-(W + 2 * pad) // stride)
    xp = jnp.pad(x_nhwc, ((0, 0),
                          (pad, Hq * stride - H - pad),
                          (pad, Wq * stride - W - pad),
                          (0, 0)))
    xp = xp.reshape(N, Hq, stride, Wq, stride, C)
    xp = jnp.transpose(xp, (0, 2, 4, 1, 3, 5))
    return xp.reshape(N * stride * stride, Hq, Wq, C)


def _w3x3_tap(w_oihw, cin_pad, cout_pad):
    """PyTorch OIHW 3x3 weight -> per-tap (3, 3, cin_pad, cout_pad), bf16."""
    w = jnp.transpose(w_oihw, (2, 3, 1, 0))        # (3, 3, I, O)
    i, o = w.shape[2], w.shape[3]
    return jnp.pad(w, ((0, 0), (0, 0), (0, cin_pad - i), (0, cout_pad - o))
                   ).astype(jnp.bfloat16)


def _fold_bn(part_sum, part_sq, gamma, beta, count, cpad):
    """Training-mode BN (batch stats) folded into per-channel (scale, bias)."""
    ssum = jnp.sum(part_sum, axis=(0, 1, 2))
    ssq = jnp.sum(part_sq, axis=(0, 1, 2))
    mean = ssum / count
    var = jnp.maximum(ssq / count - mean * mean, 0.0)   # biased, like PyTorch
    g = jnp.pad(gamma.astype(jnp.float32), (0, cpad - gamma.shape[0]))
    b = jnp.pad(beta.astype(jnp.float32), (0, cpad - beta.shape[0]))
    scale = g * lax.rsqrt(var + EPS)
    bias = b - mean * scale
    return scale.reshape(1, cpad), bias.reshape(1, cpad)


def init_params(key, in_planes, planes, stride):
    ks = jax.random.split(key, 9)
    p = {
        "w1": jax.random.normal(ks[0], (planes, in_planes, 3, 3), jnp.float32) * 0.2,
        "g1": 1.0 + 0.1 * jax.random.normal(ks[1], (planes,), jnp.float32),
        "b1": 0.1 * jax.random.normal(ks[2], (planes,), jnp.float32),
        "w2": jax.random.normal(ks[3], (planes, planes, 3, 3), jnp.float32) * 0.2,
        "g2": 1.0 + 0.1 * jax.random.normal(ks[4], (planes,), jnp.float32),
        "b2": 0.1 * jax.random.normal(ks[5], (planes,), jnp.float32),
    }
    if stride != 1 or in_planes != planes:
        p["ws"] = jax.random.normal(ks[6], (planes, in_planes, 1, 1), jnp.float32) * 0.2
        p["gs"] = 1.0 + 0.1 * jax.random.normal(ks[7], (planes,), jnp.float32)
        p["bs"] = 0.1 * jax.random.normal(ks[8], (planes,), jnp.float32)
    return p


def basic_block_forward_nhwc(p, x_nhwc, planes, stride, is_last):
    """NHWC-in / NHWC-out BasicBlock forward (channel dim = planes, f32)."""
    N, H, W, Cin = x_nhwc.shape
    Ho = (H + 2 - 3) // stride + 1
    Wo = (W + 2 - 3) // stride + 1
    Cp = _round_up(planes, LANE)
    M = N * Ho * Wo

    # ---- conv1 (3x3, stride) [+ fused 1x1 shortcut] + BN stats (pass 1) ----
    xsplit = _pad_and_split(x_nhwc.astype(jnp.bfloat16), 1, stride)
    w1 = _w3x3_tap(p["w1"], cin_pad=Cin, cout_pad=Cp)
    has_sc = (stride != 1) or (Cin != planes)

    if has_sc:
        ws = jnp.pad(jnp.transpose(p["ws"][:, :, 0, 0], (1, 0)),
                     ((0, 0), (0, Cp - planes))).astype(jnp.bfloat16)
        y1, ysc, s1, q1, ss, qs = _conv3x3_bnstats(xsplit, w1, stride, Ho, Wo, ws)
        scale_r, bias_r = _fold_bn(ss, qs, p["gs"], p["bs"], M, Cp)
        res = ysc
    else:
        y1, s1, q1 = _conv3x3_bnstats(xsplit, w1, stride, Ho, Wo)
        # identity shortcut: bf16 channel-pad only (no padded f32 copy)
        res = jnp.pad(x_nhwc.astype(jnp.bfloat16),
                      ((0, 0), (0, 0), (0, 0), (0, Cp - Cin)))
        scale_r = jnp.ones((1, Cp), jnp.float32)
        bias_r = jnp.zeros((1, Cp), jnp.float32)

    scale1, bias1 = _fold_bn(s1, q1, p["g1"], p["b1"], M, Cp)

    # ---- bn1 + relu, folded into conv2's pad/phase-split input prep --------
    out1 = jnp.maximum(y1.astype(jnp.float32) * scale1.reshape(1, 1, 1, Cp)
                       + bias1.reshape(1, 1, 1, Cp), 0.0).astype(jnp.bfloat16)
    o1split = _pad_and_split(out1, 1, 1)

    # ---- conv2 (3x3, stride 1) + BN stats (pass 1) --------------------------
    w2 = _w3x3_tap(p["w2"], cin_pad=Cp, cout_pad=Cp)
    y2, s2, q2 = _conv3x3_bnstats(o1split, w2, 1, Ho, Wo)
    scale2, bias2 = _fold_bn(s2, q2, p["g2"], p["b2"], M, Cp)

    # ---- bn2 + shortcut-bn + residual add + relu (preact only if is_last) --
    outs = _bn_add_relu(y2, res, scale2, bias2, scale_r, bias_r, is_last)
    if is_last:
        out, pre = outs
        return out[..., :planes], pre[..., :planes]
    return outs[..., :planes]


@partial(jax.jit, static_argnums=(2, 3, 4, 5))
def basic_block_forward(p, x_nchw, in_planes, planes, stride, is_last):
    # TODO(synk): when stacking blocks, call basic_block_forward_nhwc directly
    # and keep activations NHWC end-to-end (drops both per-block transposes).
    del in_planes  # derived from the input tensor
    x = jnp.transpose(x_nchw, (0, 2, 3, 1)).astype(jnp.float32)
    res = basic_block_forward_nhwc(p, x, planes, stride, is_last)
    to_nchw = lambda t: jnp.transpose(t, (0, 3, 1, 2))
    if is_last:
        out, pre = res
        return to_nchw(out), to_nchw(pre)
    return to_nchw(res)


# ----------------------------- pure-JAX reference --------------------------- #

def ref_forward(p, x_nchw, in_planes, planes, stride):
    def conv(x, w, s, pad):
        return lax.conv_general_dilated(
            x, w, (s, s), [(pad, pad), (pad, pad)],
            dimension_numbers=("NCHW", "OIHW", "NCHW"),
            precision=lax.Precision.HIGHEST)

    def bn(y, gamma, beta):
        mean = y.mean(axis=(0, 2, 3), keepdims=True)
        var = ((y - mean) ** 2).mean(axis=(0, 2, 3), keepdims=True)
        return ((y - mean) / jnp.sqrt(var + EPS)) * gamma.reshape(1, -1, 1, 1) \
               + beta.reshape(1, -1, 1, 1)

    out = jax.nn.relu(bn(conv(x_nchw, p["w1"], stride, 1), p["g1"], p["b1"]))
    out = bn(conv(out, p["w2"], 1, 1), p["g2"], p["b2"])
    if stride != 1 or in_planes != planes:
        sc = bn(conv(x_nchw, p["ws"], stride, 0), p["gs"], p["bs"])
    else:
        sc = x_nchw
    preact = out + sc
    return jax.nn.relu(preact), preact


def _check(name, got, want, tol=3e-2):
    # bf16 MXU operands and bf16 intermediates (f32 accumulate / f32 BN stats)
    # => compare max error relative to the reference magnitude.
    err = float(jnp.max(jnp.abs(got - want)))
    ref = float(jnp.max(jnp.abs(want))) + 1e-6
    assert err / ref < tol, f"{name}: max_abs_err={err:.4g} ref_max={ref:.4g}"


# ---------------------------------- main ------------------------------------ #

if __name__ == "__main__":
    key = jax.random.PRNGKey(0)
    kx, kp1, kp2 = jax.random.split(key, 3)

    # Config A: downsampling block (stride=2, channel change) -> conv shortcut,
    # is_last=True (preact returned).
    in_planes, planes, stride = 4, 8, 2
    x = jax.random.normal(kx, (2, in_planes, 16, 16), jnp.float32)
    p1 = init_params(kp1, in_planes, planes, stride)
    out, preact = basic_block_forward(p1, x, in_planes, planes, stride, True)
    jax.block_until_ready((out, preact))
    r_out, r_pre = ref_forward(p1, x, in_planes, planes, stride)
    assert out.shape == (2, planes, 8, 8) and preact.shape == (2, planes, 8, 8)
    _check("out_A", out, r_out)
    _check("preact_A", preact, r_pre)

    # Config B: identity shortcut (stride=1, same channels), is_last=False.
    in2, planes2, s2 = 8, 8, 1
    x2 = jax.random.normal(jax.random.fold_in(kx, 1), (2, in2, 8, 8), jnp.float32)
    p2 = init_params(kp2, in2, planes2, s2)
    out2 = basic_block_forward(p2, x2, in2, planes2, s2, False)
    jax.block_until_ready(out2)
    r_out2, _ = ref_forward(p2, x2, in2, planes2, s2)
    assert out2.shape == (2, planes2, 8, 8)
    _check("out_B", out2, r_out2)

    print("KERNEL_OK")
</pallas_src>

<mosaic_0001>
module attributes {stable_mosaic.version = 11 : i64} {
  func.func @_conv3x3_sc_kernel(%arg0: i32, %arg1: memref<4x9x9x4xbf16, #tpu.memory_space<vmem>>, %arg2: memref<3x3x4x128xbf16, #tpu.memory_space<vmem>>, %arg3: memref<4x128xbf16, #tpu.memory_space<vmem>>, %arg4: memref<1x8x8x128xbf16, #tpu.memory_space<vmem>>, %arg5: memref<1x8x8x128xbf16, #tpu.memory_space<vmem>>, %arg6: memref<1x1x1x128xf32, #tpu.memory_space<vmem>>, %arg7: memref<1x1x1x128xf32, #tpu.memory_space<vmem>>, %arg8: memref<1x1x1x128xf32, #tpu.memory_space<vmem>>, %arg9: memref<1x1x1x128xf32, #tpu.memory_space<vmem>>, %arg10: memref<64x128xf32, #tpu.memory_space<vmem>>) attributes {dimension_semantics = [#tpu.dimension_semantics<parallel>], iteration_bounds = array<i64: 2>, scalar_prefetch = 0 : i64, scratch_operands = 1 : i64, tpu.core_type = #tpu.core_type<tc>, window_params = [{transform_indices = @transform_0, window_bounds = array<i64: 4, 9, 9, 4>}, {pipeline_mode = #tpu.pipeline_mode<synchronous>, transform_indices = @transform_1, window_bounds = array<i64: 3, 3, 4, 128>}, {pipeline_mode = #tpu.pipeline_mode<synchronous>, transform_indices = @transform_2, window_bounds = array<i64: 4, 128>}, {transform_indices = @transform_3, window_bounds = array<i64: 1, 8, 8, 128>}, {transform_indices = @transform_4, window_bounds = array<i64: 1, 8, 8, 128>}, {transform_indices = @transform_5, window_bounds = array<i64: 1, 1, 1, 128>}, {transform_indices = @transform_6, window_bounds = array<i64: 1, 1, 1, 128>}, {transform_indices = @transform_7, window_bounds = array<i64: 1, 1, 1, 128>}, {transform_indices = @transform_8, window_bounds = array<i64: 1, 1, 1, 128>}]} {
    %cst = arith.constant 0.000000e+00 : f32
    %0 = vector.broadcast %cst : f32 to vector<64x128xf32>
    %c0 = arith.constant 0 : index
    %c0_0 = arith.constant 0 : index
    %1 = vector.load %arg10[%c0, %c0_0] : memref<64x128xf32, #tpu.memory_space<vmem>>, vector<64x128xf32>
    tpu.vector_store %arg10[%c0, %c0_0], %0 {strides = array<i32>} : memref<64x128xf32, #tpu.memory_space<vmem>>, vector<64x128xf32>,
    %c0_1 = arith.constant 0 : index
    %c0_2 = arith.constant 0 : index
    %c0_3 = arith.constant 0 : index
    %c0_4 = arith.constant 0 : index
    %2 = vector.load %arg1[%c0_1, %c0_2, %c0_3, %c0_4] : memref<4x9x9x4xbf16, #tpu.memory_space<vmem>>, vector<1x8x8x4xbf16>
    %3 = vector.shape_cast %2 : vector<1x8x8x4xbf16> to vector<8x8x4xbf16>
    %4 = vector.shape_cast %3 : vector<8x8x4xbf16> to vector<64x4xbf16>
    %c0_5 = arith.constant 0 : index
    %c0_6 = arith.constant 0 : index
    %5 = vector.load %arg10[%c0_5, %c0_6] : memref<64x128xf32, #tpu.memory_space<vmem>>, vector<64x128xf32>
    %c0_7 = arith.constant 0 : index
    %c0_8 = arith.constant 0 : index
    %c0_9 = arith.constant 0 : index
    %c0_10 = arith.constant 0 : index
    %6 = vector.load %arg2[%c0_7, %c0_8, %c0_9, %c0_10] : memref<3x3x4x128xbf16, #tpu.memory_space<vmem>>, vector<1x1x4x128xbf16>
    %7 = vector.shape_cast %6 : vector<1x1x4x128xbf16> to vector<4x128xbf16>
    %cst_11 = arith.constant dense<0.000000e+00> : vector<64x128xf32>
    %8 = tpu.matmul %4, %7, %cst_11 {dimension_numbers = #tpu.dot_dimension_numbers<[1], [0], [0], [1], [0, 0, 1, 1], [], []>} : vector<64x4xbf16>, vector<4x128xbf16>, vector<64x128xf32> -> vector<64x128xf32>
    %9 = arith.addf %5, %8 : vector<64x128xf32>
    %c0_12 = arith.constant 0 : index
    %c0_13 = arith.constant 0 : index
    %10 = vector.load %arg10[%c0_12, %c0_13] : memref<64x128xf32, #tpu.memory_space<vmem>>, vector<64x128xf32>
    tpu.vector_store %arg10[%c0_12, %c0_13], %9 {strides = array<i32>} : memref<64x128xf32, #tpu.memory_space<vmem>>, vector<64x128xf32>,
    %c1 = arith.constant 1 : index
    %c0_14 = arith.constant 0 : index
    %c0_15 = arith.constant 0 : index
    %c0_16 = arith.constant 0 : index
    %11 = vector.load %arg1[%c1, %c0_14, %c0_15, %c0_16] : memref<4x9x9x4xbf16, #tpu.memory_space<vmem>>, vector<1x8x8x4xbf16>
    %12 = vector.shape_cast %11 : vector<1x8x8x4xbf16> to vector<8x8x4xbf16>
    %13 = vector.shape_cast %12 : vector<8x8x4xbf16> to vector<64x4xbf16>
    %c0_17 = arith.constant 0 : index
    %c0_18 = arith.constant 0 : index
    %14 = vector.load %arg10[%c0_17, %c0_18] : memref<64x128xf32, #tpu.memory_space<vmem>>, vector<64x128xf32>
    %c0_19 = arith.constant 0 : index
    %c1_20 = arith.constant 1 : index
    %c0_21 = arith.constant 0 : index
    %c0_22 = arith.constant 0 : index
    %15 = vector.load %arg2[%c0_19, %c1_20, %c0_21, %c0_22] : memref<3x3x4x128xbf16, #tpu.memory_space<vmem>>, vector<1x1x4x128xbf16>
    %16 = vector.shape_cast %15 : vector<1x1x4x128xbf16> to vector<4x128xbf16>
    %cst_23 = arith.constant dense<0.000000e+00> : vector<64x128xf32>
    %17 = tpu.matmul %13, %16, %cst_23 {dimension_numbers = #tpu.dot_dimension_numbers<[1], [0], [0], [1], [0, 0, 1, 1], [], []>} : vector<64x4xbf16>, vector<4x128xbf16>, vector<64x128xf32> -> vector<64x128xf32>
    %18 = arith.addf %14, %17 : vector<64x128xf32>
    %c0_24 = arith.constant 0 : index
    %c0_25 = arith.constant 0 : index
    %19 = vector.load %arg10[%c0_24, %c0_25] : memref<64x128xf32, #tpu.memory_space<vmem>>, vector<64x128xf32>
    tpu.vector_store %arg10[%c0_24, %c0_25], %18 {strides = array<i32>} : memref<64x128xf32, #tpu.memory_space<vmem>>, vector<64x128xf32>,
    %c0_26 = arith.constant 0 : index
    %c0_27 = arith.constant 0 : index
    %c1_28 = arith.constant 1 : index
    %c0_29 = arith.constant 0 : index
    %20 = vector.load %arg1[%c0_26, %c0_27, %c1_28, %c0_29] : memref<4x9x9x4xbf16, #tpu.memory_space<vmem>>, vector<1x8x8x4xbf16>
    %21 = vector.shape_cast %20 : vector<1x8x8x4xbf16> to vector<8x8x4xbf16>
    %22 = vector.shape_cast %21 : vector<8x8x4xbf16> to vector<64x4xbf16>
    %c0_30 = arith.constant 0 : index
    %c0_31 = arith.constant 0 : index
    %23 = vector.load %arg10[%c0_30, %c0_31] : memref<64x128xf32, #tpu.memory_space<vmem>>, vector<64x128xf32>
    %c0_32 = arith.constant 0 : index
    %c2 = arith.constant 2 : index
    %c0_33 = arith.constant 0 : index
    %c0_34 = arith.constant 0 : index
    %24 = vector.load %arg2[%c0_32, %c2, %c0_33, %c0_34] : memref<3x3x4x128xbf16, #tpu.memory_space<vmem>>, vector<1x1x4x128xbf16>
    %25 = vector.shape_cast %24 : vector<1x1x4x128xbf16> to vector<4x128xbf16>
    %cst_35 = arith.constant dense<0.000000e+00> : vector<64x128xf32>
    %26 = tpu.matmul %22, %25, %cst_35 {dimension_numbers = #tpu.dot_dimension_numbers<[1], [0], [0], [1], [0, 0, 1, 1], [], []>} : vector<64x4xbf16>, vector<4x128xbf16>, vector<64x128xf32> -> vector<64x128xf32>
    %27 = arith.addf %23, %26 : vector<64x128xf32>
    %c0_36 = arith.constant 0 : index
    %c0_37 = arith.constant 0 : index
    %28 = vector.load %arg10[%c0_36, %c0_37] : memref<64x128xf32, #tpu.memory_space<vmem>>, vector<64x128xf32>
    tpu.vector_store %arg10[%c0_36, %c0_37], %27 {strides = array<i32>} : memref<64x128xf32, #tpu.memory_space<vmem>>, vector<64x128xf32>,
    %c2_38 = arith.constant 2 : index
    %c0_39 = arith.constant 0 : index
    %c0_40 = arith.constant 0 : index
    %c0_41 = arith.constant 0 : index
    %29 = vector.load %arg1[%c2_38, %c0_39, %c0_40, %c0_41] : memref<4x9x9x4xbf16, #tpu.memory_space<vmem>>, vector<1x8x8x4xbf16>
    %30 = vector.shape_cast %29 : vector<1x8x8x4xbf16> to vector<8x8x4xbf16>
    %31 = vector.shape_cast %30 : vector<8x8x4xbf16> to vector<64x4xbf16>
    %c0_42 = arith.constant 0 : index
    %c0_43 = arith.constant 0 : index
    %32 = vector.load %arg10[%c0_42, %c0_43] : memref<64x128xf32, #tpu.memory_space<vmem>>, vector<64x128xf32>
    %c1_44 = arith.constant 1 : index
    %c0_45 = arith.constant 0 : index
    %c0_46 = arith.constant 0 : index
    %c0_47 = arith.constant 0 : index
    %33 = vector.load %arg2[%c1_44, %c0_45, %c0_46, %c0_47] : memref<3x3x4x128xbf16, #tpu.memory_space<vmem>>, vector<1x1x4x128xbf16>
    %34 = vector.shape_cast %33 : vector<1x1x4x128xbf16> to vector<4x128xbf16>
    %cst_48 = arith.constant dense<0.000000e+00> : vector<64x128xf32>
    %35 = tpu.matmul %31, %34, %cst_48 {dimension_numbers = #tpu.dot_dimension_numbers<[1], [0], [0], [1], [0, 0, 1, 1], [], []>} : vector<64x4xbf16>, vector<4x128xbf16>, vector<64x128xf32> -> vector<64x128xf32>
    %36 = arith.addf %32, %35 : vector<64x128xf32>
    %c0_49 = arith.constant 0 : index
    %c0_50 = arith.constant 0 : index
    %37 = vector.load %arg10[%c0_49, %c0_50] : memref<64x128xf32, #tpu.memory_space<vmem>>, vector<64x128xf32>
    tpu.vector_store %arg10[%c0_49, %c0_50], %36 {strides = array<i32>} : memref<64x128xf32, #tpu.memory_space<vmem>>, vector<64x128xf32>,
    %c3 = arith.constant 3 : index
    %c0_51 = arith.constant 0 : index
    %c0_52 = arith.constant 0 : index
    %c0_53 = arith.constant 0 : index
    %38 = vector.load %arg1[%c3, %c0_51, %c0_52, %c0_53] : memref<4x9x9x4xbf16, #tpu.memory_space<vmem>>, vector<1x8x8x4xbf16>
    %39 = vector.shape_cast %38 : vector<1x8x8x4xbf16> to vector<8x8x4xbf16>
    %40 = vector.shape_cast %39 : vector<8x8x4xbf16> to vector<64x4xbf16>
    %c0_54 = arith.constant 0 : index
    %c0_55 = arith.constant 0 : index
    %41 = vector.load %arg10[%c0_54, %c0_55] : memref<64x128xf32, #tpu.memory_space<vmem>>, vector<64x128xf32>
    %c1_56 = arith.constant 1 : index
    %c1_57 = arith.constant 1 : index
    %c0_58 = arith.constant 0 : index
    %c0_59 = arith.constant 0 : index
    %42 = vector.load %arg2[%c1_56, %c1_57, %c0_58, %c0_59] : memref<3x3x4x128xbf16, #tpu.memory_space<vmem>>, vector<1x1x4x128xbf16>
    %43 = vector.shape_cast %42 : vector<1x1x4x128xbf16> to vector<4x128xbf16>
    %cst_60 = arith.constant dense<0.000000e+00> : vector<64x128xf32>
    %44 = tpu.matmul %40, %43, %cst_60 {dimension_numbers = #tpu.dot_dimension_numbers<[1], [0], [0], [1], [0, 0, 1, 1], [], []>} : vector<64x4xbf16>, vector<4x128xbf16>, vector<64x128xf32> -> vector<64x128xf32>
    %45 = arith.addf %41, %44 : vector<64x128xf32>
    %c0_61 = arith.constant 0 : index
    %c0_62 = arith.constant 0 : index
    %46 = vector.load %arg10[%c0_61, %c0_62] : memref<64x128xf32, #tpu.memory_space<vmem>>, vector<64x128xf32>
    tpu.vector_store %arg10[%c0_61, %c0_62], %45 {strides = array<i32>} : memref<64x128xf32, #tpu.memory_space<vmem>>, vector<64x128xf32>,
    %c2_63 = arith.constant 2 : index
    %c0_64 = arith.constant 0 : index
    %c1_65 = arith.constant 1 : index
    %c0_66 = arith.constant 0 : index
    %47 = vector.load %arg1[%c2_63, %c0_64, %c1_65, %c0_66] : memref<4x9x9x4xbf16, #tpu.memory_space<vmem>>, vector<1x8x8x4xbf16>
    %48 = vector.shape_cast %47 : vector<1x8x8x4xbf16> to vector<8x8x4xbf16>
    %49 = vector.shape_cast %48 : vector<8x8x4xbf16> to vector<64x4xbf16>
    %c0_67 = arith.constant 0 : index
    %c0_68 = arith.constant 0 : index
    %50 = vector.load %arg10[%c0_67, %c0_68] : memref<64x128xf32, #tpu.memory_space<vmem>>, vector<64x128xf32>
    %c1_69 = arith.constant 1 : index
    %c2_70 = arith.constant 2 : index
    %c0_71 = arith.constant 0 : index
    %c0_72 = arith.constant 0 : index
    %51 = vector.load %arg2[%c1_69, %c2_70, %c0_71, %c0_72] : memref<3x3x4x128xbf16, #tpu.memory_space<vmem>>, vector<1x1x4x128xbf16>
    %52 = vector.shape_cast %51 : vector<1x1x4x128xbf16> to vector<4x128xbf16>
    %cst_73 = arith.constant dense<0.000000e+00> : vector<64x128xf32>
    %53 = tpu.matmul %49, %52, %cst_73 {dimension_numbers = #tpu.dot_dimension_numbers<[1], [0], [0], [1], [0, 0, 1, 1], [], []>} : vector<64x4xbf16>, vector<4x128xbf16>, vector<64x128xf32> -> vector<64x128xf32>
    %54 = arith.addf %50, %53 : vector<64x128xf32>
    %c0_74 = arith.constant 0 : index
    %c0_75 = arith.constant 0 : index
    %55 = vector.load %arg10[%c0_74, %c0_75] : memref<64x128xf32, #tpu.memory_space<vmem>>, vector<64x128xf32>
    tpu.vector_store %arg10[%c0_74, %c0_75], %54 {strides = array<i32>} : memref<64x128xf32, #tpu.memory_space<vmem>>, vector<64x128xf32>,
    %c0_76 = arith.constant 0 : index
    %c1_77 = arith.constant 1 : index
    %c0_78 = arith.constant 0 : index
    %c0_79 = arith.constant 0 : index
    %56 = vector.load %arg1[%c0_76, %c1_77, %c0_78, %c0_79] : memref<4x9x9x4xbf16, #tpu.memory_space<vmem>>, vector<1x8x8x4xbf16>
    %57 = vector.shape_cast %56 : vector<1x8x8x4xbf16> to vector<8x8x4xbf16>
    %58 = vector.shape_cast %57 : vector<8x8x4xbf16> to vector<64x4xbf16>
    %c0_80 = arith.constant 0 : index
    %c0_81 = arith.constant 0 : index
    %59 = vector.load %arg10[%c0_80, %c0_81] : memref<64x128xf32, #tpu.memory_space<vmem>>, vector<64x128xf32>
    %c2_82 = arith.constant 2 : index
    %c0_83 = arith.constant 0 : index
    %c0_84 = arith.constant 0 : index
    %c0_85 = arith.constant 0 : index
    %60 = vector.load %arg2[%c2_82, %c0_83, %c0_84, %c0_85] : memref<3x3x4x128xbf16, #tpu.memory_space<vmem>>, vector<1x1x4x128xbf16>
    %61 = vector.shape_cast %60 : vector<1x1x4x128xbf16> to vector<4x128xbf16>
    %cst_86 = arith.constant dense<0.000000e+00> : vector<64x128xf32>
    %62 = tpu.matmul %58, %61, %cst_86 {dimension_numbers = #tpu.dot_dimension_numbers<[1], [0], [0], [1], [0, 0, 1, 1], [], []>} : vector<64x4xbf16>, vector<4x128xbf16>, vector<64x128xf32> -> vector<64x128xf32>
    %63 = arith.addf %59, %62 : vector<64x128xf32>
    %c0_87 = arith.constant 0 : index
    %c0_88 = arith.constant 0 : index
    %64 = vector.load %arg10[%c0_87, %c0_88] : memref<64x128xf32, #tpu.memory_space<vmem>>, vector<64x128xf32>
    tpu.vector_store %arg10[%c0_87, %c0_88], %63 {strides = array<i32>} : memref<64x128xf32, #tpu.memory_space<vmem>>, vector<64x128xf32>,
    %c1_89 = arith.constant 1 : index
    %c1_90 = arith.constant 1 : index
    %c0_91 = arith.constant 0 : index
    %c0_92 = arith.constant 0 : index
    %65 = vector.load %arg1[%c1_89, %c1_90, %c0_91, %c0_92] : memref<4x9x9x4xbf16, #tpu.memory_space<vmem>>, vector<1x8x8x4xbf16>
    %66 = vector.shape_cast %65 : vector<1x8x8x4xbf16> to vector<8x8x4xbf16>
    %67 = vector.shape_cast %66 : vector<8x8x4xbf16> to vector<64x4xbf16>
    %c0_93 = arith.constant 0 : index
    %c0_94 = arith.constant 0 : index
    %68 = vector.load %arg10[%c0_93, %c0_94] : memref<64x128xf32, #tpu.memory_space<vmem>>, vector<64x128xf32>
    %c2_95 = arith.constant 2 : index
    %c1_96 = arith.constant 1 : index
    %c0_97 = arith.constant 0 : index
    %c0_98 = arith.constant 0 : index
    %69 = vector.load %arg2[%c2_95, %c1_96, %c0_97, %c0_98] : memref<3x3x4x128xbf16, #tpu.memory_space<vmem>>, vector<1x1x4x128xbf16>
    %70 = vector.shape_cast %69 : vector<1x1x4x128xbf16> to vector<4x128xbf16>
    %cst_99 = arith.constant dense<0.000000e+00> : vector<64x128xf32>
    %71 = tpu.matmul %67, %70, %cst_99 {dimension_numbers = #tpu.dot_dimension_numbers<[1], [0], [0], [1], [0, 0, 1, 1], [], []>} : vector<64x4xbf16>, vector<4x128xbf16>, vector<64x128xf32> -> vector<64x128xf32>
    %72 = arith.addf %68, %71 : vector<64x128xf32>
    %c0_100 = arith.constant 0 : index
    %c0_101 = arith.constant 0 : index
    %73 = vector.load %arg10[%c0_100, %c0_101] : memref<64x128xf32, #tpu.memory_space<vmem>>, vector<64x128xf32>
    tpu.vector_store %arg10[%c0_100, %c0_101], %72 {strides = array<i32>} : memref<64x128xf32, #tpu.memory_space<vmem>>, vector<64x128xf32>,
    %c0_102 = arith.constant 0 : index
    %c1_103 = arith.constant 1 : index
    %c1_104 = arith.constant 1 : index
    %c0_105 = arith.constant 0 : index
    %74 = vector.load %arg1[%c0_102, %c1_103, %c1_104, %c0_105] : memref<4x9x9x4xbf16, #tpu.memory_space<vmem>>, vector<1x8x8x4xbf16>
    %75 = vector.shape_cast %74 : vector<1x8x8x4xbf16> to vector<8x8x4xbf16>
    %76 = vector.shape_cast %75 : vector<8x8x4xbf16> to vector<64x4xbf16>
    %c0_106 = arith.constant 0 : index
    %c0_107 = arith.constant 0 : index
    %77 = vector.load %arg10[%c0_106, %c0_107] : memref<64x128xf32, #tpu.memory_space<vmem>>, vector<64x128xf32>
    %c2_108 = arith.constant 2 : index
    %c2_109 = arith.constant 2 : index
    %c0_110 = arith.constant 0 : index
    %c0_111 = arith.constant 0 : index
    %78 = vector.load %arg2[%c2_108, %c2_109, %c0_110, %c0_111] : memref<3x3x4x128xbf16, #tpu.memory_space<vmem>>, vector<1x1x4x128xbf16>
    %79 = vector.shape_cast %78 : vector<1x1x4x128xbf16> to vector<4x128xbf16>
    %cst_112 = arith.constant dense<0.000000e+00> : vector<64x128xf32>
    %80 = tpu.matmul %76, %79, %cst_112 {dimension_numbers = #tpu.dot_dimension_numbers<[1], [0], [0], [1], [0, 0, 1, 1], [], []>} : vector<64x4xbf16>, vector<4x128xbf16>, vector<64x128xf32> -> vector<64x128xf32>
    %81 = arith.addf %77, %80 : vector<64x128xf32>
    %c0_113 = arith.constant 0 : index
    %c0_114 = arith.constant 0 : index
    %82 = vector.load %arg10[%c0_113, %c0_114] : memref<64x128xf32, #tpu.memory_space<vmem>>, vector<64x128xf32>
    tpu.vector_store %arg10[%c0_113, %c0_114], %81 {strides = array<i32>} : memref<64x128xf32, #tpu.memory_space<vmem>>, vector<64x128xf32>,
    %c0_115 = arith.constant 0 : index
    %c0_116 = arith.constant 0 : index
    %83 = vector.load %arg10[%c0_115, %c0_116] : memref<64x128xf32, #tpu.memory_space<vmem>>, vector<64x128xf32>
    %84 = vector.shape_cast %83 : vector<64x128xf32> to vector<1x8x8x128xf32>
    %85 = arith.truncf %84 : vector<1x8x8x128xf32> to vector<1x8x8x128xbf16>
    %c0_117 = arith.constant 0 : index
    %c0_118 = arith.constant 0 : index
    %c0_119 = arith.constant 0 : index
    %c0_120 = arith.constant 0 : index
    %86 = vector.load %arg4[%c0_117, %c0_118, %c0_119, %c0_120] : memref<1x8x8x128xbf16, #tpu.memory_space<vmem>>, vector<1x8x8x128xbf16>
    tpu.vector_store %arg4[%c0_117, %c0_118, %c0_119, %c0_120], %85 {strides = array<i32>} : memref<1x8x8x128xbf16, #tpu.memory_space<vmem>>, vector<1x8x8x128xbf16>,
    %cst_121 = arith.constant dense<0.000000e+00> : vector<128xf32>
    %87 = vector.multi_reduction <add>, %83, %cst_121 [0] : vector<64x128xf32> to vector<128xf32>
    %88 = vector.shape_cast %87 : vector<128xf32> to vector<1x1x1x128xf32>
    %c0_122 = arith.constant 0 : index
    %c0_123 = arith.constant 0 : index
    %c0_124 = arith.constant 0 : index
    %c0_125 = arith.constant 0 : index
    %89 = vector.load %arg6[%c0_122, %c0_123, %c0_124, %c0_125] : memref<1x1x1x128xf32, #tpu.memory_space<vmem>>, vector<1x1x1x128xf32>
    tpu.vector_store %arg6[%c0_122, %c0_123, %c0_124, %c0_125], %88 {strides = array<i32>} : memref<1x1x1x128xf32, #tpu.memory_space<vmem>>, vector<1x1x1x128xf32>,
    %90 = arith.mulf %83, %83 : vector<64x128xf32>
    %cst_126 = arith.constant dense<0.000000e+00> : vector<128xf32>
    %91 = vector.multi_reduction <add>, %90, %cst_126 [0] : vector<64x128xf32> to vector<128xf32>
    %92 = vector.shape_cast %91 : vector<128xf32> to vector<1x1x1x128xf32>
    %c0_127 = arith.constant 0 : index
    %c0_128 = arith.constant 0 : index
    %c0_129 = arith.constant 0 : index
    %c0_130 = arith.constant 0 : index
    %93 = vector.load %arg7[%c0_127, %c0_128, %c0_129, %c0_130] : memref<1x1x1x128xf32, #tpu.memory_space<vmem>>, vector<1x1x1x128xf32>
    tpu.vector_store %arg7[%c0_127, %c0_128, %c0_129, %c0_130], %92 {strides = array<i32>} : memref<1x1x1x128xf32, #tpu.memory_space<vmem>>, vector<1x1x1x128xf32>,
    %c0_131 = arith.constant 0 : index
    %c0_132 = arith.constant 0 : index
    %94 = vector.load %arg3[%c0_131, %c0_132] : memref<4x128xbf16, #tpu.memory_space<vmem>>, vector<4x128xbf16>
    %cst_133 = arith.constant dense<0.000000e+00> : vector<64x128xf32>
    %95 = tpu.matmul %40, %94, %cst_133 {dimension_numbers = #tpu.dot_dimension_numbers<[1], [0], [0], [1], [0, 0, 1, 1], [], []>} : vector<64x4xbf16>, vector<4x128xbf16>, vector<64x128xf32> -> vector<64x128xf32>
    %96 = vector.shape_cast %95 : vector<64x128xf32> to vector<1x8x8x128xf32>
    %97 = arith.truncf %96 : vector<1x8x8x128xf32> to vector<1x8x8x128xbf16>
    %c0_134 = arith.constant 0 : index
    %c0_135 = arith.constant 0 : index
    %c0_136 = arith.constant 0 : index
    %c0_137 = arith.constant 0 : index
    %98 = vector.load %arg5[%c0_134, %c0_135, %c0_136, %c0_137] : memref<1x8x8x128xbf16, #tpu.memory_space<vmem>>, vector<1x8x8x128xbf16>
    tpu.vector_store %arg5[%c0_134, %c0_135, %c0_136, %c0_137], %97 {strides = array<i32>} : memref<1x8x8x128xbf16, #tpu.memory_space<vmem>>, vector<1x8x8x128xbf16>,
    %cst_138 = arith.constant dense<0.000000e+00> : vector<128xf32>
    %99 = vector.multi_reduction <add>, %95, %cst_138 [0] : vector<64x128xf32> to vector<128xf32>
    %100 = vector.shape_cast %99 : vector<128xf32> to vector<1x1x1x128xf32>
    %c0_139 = arith.constant 0 : index
    %c0_140 = arith.constant 0 : index
    %c0_141 = arith.constant 0 : index
    %c0_142 = arith.constant 0 : index
    %101 = vector.load %arg8[%c0_139, %c0_140, %c0_141, %c0_142] : memref<1x1x1x128xf32, #tpu.memory_space<vmem>>, vector<1x1x1x128xf32>
    tpu.vector_store %arg8[%c0_139, %c0_140, %c0_141, %c0_142], %100 {strides = array<i32>} : memref<1x1x1x128xf32, #tpu.memory_space<vmem>>, vector<1x1x1x128xf32>,
    %102 = arith.mulf %95, %95 : vector<64x128xf32>
    %cst_143 = arith.constant dense<0.000000e+00> : vector<128xf32>
    %103 = vector.multi_reduction <add>, %102, %cst_143 [0] : vector<64x128xf32> to vector<128xf32>
    %104 = vector.shape_cast %103 : vector<128xf32> to vector<1x1x1x128xf32>
    %c0_144 = arith.constant 0 : index
    %c0_145 = arith.constant 0 : index
    %c0_146 = arith.constant 0 : index
    %c0_147 = arith.constant 0 : index
    %105 = vector.load %arg9[%c0_144, %c0_145, %c0_146, %c0_147] : memref<1x1x1x128xf32, #tpu.memory_space<vmem>>, vector<1x1x1x128xf32>
    tpu.vector_store %arg9[%c0_144, %c0_145, %c0_146, %c0_147], %104 {strides = array<i32>} : memref<1x1x1x128xf32, #tpu.memory_space<vmem>>, vector<1x1x1x128xf32>,
    return
  }
  func.func @transform_0(%arg0: i32) -> (i32, i32, i32, i32) {
    %c0_i32 = arith.constant 0 : i32
    %c0_i32_0 = arith.constant 0 : i32
    %c0_i32_1 = arith.constant 0 : i32
    %c0_i32_2 = arith.constant 0 : i32
    return %arg0, %c0_i32, %c0_i32_0, %c0_i32_1 : i32, i32, i32, i32
  }
  func.func @transform_1(%arg0: i32) -> (i32, i32, i32, i32) {
    %c0_i32 = arith.constant 0 : i32
    %c0_i32_0 = arith.constant 0 : i32
    %c0_i32_1 = arith.constant 0 : i32
    %c0_i32_2 = arith.constant 0 : i32
    %c0_i32_3 = arith.constant 0 : i32
    return %c0_i32, %c0_i32_0, %c0_i32_1, %c0_i32_2 : i32, i32, i32, i32
  }
  func.func @transform_2(%arg0: i32) -> (i32, i32) {
    %c0_i32 = arith.constant 0 : i32
    %c0_i32_0 = arith.constant 0 : i32
    %c0_i32_1 = arith.constant 0 : i32
    return %c0_i32, %c0_i32_0 : i32, i32
  }
  func.func @transform_3(%arg0: i32) -> (i32, i32, i32, i32) {
    %c0_i32 = arith.constant 0 : i32
    %c0_i32_0 = arith.constant 0 : i32
    %c0_i32_1 = arith.constant 0 : i32
    %c0_i32_2 = arith.constant 0 : i32
    return %arg0, %c0_i32, %c0_i32_0, %c0_i32_1 : i32, i32, i32, i32
  }
  func.func @transform_4(%arg0: i32) -> (i32, i32, i32, i32) {
    %c0_i32 = arith.constant 0 : i32
    %c0_i32_0 = arith.constant 0 : i32
    %c0_i32_1 = arith.constant 0 : i32
    %c0_i32_2 = arith.constant 0 : i32
    return %arg0, %c0_i32, %c0_i32_0, %c0_i32_1 : i32, i32, i32, i32
  }
  func.func @transform_5(%arg0: i32) -> (i32, i32, i32, i32) {
    %c0_i32 = arith.constant 0 : i32
    %c0_i32_0 = arith.constant 0 : i32
    %c0_i32_1 = arith.constant 0 : i32
    %c0_i32_2 = arith.constant 0 : i32
    return %arg0, %c0_i32, %c0_i32_0, %c0_i32_1 : i32, i32, i32, i32
  }
  func.func @transform_6(%arg0: i32) -> (i32, i32, i32, i32) {
    %c0_i32 = arith.constant 0 : i32
    %c0_i32_0 = arith.constant 0 : i32
    %c0_i32_1 = arith.constant 0 : i32
    %c0_i32_2 = arith.constant 0 : i32
    return %arg0, %c0_i32, %c0_i32_0, %c0_i32_1 : i32, i32, i32, i32
  }
  func.func @transform_7(%arg0: i32) -> (i32, i32, i32, i32) {
    %c0_i32 = arith.constant 0 : i32
    %c0_i32_0 = arith.constant 0 : i32
    %c0_i32_1 = arith.constant 0 : i32
    %c0_i32_2 = arith.constant 0 : i32
    return %arg0, %c0_i32, %c0_i32_0, %c0_i32_1 : i32, i32, i32, i32
  }
  func.func @transform_8(%arg0: i32) -> (i32, i32, i32, i32) {
    %c0_i32 = arith.constant 0 : i32
    %c0_i32_0 = arith.constant 0 : i32
    %c0_i32_1 = arith.constant 0 : i32
    %c0_i32_2 = arith.constant 0 : i32
    return %arg0, %c0_i32, %c0_i32_0, %c0_i32_1 : i32, i32, i32, i32
  }
}

module attributes {stable_mosaic.version = 11 : i64} {
  func.func @_conv3x3_kernel(%arg0: i32, %arg1: memref<1x10x10x128xbf16, #tpu.memory_space<vmem>>, %arg2: memref<3x3x128x128xbf16, #tpu.memory_space<vmem>>, %arg3: memref<1x8x8x128xbf16, #tpu.memory_space<vmem>>, %arg4: memref<1x1x1x128xf32, #tpu.memory_space<vmem>>, %arg5: memref<1x1x1x128xf32, #tpu.memory_space<vmem>>, %arg6: memref<64x128xf32, #tpu.memory_space<vmem>>) attributes {dimension_semantics = [#tpu.dimension_semantics<parallel>], iteration_bounds = array<i64: 2>, scalar_prefetch = 0 : i64, scratch_operands = 1 : i64, tpu.core_type = #tpu.core_type<tc>, window_params = [{transform_indices = @transform_0, window_bounds = array<i64: 1, 10, 10, 128>}, {pipeline_mode = #tpu.pipeline_mode<synchronous>, transform_indices = @transform_1, window_bounds = array<i64: 3, 3, 128, 128>}, {transform_indices = @transform_2, window_bounds = array<i64: 1, 8, 8, 128>}, {transform_indices = @transform_3, window_bounds = array<i64: 1, 1, 1, 128>}, {transform_indices = @transform_4, window_bounds = array<i64: 1, 1, 1, 128>}]} {
    %cst = arith.constant 0.000000e+00 : f32
    %0 = vector.broadcast %cst : f32 to vector<64x128xf32>
    %c0 = arith.constant 0 : index
    %c0_0 = arith.constant 0 : index
    %1 = vector.load %arg6[%c0, %c0_0] : memref<64x128xf32, #tpu.memory_space<vmem>>, vector<64x128xf32>
    tpu.vector_store %arg6[%c0, %c0_0], %0 {strides = array<i32>} : memref<64x128xf32, #tpu.memory_space<vmem>>, vector<64x128xf32>,
    %c0_1 = arith.constant 0 : index
    %c0_2 = arith.constant 0 : index
    %c0_3 = arith.constant 0 : index
    %c0_4 = arith.constant 0 : index
    %2 = vector.load %arg1[%c0_1, %c0_2, %c0_3, %c0_4] : memref<1x10x10x128xbf16, #tpu.memory_space<vmem>>, vector<1x8x8x128xbf16>
    %3 = vector.shape_cast %2 : vector<1x8x8x128xbf16> to vector<8x8x128xbf16>
    %4 = vector.shape_cast %3 : vector<8x8x128xbf16> to vector<64x128xbf16>
    %c0_5 = arith.constant 0 : index
    %c0_6 = arith.constant 0 : index
    %5 = vector.load %arg6[%c0_5, %c0_6] : memref<64x128xf32, #tpu.memory_space<vmem>>, vector<64x128xf32>
    %c0_7 = arith.constant 0 : index
    %c0_8 = arith.constant 0 : index
    %c0_9 = arith.constant 0 : index
    %c0_10 = arith.constant 0 : index
    %6 = vector.load %arg2[%c0_7, %c0_8, %c0_9, %c0_10] : memref<3x3x128x128xbf16, #tpu.memory_space<vmem>>, vector<1x1x128x128xbf16>
    %7 = vector.shape_cast %6 : vector<1x1x128x128xbf16> to vector<128x128xbf16>
    %cst_11 = arith.constant dense<0.000000e+00> : vector<64x128xf32>
    %8 = tpu.matmul %4, %7, %cst_11 {dimension_numbers = #tpu.dot_dimension_numbers<[1], [0], [0], [1], [0, 0, 1, 1], [], []>} : vector<64x128xbf16>, vector<128x128xbf16>, vector<64x128xf32> -> vector<64x128xf32>
    %9 = arith.addf %5, %8 : vector<64x128xf32>
    %c0_12 = arith.constant 0 : index
    %c0_13 = arith.constant 0 : index
    %10 = vector.load %arg6[%c0_12, %c0_13] : memref<64x128xf32, #tpu.memory_space<vmem>>, vector<64x128xf32>
    tpu.vector_store %arg6[%c0_12, %c0_13], %9 {strides = array<i32>} : memref<64x128xf32, #tpu.memory_space<vmem>>, vector<64x128xf32>,
    %c0_14 = arith.constant 0 : index
    %c0_15 = arith.constant 0 : index
    %c1 = arith.constant 1 : index
    %c0_16 = arith.constant 0 : index
    %11 = vector.load %arg1[%c0_14, %c0_15, %c1, %c0_16] : memref<1x10x10x128xbf16, #tpu.memory_space<vmem>>, vector<1x8x8x128xbf16>
    %12 = vector.shape_cast %11 : vector<1x8x8x128xbf16> to vector<8x8x128xbf16>
    %13 = vector.shape_cast %12 : vector<8x8x128xbf16> to vector<64x128xbf16>
    %c0_17 = arith.constant 0 : index
    %c0_18 = arith.constant 0 : index
    %14 = vector.load %arg6[%c0_17, %c0_18] : memref<64x128xf32, #tpu.memory_space<vmem>>, vector<64x128xf32>
    %c0_19 = arith.constant 0 : index
    %c1_20 = arith.constant 1 : index
    %c0_21 = arith.constant 0 : index
    %c0_22 = arith.constant 0 : index
    %15 = vector.load %arg2[%c0_19, %c1_20, %c0_21, %c0_22] : memref<3x3x128x128xbf16, #tpu.memory_space<vmem>>, vector<1x1x128x128xbf16>
    %16 = vector.shape_cast %15 : vector<1x1x128x128xbf16> to vector<128x128xbf16>
    %cst_23 = arith.constant dense<0.000000e+00> : vector<64x128xf32>
    %17 = tpu.matmul %13, %16, %cst_23 {dimension_numbers = #tpu.dot_dimension_numbers<[1], [0], [0], [1], [0, 0, 1, 1], [], []>} : vector<64x128xbf16>, vector<128x128xbf16>, vector<64x128xf32> -> vector<64x128xf32>
    %18 = arith.addf %14, %17 : vector<64x128xf32>
    %c0_24 = arith.constant 0 : index
    %c0_25 = arith.constant 0 : index
    %19 = vector.load %arg6[%c0_24, %c0_25] : memref<64x128xf32, #tpu.memory_space<vmem>>, vector<64x128xf32>
    tpu.vector_store %arg6[%c0_24, %c0_25], %18 {strides = array<i32>} : memref<64x128xf32, #tpu.memory_space<vmem>>, vector<64x128xf32>,
    %c0_26 = arith.constant 0 : index
    %c0_27 = arith.constant 0 : index
    %c2 = arith.constant 2 : index
    %c0_28 = arith.constant 0 : index
    %20 = vector.load %arg1[%c0_26, %c0_27, %c2, %c0_28] : memref<1x10x10x128xbf16, #tpu.memory_space<vmem>>, vector<1x8x8x128xbf16>
    %21 = vector.shape_cast %20 : vector<1x8x8x128xbf16> to vector<8x8x128xbf16>
    %22 = vector.shape_cast %21 : vector<8x8x128xbf16> to vector<64x128xbf16>
    %c0_29 = arith.constant 0 : index
    %c0_30 = arith.constant 0 : index
    %23 = vector.load %arg6[%c0_29, %c0_30] : memref<64x128xf32, #tpu.memory_space<vmem>>, vector<64x128xf32>
    %c0_31 = arith.constant 0 : index
    %c2_32 = arith.constant 2 : index
    %c0_33 = arith.constant 0 : index
    %c0_34 = arith.constant 0 : index
    %24 = vector.load %arg2[%c0_31, %c2_32, %c0_33, %c0_34] : memref<3x3x128x128xbf16, #tpu.memory_space<vmem>>, vector<1x1x128x128xbf16>
    %25 = vector.shape_cast %24 : vector<1x1x128x128xbf16> to vector<128x128xbf16>
    %cst_35 = arith.constant dense<0.000000e+00> : vector<64x128xf32>
    %26 = tpu.matmul %22, %25, %cst_35 {dimension_numbers = #tpu.dot_dimension_numbers<[1], [0], [0], [1], [0, 0, 1, 1], [], []>} : vector<64x128xbf16>, vector<128x128xbf16>, vector<64x128xf32> -> vector<64x128xf32>
    %27 = arith.addf %23, %26 : vector<64x128xf32>
    %c0_36 = arith.constant 0 : index
    %c0_37 = arith.constant 0 : index
    %28 = vector.load %arg6[%c0_36, %c0_37] : memref<64x128xf32, #tpu.memory_space<vmem>>, vector<64x128xf32>
    tpu.vector_store %arg6[%c0_36, %c0_37], %27 {strides = array<i32>} : memref<64x128xf32, #tpu.memory_space<vmem>>, vector<64x128xf32>,
    %c0_38 = arith.constant 0 : index
    %c1_39 = arith.constant 1 : index
    %c0_40 = arith.constant 0 : index
    %c0_41 = arith.constant 0 : index
    %29 = vector.load %arg1[%c0_38, %c1_39, %c0_40, %c0_41] : memref<1x10x10x128xbf16, #tpu.memory_space<vmem>>, vector<1x8x8x128xbf16>
    %30 = vector.shape_cast %29 : vector<1x8x8x128xbf16> to vector<8x8x128xbf16>
    %31 = vector.shape_cast %30 : vector<8x8x128xbf16> to vector<64x128xbf16>
    %c0_42 = arith.constant 0 : index
    %c0_43 = arith.constant 0 : index
    %32 = vector.load %arg6[%c0_42, %c0_43] : memref<64x128xf32, #tpu.memory_space<vmem>>, vector<64x128xf32>
    %c1_44 = arith.constant 1 : index
    %c0_45 = arith.constant 0 : index
    %c0_46 = arith.constant 0 : index
    %c0_47 = arith.constant 0 : index
    %33 = vector.load %arg2[%c1_44, %c0_45, %c0_46, %c0_47] : memref<3x3x128x128xbf16, #tpu.memory_space<vmem>>, vector<1x1x128x128xbf16>
    %34 = vector.shape_cast %33 : vector<1x1x128x128xbf16> to vector<128x128xbf16>
    %cst_48 = arith.constant dense<0.000000e+00> : vector<64x128xf32>
    %35 = tpu.matmul %31, %34, %cst_48 {dimension_numbers = #tpu.dot_dimension_numbers<[1], [0], [0], [1], [0, 0, 1, 1], [], []>} : vector<64x128xbf16>, vector<128x128xbf16>, vector<64x128xf32> -> vector<64x128xf32>
    %36 = arith.addf %32, %35 : vector<64x128xf32>
    %c0_49 = arith.constant 0 : index
    %c0_50 = arith.constant 0 : index
    %37 = vector.load %arg6[%c0_49, %c0_50] : memref<64x128xf32, #tpu.memory_space<vmem>>, vector<64x128xf32>
    tpu.vector_store %arg6[%c0_49, %c0_50], %36 {strides = array<i32>} : memref<64x128xf32, #tpu.memory_space<vmem>>, vector<64x128xf32>,
    %c0_51 = arith.constant 0 : index
    %c1_52 = arith.constant 1 : index
    %c1_53 = arith.constant 1 : index
    %c0_54 = arith.constant 0 : index
    %38 = vector.load %arg1[%c0_51, %c1_52, %c1_53, %c0_54] : memref<1x10x10x128xbf16, #tpu.memory_space<vmem>>, vector<1x8x8x128xbf16>
    %39 = vector.shape_cast %38 : vector<1x8x8x128xbf16> to vector<8x8x128xbf16>
    %40 = vector.shape_cast %39 : vector<8x8x128xbf16> to vector<64x128xbf16>
    %c0_55 = arith.constant 0 : index
    %c0_56 = arith.constant 0 : index
    %41 = vector.load %arg6[%c0_55, %c0_56] : memref<64x128xf32, #tpu.memory_space<vmem>>, vector<64x128xf32>
    %c1_57 = arith.constant 1 : index
    %c1_58 = arith.constant 1 : index
    %c0_59 = arith.constant 0 : index
    %c0_60 = arith.constant 0 : index
    %42 = vector.load %arg2[%c1_57, %c1_58, %c0_59, %c0_60] : memref<3x3x128x128xbf16, #tpu.memory_space<vmem>>, vector<1x1x128x128xbf16>
    %43 = vector.shape_cast %42 : vector<1x1x128x128xbf16> to vector<128x128xbf16>
    %cst_61 = arith.constant dense<0.000000e+00> : vector<64x128xf32>
    %44 = tpu.matmul %40, %43, %cst_61 {dimension_numbers = #tpu.dot_dimension_numbers<[1], [0], [0], [1], [0, 0, 1, 1], [], []>} : vector<64x128xbf16>, vector<128x128xbf16>, vector<64x128xf32> -> vector<64x128xf32>
    %45 = arith.addf %41, %44 : vector<64x128xf32>
    %c0_62 = arith.constant 0 : index
    %c0_63 = arith.constant 0 : index
    %46 = vector.load %arg6[%c0_62, %c0_63] : memref<64x128xf32, #tpu.memory_space<vmem>>, vector<64x128xf32>
    tpu.vector_store %arg6[%c0_62, %c0_63], %45 {strides = array<i32>} : memref<64x128xf32, #tpu.memory_space<vmem>>, vector<64x128xf32>,
    %c0_64 = arith.constant 0 : index
    %c1_65 = arith.constant 1 : index
    %c2_66 = arith.constant 2 : index
    %c0_67 = arith.constant 0 : index
    %47 = vector.load %arg1[%c0_64, %c1_65, %c2_66, %c0_67] : memref<1x10x10x128xbf16, #tpu.memory_space<vmem>>, vector<1x8x8x128xbf16>
    %48 = vector.shape_cast %47 : vector<1x8x8x128xbf16> to vector<8x8x128xbf16>
    %49 = vector.shape_cast %48 : vector<8x8x128xbf16> to vector<64x128xbf16>
    %c0_68 = arith.constant 0 : index
    %c0_69 = arith.constant 0 : index
    %50 = vector.load %arg6[%c0_68, %c0_69] : memref<64x128xf32, #tpu.memory_space<vmem>>, vector<64x128xf32>
    %c1_70 = arith.constant 1 : index
    %c2_71 = arith.constant 2 : index
    %c0_72 = arith.constant 0 : index
    %c0_73 = arith.constant 0 : index
    %51 = vector.load %arg2[%c1_70, %c2_71, %c0_72, %c0_73] : memref<3x3x128x128xbf16, #tpu.memory_space<vmem>>, vector<1x1x128x128xbf16>
    %52 = vector.shape_cast %51 : vector<1x1x128x128xbf16> to vector<128x128xbf16>
    %cst_74 = arith.constant dense<0.000000e+00> : vector<64x128xf32>
    %53 = tpu.matmul %49, %52, %cst_74 {dimension_numbers = #tpu.dot_dimension_numbers<[1], [0], [0], [1], [0, 0, 1, 1], [], []>} : vector<64x128xbf16>, vector<128x128xbf16>, vector<64x128xf32> -> vector<64x128xf32>
    %54 = arith.addf %50, %53 : vector<64x128xf32>
    %c0_75 = arith.constant 0 : index
    %c0_76 = arith.constant 0 : index
    %55 = vector.load %arg6[%c0_75, %c0_76] : memref<64x128xf32, #tpu.memory_space<vmem>>, vector<64x128xf32>
    tpu.vector_store %arg6[%c0_75, %c0_76], %54 {strides = array<i32>} : memref<64x128xf32, #tpu.memory_space<vmem>>, vector<64x128xf32>,
    %c0_77 = arith.constant 0 : index
    %c2_78 = arith.constant 2 : index
    %c0_79 = arith.constant 0 : index
    %c0_80 = arith.constant 0 : index
    %56 = vector.load %arg1[%c0_77, %c2_78, %c0_79, %c0_80] : memref<1x10x10x128xbf16, #tpu.memory_space<vmem>>, vector<1x8x8x128xbf16>
    %57 = vector.shape_cast %56 : vector<1x8x8x128xbf16> to vector<8x8x128xbf16>
    %58 = vector.shape_cast %57 : vector<8x8x128xbf16> to vector<64x128xbf16>
    %c0_81 = arith.constant 0 : index
    %c0_82 = arith.constant 0 : index
    %59 = vector.load %arg6[%c0_81, %c0_82] : memref<64x128xf32, #tpu.memory_space<vmem>>, vector<64x128xf32>
    %c2_83 = arith.constant 2 : index
    %c0_84 = arith.constant 0 : index
    %c0_85 = arith.constant 0 : index
    %c0_86 = arith.constant 0 : index
    %60 = vector.load %arg2[%c2_83, %c0_84, %c0_85, %c0_86] : memref<3x3x128x128xbf16, #tpu.memory_space<vmem>>, vector<1x1x128x128xbf16>
    %61 = vector.shape_cast %60 : vector<1x1x128x128xbf16> to vector<128x128xbf16>
    %cst_87 = arith.constant dense<0.000000e+00> : vector<64x128xf32>
    %62 = tpu.matmul %58, %61, %cst_87 {dimension_numbers = #tpu.dot_dimension_numbers<[1], [0], [0], [1], [0, 0, 1, 1], [], []>} : vector<64x128xbf16>, vector<128x128xbf16>, vector<64x128xf32> -> vector<64x128xf32>
    %63 = arith.addf %59, %62 : vector<64x128xf32>
    %c0_88 = arith.constant 0 : index
    %c0_89 = arith.constant 0 : index
    %64 = vector.load %arg6[%c0_88, %c0_89] : memref<64x128xf32, #tpu.memory_space<vmem>>, vector<64x128xf32>
    tpu.vector_store %arg6[%c0_88, %c0_89], %63 {strides = array<i32>} : memref<64x128xf32, #tpu.memory_space<vmem>>, vector<64x128xf32>,
    %c0_90 = arith.constant 0 : index
    %c2_91 = arith.constant 2 : index
    %c1_92 = arith.constant 1 : index
    %c0_93 = arith.constant 0 : index
    %65 = vector.load %arg1[%c0_90, %c2_91, %c1_92, %c0_93] : memref<1x10x10x128xbf16, #tpu.memory_space<vmem>>, vector<1x8x8x128xbf16>
    %66 = vector.shape_cast %65 : vector<1x8x8x128xbf16> to vector<8x8x128xbf16>
    %67 = vector.shape_cast %66 : vector<8x8x128xbf16> to vector<64x128xbf16>
    %c0_94 = arith.constant 0 : index
    %c0_95 = arith.constant 0 : index
    %68 = vector.load %arg6[%c0_94, %c0_95] : memref<64x128xf32, #tpu.memory_space<vmem>>, vector<64x128xf32>
    %c2_96 = arith.constant 2 : index
    %c1_97 = arith.constant 1 : index
    %c0_98 = arith.constant 0 : index
    %c0_99 = arith.constant 0 : index
    %69 = vector.load %arg2[%c2_96, %c1_97, %c0_98, %c0_99] : memref<3x3x128x128xbf16, #tpu.memory_space<vmem>>, vector<1x1x128x128xbf16>
    %70 = vector.shape_cast %69 : vector<1x1x128x128xbf16> to vector<128x128xbf16>
    %cst_100 = arith.constant dense<0.000000e+00> : vector<64x128xf32>
    %71 = tpu.matmul %67, %70, %cst_100 {dimension_numbers = #tpu.dot_dimension_numbers<[1], [0], [0], [1], [0, 0, 1, 1], [], []>} : vector<64x128xbf16>, vector<128x128xbf16>, vector<64x128xf32> -> vector<64x128xf32>
    %72 = arith.addf %68, %71 : vector<64x128xf32>
    %c0_101 = arith.constant 0 : index
    %c0_102 = arith.constant 0 : index
    %73 = vector.load %arg6[%c0_101, %c0_102] : memref<64x128xf32, #tpu.memory_space<vmem>>, vector<64x128xf32>
    tpu.vector_store %arg6[%c0_101, %c0_102], %72 {strides = array<i32>} : memref<64x128xf32, #tpu.memory_space<vmem>>, vector<64x128xf32>,
    %c0_103 = arith.constant 0 : index
    %c2_104 = arith.constant 2 : index
    %c2_105 = arith.constant 2 : index
    %c0_106 = arith.constant 0 : index
    %74 = vector.load %arg1[%c0_103, %c2_104, %c2_105, %c0_106] : memref<1x10x10x128xbf16, #tpu.memory_space<vmem>>, vector<1x8x8x128xbf16>
    %75 = vector.shape_cast %74 : vector<1x8x8x128xbf16> to vector<8x8x128xbf16>
    %76 = vector.shape_cast %75 : vector<8x8x128xbf16> to vector<64x128xbf16>
    %c0_107 = arith.constant 0 : index
    %c0_108 = arith.constant 0 : index
    %77 = vector.load %arg6[%c0_107, %c0_108] : memref<64x128xf32, #tpu.memory_space<vmem>>, vector<64x128xf32>
    %c2_109 = arith.constant 2 : index
    %c2_110 = arith.constant 2 : index
    %c0_111 = arith.constant 0 : index
    %c0_112 = arith.constant 0 : index
    %78 = vector.load %arg2[%c2_109, %c2_110, %c0_111, %c0_112] : memref<3x3x128x128xbf16, #tpu.memory_space<vmem>>, vector<1x1x128x128xbf16>
    %79 = vector.shape_cast %78 : vector<1x1x128x128xbf16> to vector<128x128xbf16>
    %cst_113 = arith.constant dense<0.000000e+00> : vector<64x128xf32>
    %80 = tpu.matmul %76, %79, %cst_113 {dimension_numbers = #tpu.dot_dimension_numbers<[1], [0], [0], [1], [0, 0, 1, 1], [], []>} : vector<64x128xbf16>, vector<128x128xbf16>, vector<64x128xf32> -> vector<64x128xf32>
    %81 = arith.addf %77, %80 : vector<64x128xf32>
    %c0_114 = arith.constant 0 : index
    %c0_115 = arith.constant 0 : index
    %82 = vector.load %arg6[%c0_114, %c0_115] : memref<64x128xf32, #tpu.memory_space<vmem>>, vector<64x128xf32>
    tpu.vector_store %arg6[%c0_114, %c0_115], %81 {strides = array<i32>} : memref<64x128xf32, #tpu.memory_space<vmem>>, vector<64x128xf32>,
    %c0_116 = arith.constant 0 : index
    %c0_117 = arith.constant 0 : index
    %83 = vector.load %arg6[%c0_116, %c0_117] : memref<64x128xf32, #tpu.memory_space<vmem>>, vector<64x128xf32>
    %84 = vector.shape_cast %83 : vector<64x128xf32> to vector<1x8x8x128xf32>
    %85 = arith.truncf %84 : vector<1x8x8x128xf32> to vector<1x8x8x128xbf16>
    %c0_118 = arith.constant 0 : index
    %c0_119 = arith.constant 0 : index
    %c0_120 = arith.constant 0 : index
    %c0_121 = arith.constant 0 : index
    %86 = vector.load %arg3[%c0_118, %c0_119, %c0_120, %c0_121] : memref<1x8x8x128xbf16, #tpu.memory_space<vmem>>, vector<1x8x8x128xbf16>
    tpu.vector_store %arg3[%c0_118, %c0_119, %c0_120, %c0_121], %85 {strides = array<i32>} : memref<1x8x8x128xbf16, #tpu.memory_space<vmem>>, vector<1x8x8x128xbf16>,
    %cst_122 = arith.constant dense<0.000000e+00> : vector<128xf32>
    %87 = vector.multi_reduction <add>, %83, %cst_122 [0] : vector<64x128xf32> to vector<128xf32>
    %88 = vector.shape_cast %87 : vector<128xf32> to vector<1x1x1x128xf32>
    %c0_123 = arith.constant 0 : index
    %c0_124 = arith.constant 0 : index
    %c0_125 = arith.constant 0 : index
    %c0_126 = arith.constant 0 : index
    %89 = vector.load %arg4[%c0_123, %c0_124, %c0_125, %c0_126] : memref<1x1x1x128xf32, #tpu.memory_space<vmem>>, vector<1x1x1x128xf32>
    tpu.vector_store %arg4[%c0_123, %c0_124, %c0_125, %c0_126], %88 {strides = array<i32>} : memref<1x1x1x128xf32, #tpu.memory_space<vmem>>, vector<1x1x1x128xf32>,
    %90 = arith.mulf %83, %83 : vector<64x128xf32>
    %cst_127 = arith.constant dense<0.000000e+00> : vector<128xf32>
    %91 = vector.multi_reduction <add>, %90, %cst_127 [0] : vector<64x128xf32> to vector<128xf32>
    %92 = vector.shape_cast %91 : vector<128xf32> to vector<1x1x1x128xf32>
    %c0_128 = arith.constant 0 : index
    %c0_129 = arith.constant 0 : index
    %c0_130 = arith.constant 0 : index
    %c0_131 = arith.constant 0 : index
    %93 = vector.load %arg5[%c0_128, %c0_129, %c0_130, %c0_131] : memref<1x1x1x128xf32, #tpu.memory_space<vmem>>, vector<1x1x1x128xf32>
    tpu.vector_store %arg5[%c0_128, %c0_129, %c0_130, %c0_131], %92 {strides = array<i32>} : memref<1x1x1x128xf32, #tpu.memory_space<vmem>>, vector<1x1x1x128xf32>,
    return
  }
  func.func @transform_0(%arg0: i32) -> (i32, i32, i32, i32) {
    %c0_i32 = arith.constant 0 : i32
    %c0_i32_0 = arith.constant 0 : i32
    %c0_i32_1 = arith.constant 0 : i32
    %c0_i32_2 = arith.constant 0 : i32
    return %arg0, %c0_i32, %c0_i32_0, %c0_i32_1 : i32, i32, i32, i32
  }
  func.func @transform_1(%arg0: i32) -> (i32, i32, i32, i32) {
    %c0_i32 = arith.constant 0 : i32
    %c0_i32_0 = arith.constant 0 : i32
    %c0_i32_1 = arith.constant 0 : i32
    %c0_i32_2 = arith.constant 0 : i32
    %c0_i32_3 = arith.constant 0 : i32
    return %c0_i32, %c0_i32_0, %c0_i32_1, %c0_i32_2 : i32, i32, i32, i32
  }
  func.func @transform_2(%arg0: i32) -> (i32, i32, i32, i32) {
    %c0_i32 = arith.constant 0 : i32
    %c0_i32_0 = arith.constant 0 : i32
    %c0_i32_1 = arith.constant 0 : i32
    %c0_i32_2 = arith.constant 0 : i32
    return %arg0, %c0_i32, %c0_i32_0, %c0_i32_1 : i32, i32, i32, i32
  }
  func.func @transform_3(%arg0: i32) -> (i32, i32, i32, i32) {
    %c0_i32 = arith.constant 0 : i32
    %c0_i32_0 = arith.constant 0 : i32
    %c0_i32_1 = arith.constant 0 : i32
    %c0_i32_2 = arith.constant 0 : i32
    return %arg0, %c0_i32, %c0_i32_0, %c0_i32_1 : i32, i32, i32, i32
  }
  func.func @transform_4(%arg0: i32) -> (i32, i32, i32, i32) {
    %c0_i32 = arith.constant 0 : i32
    %c0_i32_0 = arith.constant 0 : i32
    %c0_i32_1 = arith.constant 0 : i32
    %c0_i32_2 = arith.constant 0 : i32
    return %arg0, %c0_i32, %c0_i32_0, %c0_i32_1 : i32, i32, i32, i32
  }
}

module attributes {stable_mosaic.version = 11 : i64} {
  func.func @_bn_add_relu_preact_kernel(%arg0: i32, %arg1: memref<1x8x8x128xbf16, #tpu.memory_space<vmem>>, %arg2: memref<1x8x8x128xbf16, #tpu.memory_space<vmem>>, %arg3: memref<1x128xf32, #tpu.memory_space<vmem>>, %arg4: memref<1x128xf32, #tpu.memory_space<vmem>>, %arg5: memref<1x128xf32, #tpu.memory_space<vmem>>, %arg6: memref<1x128xf32, #tpu.memory_space<vmem>>, %arg7: memref<1x8x8x128xf32, #tpu.memory_space<vmem>>, %arg8: memref<1x8x8x128xf32, #tpu.memory_space<vmem>>) attributes {dimension_semantics = [#tpu.dimension_semantics<parallel>], iteration_bounds = array<i64: 2>, scalar_prefetch = 0 : i64, scratch_operands = 0 : i64, tpu.core_type = #tpu.core_type<tc>, window_params = [{transform_indices = @transform_0, window_bounds = array<i64: 1, 8, 8, 128>}, {transform_indices = @transform_1, window_bounds = array<i64: 1, 8, 8, 128>}, {pipeline_mode = #tpu.pipeline_mode<synchronous>, transform_indices = @transform_2, window_bounds = array<i64: 1, 128>}, {pipeline_mode = #tpu.pipeline_mode<synchronous>, transform_indices = @transform_3, window_bounds = array<i64: 1, 128>}, {pipeline_mode = #tpu.pipeline_mode<synchronous>, transform_indices = @transform_4, window_bounds = array<i64: 1, 128>}, {pipeline_mode = #tpu.pipeline_mode<synchronous>, transform_indices = @transform_5, window_bounds = array<i64: 1, 128>}, {transform_indices = @transform_6, window_bounds = array<i64: 1, 8, 8, 128>}, {transform_indices = @transform_7, window_bounds = array<i64: 1, 8, 8, 128>}]} {
    %c0 = arith.constant 0 : index
    %c0_0 = arith.constant 0 : index
    %c0_1 = arith.constant 0 : index
    %c0_2 = arith.constant 0 : index
    %0 = vector.load %arg1[%c0, %c0_0, %c0_1, %c0_2] : memref<1x8x8x128xbf16, #tpu.memory_space<vmem>>, vector<1x8x8x128xbf16>
    %1 = arith.extf %0 : vector<1x8x8x128xbf16> to vector<1x8x8x128xf32>
    %c0_3 = arith.constant 0 : index
    %c0_4 = arith.constant 0 : index
    %2 = vector.load %arg3[%c0_3, %c0_4] : memref<1x128xf32, #tpu.memory_space<vmem>>, vector<1x128xf32>
    %3 = vector.shape_cast %2 : vector<1x128xf32> to vector<1x1x1x128xf32>
    %4 = vector.broadcast %3 : vector<1x1x1x128xf32> to vector<1x8x8x128xf32>
    %5 = arith.mulf %1, %4 : vector<1x8x8x128xf32>
    %c0_5 = arith.constant 0 : index
    %c0_6 = arith.constant 0 : index
    %6 = vector.load %arg4[%c0_5, %c0_6] : memref<1x128xf32, #tpu.memory_space<vmem>>, vector<1x128xf32>
    %7 = vector.shape_cast %6 : vector<1x128xf32> to vector<1x1x1x128xf32>
    %8 = vector.broadcast %7 : vector<1x1x1x128xf32> to vector<1x8x8x128xf32>
    %9 = arith.addf %5, %8 : vector<1x8x8x128xf32>
    %c0_7 = arith.constant 0 : index
    %c0_8 = arith.constant 0 : index
    %c0_9 = arith.constant 0 : index
    %c0_10 = arith.constant 0 : index
    %10 = vector.load %arg2[%c0_7, %c0_8, %c0_9, %c0_10] : memref<1x8x8x128xbf16, #tpu.memory_space<vmem>>, vector<1x8x8x128xbf16>
    %11 = arith.extf %10 : vector<1x8x8x128xbf16> to vector<1x8x8x128xf32>
    %c0_11 = arith.constant 0 : index
    %c0_12 = arith.constant 0 : index
    %12 = vector.load %arg5[%c0_11, %c0_12] : memref<1x128xf32, #tpu.memory_space<vmem>>, vector<1x128xf32>
    %13 = vector.shape_cast %12 : vector<1x128xf32> to vector<1x1x1x128xf32>
    %14 = vector.broadcast %13 : vector<1x1x1x128xf32> to vector<1x8x8x128xf32>
    %15 = arith.mulf %11, %14 : vector<1x8x8x128xf32>
    %16 = arith.addf %9, %15 : vector<1x8x8x128xf32>
    %c0_13 = arith.constant 0 : index
    %c0_14 = arith.constant 0 : index
    %17 = vector.load %arg6[%c0_13, %c0_14] : memref<1x128xf32, #tpu.memory_space<vmem>>, vector<1x128xf32>
    %18 = vector.shape_cast %17 : vector<1x128xf32> to vector<1x1x1x128xf32>
    %19 = vector.broadcast %18 : vector<1x1x1x128xf32> to vector<1x8x8x128xf32>
    %20 = arith.addf %16, %19 : vector<1x8x8x128xf32>
    %c0_15 = arith.constant 0 : index
    %c0_16 = arith.constant 0 : index
    %c0_17 = arith.constant 0 : index
    %c0_18 = arith.constant 0 : index
    %21 = vector.load %arg8[%c0_15, %c0_16, %c0_17, %c0_18] : memref<1x8x8x128xf32, #tpu.memory_space<vmem>>, vector<1x8x8x128xf32>
    tpu.vector_store %arg8[%c0_15, %c0_16, %c0_17, %c0_18], %20 {strides = array<i32>} : memref<1x8x8x128xf32, #tpu.memory_space<vmem>>, vector<1x8x8x128xf32>,
    %cst = arith.constant 0.000000e+00 : f32
    %22 = vector.broadcast %cst : f32 to vector<1x8x8x128xf32>
    %23 = arith.maximumf %20, %22 : vector<1x8x8x128xf32>
    %c0_19 = arith.constant 0 : index
    %c0_20 = arith.constant 0 : index
    %c0_21 = arith.constant 0 : index
    %c0_22 = arith.constant 0 : index
    %24 = vector.load %arg7[%c0_19, %c0_20, %c0_21, %c0_22] : memref<1x8x8x128xf32, #tpu.memory_space<vmem>>, vector<1x8x8x128xf32>
    tpu.vector_store %arg7[%c0_19, %c0_20, %c0_21, %c0_22], %23 {strides = array<i32>} : memref<1x8x8x128xf32, #tpu.memory_space<vmem>>, vector<1x8x8x128xf32>,
    return
  }
  func.func @transform_0(%arg0: i32) -> (i32, i32, i32, i32) {
    %c0_i32 = arith.constant 0 : i32
    %c0_i32_0 = arith.constant 0 : i32
    %c0_i32_1 = arith.constant 0 : i32
    %c0_i32_2 = arith.constant 0 : i32
    return %arg0, %c0_i32, %c0_i32_0, %c0_i32_1 : i32, i32, i32, i32
  }
  func.func @transform_1(%arg0: i32) -> (i32, i32, i32, i32) {
    %c0_i32 = arith.constant 0 : i32
    %c0_i32_0 = arith.constant 0 : i32
    %c0_i32_1 = arith.constant 0 : i32
    %c0_i32_2 = arith.constant 0 : i32
    return %arg0, %c0_i32, %c0_i32_0, %c0_i32_1 : i32, i32, i32, i32
  }
  func.func @transform_2(%arg0: i32) -> (i32, i32) {
    %c0_i32 = arith.constant 0 : i32
    %c0_i32_0 = arith.constant 0 : i32
    %c0_i32_1 = arith.constant 0 : i32
    return %c0_i32, %c0_i32_0 : i32, i32
  }
  func.func @transform_3(%arg0: i32) -> (i32, i32) {
    %c0_i32 = arith.constant 0 : i32
    %c0_i32_0 = arith.constant 0 : i32
    %c0_i32_1 = arith.constant 0 : i32
    return %c0_i32, %c0_i32_0 : i32, i32
  }
  func.func @transform_4(%arg0: i32) -> (i32, i32) {
    %c0_i32 = arith.constant 0 : i32
    %c0_i32_0 = arith.constant 0 : i32
    %c0_i32_1 = arith.constant 0 : i32
    return %c0_i32, %c0_i32_0 : i32, i32
  }
  func.func @transform_5(%arg0: i32) -> (i32, i32) {
    %c0_i32 = arith.constant 0 : i32
    %c0_i32_0 = arith.constant 0 : i32
    %c0_i32_1 = arith.constant 0 : i32
    return %c0_i32, %c0_i32_0 : i32, i32
  }
  func.func @transform_6(%arg0: i32) -> (i32, i32, i32, i32) {
    %c0_i32 = arith.constant 0 : i32
    %c0_i32_0 = arith.constant 0 : i32
    %c0_i32_1 = arith.constant 0 : i32
    %c0_i32_2 = arith.constant 0 : i32
    return %arg0, %c0_i32, %c0_i32_0, %c0_i32_1 : i32, i32, i32, i32
  }
  func.func @transform_7(%arg0: i32) -> (i32, i32, i32, i32) {
    %c0_i32 = arith.constant 0 : i32
    %c0_i32_0 = arith.constant 0 : i32
    %c0_i32_1 = arith.constant 0 : i32
    %c0_i32_2 = arith.constant 0 : i32
    return %arg0, %c0_i32, %c0_i32_0, %c0_i32_1 : i32, i32, i32, i32
  }
}

</mosaic_0001>

<llo_original>
// kernel: basic_block_forward.5
$region0: #{basic_block_forward.5}
  #allocation0 [shape = 'u32[]', space=smem, size = 0x4, offset = 0x4, fixed_abs, tag = 'smem constant byte address 0x4 - core index']
  #allocation1 [shape = 'u32[144,128]{1,0:T(1,128)}', space=vmem, size = 0x12000, scoped, tag = 'internal scratch']
  %s0 = inlined_call_operand.vmem [shape: bf16[2,8,8,128], index: 0, kind: input, shape index: {}]
  %s1 = inlined_call_operand.vmem [shape: bf16[2,8,8,128], index: 1, kind: input, shape index: {}]
  %s2 = inlined_call_operand.vmem [shape: f32[1,128], index: 2, kind: input, shape index: {}]
  %s3 = inlined_call_operand.vmem [shape: f32[1,128], index: 3, kind: input, shape index: {}]
  %s4 = inlined_call_operand.vmem [shape: f32[1,128], index: 4, kind: input, shape index: {}]
  %s5 = inlined_call_operand.vmem [shape: f32[1,128], index: 5, kind: input, shape index: {}]
  %s6 = inlined_call_operand.vmem [shape: f32[2,8,8,128], index: 6, kind: output, shape index: {0}]
  %s7 = inlined_call_operand.vmem [shape: f32[2,8,8,128], index: 7, kind: output, shape index: {1}]
  %8 = xla_tuple %s6, %s7
  %s9 = sld [smem:[#allocation0]]
  $region65: #{basic_block_forward.5} parent=0
    _
  %s11 = ssub.s32 1, %s9
  %s12 = scalar_select 0, %s11, %s9
  loop: start=0, step=1, limit=4
  $region2: #{basic_block_forward.5} parent=0 // loop_pre_header
    _
  $region3: #{basic_block_forward.5} parent=0 // loop_header
    %s14 = sphi 0, %s18
    %p15 = scmp.ge.s32.totalorder %s14, 4
    %s24 = sphi 0, %s26
    %s27 = sphi 0, %s24
    %s28 = sphi 0, %s27
    %s44 = sphi 0, %s28
    %s50 = sphi 0, %s52
    %s53 = sphi 0, %s50
    %s54 = sphi 0, %s53
    %s70 = sphi 0, %s54
    %s74 = sphi 0, %s74
    %s76 = sphi 0, %s74
    %s77 = sphi 0, %s76
    %s91 = sphi 0, %s77
    %s95 = sphi 0, %s95
    %s97 = sphi 0, %s95
    %s98 = sphi 0, %s97
    %s112 = sphi 0, %s98
    %s116 = sphi 0, %s116
    %s118 = sphi 0, %s116
    %s119 = sphi 0, %s118
    %s133 = sphi 0, %s119
    %s137 = sphi 0, %s137
    %s139 = sphi 0, %s137
    %s140 = sphi 0, %s139
    %s154 = sphi 0, %s140
    %s160 = sphi 0, %s162
    %s163 = sphi 0, %s160
    %s164 = sphi 0, %s163
    %s180 = sphi 0, %s164
    %s186 = sphi 0, %s188
    %s189 = sphi 0, %s186
    %s190 = sphi 0, %s189
    %s206 = sphi 0, %s190
  $region4: #{basic_block_forward.5} parent=0 // loop_header_branch
    %17 = sbr.rel (%p15) target = $region8
  $region5: #{basic_block_forward.5} parent=0 // loop_body
    %s19 = ssub.s32 %s14, 1
    %s20 = ssub.s32 %s14, 2
    %s21 = sadd.s32 %s14, 1
    %s22 = ssub.s32 %s14, %s21
    %p23 = scmp.eq.s32.totalorder %s22, 0
    %s25 = sadd.s32 %s24, 1
    %s26 = scalar_select %p23, %s24, %s25
    %p29 = pneg %p23
    %p30 = scmp.eq.s32.totalorder %s14, 1
    %p31 = por %p29, %p30
    %p32 = scmp.ne.s32.totalorder %s24, %s27
    %p33 = scmp.eq.s32.totalorder %s14, 0
    %p34 = por %p32, %p33
    %p35 = scmp.ne.s32.totalorder %s24, %s27
    %p36 = scmp.eq.s32.totalorder %s19, 1
    %p37 = por %p35, %p36
    %p38 = scmp.ne.s32.totalorder %s27, %s28
    %p39 = scmp.eq.s32.totalorder %s19, 0
    %p40 = por %p38, %p39
    %p41 = scmp.ne.s32.totalorder %s27, %s28
    %p42 = scmp.eq.s32.totalorder %s20, 1
    %p43 = por %p41, %p42
    %p45 = scmp.ne.s32.totalorder %s28, %s44
    %p46 = scmp.eq.s32.totalorder %s20, 0
    %p47 = por %p45, %p46
    %s48 = ssub.s32 %s14, %s21
    %p49 = scmp.eq.s32.totalorder %s48, 0
    %s51 = sadd.s32 %s50, 1
    %s52 = scalar_select %p49, %s50, %s51
    %p55 = pneg %p49
    %p56 = scmp.eq.s32.totalorder %s14, 1
    %p57 = por %p55, %p56
    %p58 = scmp.ne.s32.totalorder %s50, %s53
    %p59 = scmp.eq.s32.totalorder %s14, 0
    %p60 = por %p58, %p59
    %p61 = scmp.ne.s32.totalorder %s50, %s53
    %p62 = scmp.eq.s32.totalorder %s19, 1
    %p63 = por %p61, %p62
    %p64 = scmp.ne.s32.totalorder %s53, %s54
    %p65 = scmp.eq.s32.totalorder %s19, 0
    %p66 = por %p64, %p65
    %p67 = scmp.ne.s32.totalorder %s53, %s54
    %p68 = scmp.eq.s32.totalorder %s20, 1
    %p69 = por %p67, %p68
    %p71 = scmp.ne.s32.totalorder %s54, %s70
    %p72 = scmp.eq.s32.totalorder %s20, 0
    %p73 = por %p71, %p72
    %s75 = sadd.s32 %s74, 1
    %p78 = scmp.eq.s32.totalorder %s14, 1
    %p79 = scmp.ne.s32.totalorder %s74, %s76
    %p80 = scmp.eq.s32.totalorder %s14, 0
    %p81 = por %p79, %p80
    %p82 = scmp.ne.s32.totalorder %s74, %s76
    %p83 = scmp.eq.s32.totalorder %s19, 1
    %p84 = por %p82, %p83
    %p85 = scmp.ne.s32.totalorder %s76, %s77
    %p86 = scmp.eq.s32.totalorder %s19, 0
    %p87 = por %p85, %p86
    %p88 = scmp.ne.s32.totalorder %s76, %s77
    %p89 = scmp.eq.s32.totalorder %s20, 1
    %p90 = por %p88, %p89
    %p92 = scmp.ne.s32.totalorder %s77, %s91
    %p93 = scmp.eq.s32.totalorder %s20, 0
    %p94 = por %p92, %p93
    %s96 = sadd.s32 %s95, 1
    %p99 = scmp.eq.s32.totalorder %s14, 1
    %p100 = scmp.ne.s32.totalorder %s95, %s97
    %p101 = scmp.eq.s32.totalorder %s14, 0
    %p102 = por %p100, %p101
    %p103 = scmp.ne.s32.totalorder %s95, %s97
    %p104 = scmp.eq.s32.totalorder %s19, 1
    %p105 = por %p103, %p104
    %p106 = scmp.ne.s32.totalorder %s97, %s98
    %p107 = scmp.eq.s32.totalorder %s19, 0
    %p108 = por %p106, %p107
    %p109 = scmp.ne.s32.totalorder %s97, %s98
    %p110 = scmp.eq.s32.totalorder %s20, 1
    %p111 = por %p109, %p110
    %p113 = scmp.ne.s32.totalorder %s98, %s112
    %p114 = scmp.eq.s32.totalorder %s20, 0
    %p115 = por %p113, %p114
    %s117 = sadd.s32 %s116, 1
    %p120 = scmp.eq.s32.totalorder %s14, 1
    %p121 = scmp.ne.s32.totalorder %s116, %s118
    %p122 = scmp.eq.s32.totalorder %s14, 0
    %p123 = por %p121, %p122
    %p124 = scmp.ne.s32.totalorder %s116, %s118
    %p125 = scmp.eq.s32.totalorder %s19, 1
    %p126 = por %p124, %p125
    %p127 = scmp.ne.s32.totalorder %s118, %s119
    %p128 = scmp.eq.s32.totalorder %s19, 0
    %p129 = por %p127, %p128
    %p130 = scmp.ne.s32.totalorder %s118, %s119
    %p131 = scmp.eq.s32.totalorder %s20, 1
    %p132 = por %p130, %p131
    %p134 = scmp.ne.s32.totalorder %s119, %s133
    %p135 = scmp.eq.s32.totalorder %s20, 0
    %p136 = por %p134, %p135
    %s138 = sadd.s32 %s137, 1
    %p141 = scmp.eq.s32.totalorder %s14, 1
    %p142 = scmp.ne.s32.totalorder %s137, %s139
    %p143 = scmp.eq.s32.totalorder %s14, 0
    %p144 = por %p142, %p143
    %p145 = scmp.ne.s32.totalorder %s137, %s139
    %p146 = scmp.eq.s32.totalorder %s19, 1
    %p147 = por %p145, %p146
    %p148 = scmp.ne.s32.totalorder %s139, %s140
    %p149 = scmp.eq.s32.totalorder %s19, 0
    %p150 = por %p148, %p149
    %p151 = scmp.ne.s32.totalorder %s139, %s140
    %p152 = scmp.eq.s32.totalorder %s20, 1
    %p153 = por %p151, %p152
    %p155 = scmp.ne.s32.totalorder %s140, %s154
    %p156 = scmp.eq.s32.totalorder %s20, 0
    %p157 = por %p155, %p156
    %s158 = ssub.s32 %s14, %s21
    %p159 = scmp.eq.s32.totalorder %s158, 0
    %s161 = sadd.s32 %s160, 1
    %s162 = scalar_select %p159, %s160, %s161
    %p165 = pneg %p159
    %p166 = scmp.eq.s32.totalorder %s14, 1
    %p167 = por %p165, %p166
    %p168 = scmp.ne.s32.totalorder %s160, %s163
    %p169 = scmp.eq.s32.totalorder %s14, 0
    %p170 = por %p168, %p169
    %p171 = scmp.ne.s32.totalorder %s160, %s163
    %p172 = scmp.eq.s32.totalorder %s19, 1
    %p173 = por %p171, %p172
    %p174 = scmp.ne.s32.totalorder %s163, %s164
    %p175 = scmp.eq.s32.totalorder %s19, 0
    %p176 = por %p174, %p175
    %p177 = scmp.ne.s32.totalorder %s163, %s164
    %p178 = scmp.eq.s32.totalorder %s20, 1
    %p179 = por %p177, %p178
    %p181 = scmp.ne.s32.totalorder %s164, %s180
    %p182 = scmp.eq.s32.totalorder %s20, 0
    %p183 = por %p181, %p182
    %s184 = ssub.s32 %s14, %s21
    %p185 = scmp.eq.s32.totalorder %s184, 0
    %s187 = sadd.s32 %s186, 1
    %s188 = scalar_select %p185, %s186, %s187
    %p191 = pneg %p185
    %p192 = scmp.eq.s32.totalorder %s14, 1
    %p193 = por %p191, %p192
    %p194 = scmp.ne.s32.totalorder %s186, %s189
    %p195 = scmp.eq.s32.totalorder %s14, 0
    %p196 = por %p194, %p195
    %p197 = scmp.ne.s32.totalorder %s186, %s189
    %p198 = scmp.eq.s32.totalorder %s19, 1
    %p199 = por %p197, %p198
    %p200 = scmp.ne.s32.totalorder %s189, %s190
    %p201 = scmp.eq.s32.totalorder %s19, 0
    %p202 = por %p200, %p201
    %p203 = scmp.ne.s32.totalorder %s189, %s190
    %p204 = scmp.eq.s32.totalorder %s20, 1
    %p205 = por %p203, %p204
    %p207 = scmp.ne.s32.totalorder %s190, %s206
    %p208 = scmp.eq.s32.totalorder %s20, 0
    %p209 = por %p207, %p208
    %p210 = scmp.le.s32.totalorder 1, %s14
    %p211 = scmp.lt.s32.totalorder %s14, 3
    %p212 = pnand %p210, %p211
    %p213 = pneg %p212
    // Predicated region
    $region9: #{basic_block_forward.5} parent=5 // pred_check
      _
    $region10: #{basic_block_forward.5} parent=5 // pred_check_branch
      %215 = sbr.rel (%p212) target = $region12
    $region11: #{basic_block_forward.5} parent=5 // pred_region
      %s216 = ssub.s32 %s14, 1
      // Predicated region
      $region13: #{basic_block_forward.5} parent=11 // pred_check
        %p217 = pneg %p87
      $region14: #{basic_block_forward.5} parent=11 // pred_check_branch
        %219 = sbr.rel (%p217) target = $region16
      $region15: #{basic_block_forward.5} parent=11 // pred_region
        _
      $region16: #{basic_block_forward.5} parent=11 // pred_fallthru
        _
      // Predicated region
      $region17: #{basic_block_forward.5} parent=11 // pred_check
        %p220 = pneg %p108
      $region18: #{basic_block_forward.5} parent=11 // pred_check_branch
        %222 = sbr.rel (%p220) target = $region20
      $region19: #{basic_block_forward.5} parent=11 // pred_region
        _
      $region20: #{basic_block_forward.5} parent=11 // pred_fallthru
        _
      // Predicated region
      $region21: #{basic_block_forward.5} parent=11 // pred_check
        %p223 = pneg %p129
      $region22: #{basic_block_forward.5} parent=11 // pred_check_branch
        %225 = sbr.rel (%p223) target = $region24
      $region23: #{basic_block_forward.5} parent=11 // pred_region
        _
      $region24: #{basic_block_forward.5} parent=11 // pred_fallthru
        _
      // Predicated region
      $region25: #{basic_block_forward.5} parent=11 // pred_check
        %p226 = pneg %p150
      $region26: #{basic_block_forward.5} parent=11 // pred_check_branch
        %228 = sbr.rel (%p226) target = $region28
      $region27: #{basic_block_forward.5} parent=11 // pred_region
        _
      $region28: #{basic_block_forward.5} parent=11 // pred_fallthru
        _
    $region12: #{basic_block_forward.5} parent=5 // pred_fallthru
      _
    %p229 = scmp.lt.s32.totalorder %s14, 2
    // Predicated region
    $region29: #{basic_block_forward.5} parent=5 // pred_check
      %p230 = pneg %p229
    $region30: #{basic_block_forward.5} parent=5 // pred_check_branch
      %232 = sbr.rel (%p230) target = $region32
    $region31: #{basic_block_forward.5} parent=5 // pred_region
      // Predicated region
      $region33: #{basic_block_forward.5} parent=31 // pred_check
        %p233 = pneg %p34
      $region34: #{basic_block_forward.5} parent=31 // pred_check_branch
        %235 = sbr.rel (%p233) target = $region36
      $region35: #{basic_block_forward.5} parent=31 // pred_region
        %p236 = scmp.lt.s32.totalorder %s14, 1
        %s237 = scalar_select %p236, %s14, 1
        %s238 = smul.addr %s237, 8
        %s239 = smul.addr %s238, 4
        %s240 = scalar_lea.vmem %s0, %s239
      $region36: #{basic_block_forward.5} parent=31 // pred_fallthru
        _
      // Predicated region
      $region37: #{basic_block_forward.5} parent=31 // pred_check
        %p241 = pneg %p60
      $region38: #{basic_block_forward.5} parent=31 // pred_check_branch
        %243 = sbr.rel (%p241) target = $region40
      $region39: #{basic_block_forward.5} parent=31 // pred_region
        %p244 = scmp.lt.s32.totalorder %s14, 1
        %s245 = scalar_select %p244, %s14, 1
        %s246 = smul.addr %s245, 8
        %s247 = smul.addr %s246, 4
        %s248 = scalar_lea.vmem %s1, %s247
      $region40: #{basic_block_forward.5} parent=31 // pred_fallthru
        _
    $region32: #{basic_block_forward.5} parent=5 // pred_fallthru
      _
    %p249 = scmp.le.s32.totalorder 1, %s14
    %p250 = scmp.lt.s32.totalorder %s14, 3
    %p251 = pnand %p249, %p250
    %p252 = pneg %p251
    // Predicated region
    $region41: #{basic_block_forward.5} parent=5 // pred_check
      _
    $region42: #{basic_block_forward.5} parent=5 // pred_check_branch
      %254 = sbr.rel (%p251) target = $region44
    $region43: #{basic_block_forward.5} parent=5 // pred_region
      %s255 = ssub.s32 %s14, 1
      %p256 = scmp.lt.s32.totalorder %s19, 1
      %s257 = scalar_select %p256, %s19, 1
      %s258 = smul.addr %s257, 8
      %s259 = smul.addr %s258, 4
      %s260 = scalar_lea.vmem %s0, %s259
      %p261 = pneg %p40
      %p262 = pneg %p37
      %p263 = scmp.lt.s32.totalorder %s19, 1
      %s264 = scalar_select %p263, %s19, 1
      %s265 = smul.addr %s264, 8
      %s266 = smul.addr %s265, 4
      %s267 = scalar_lea.vmem %s1, %s266
      %p268 = pneg %p66
      %p269 = pneg %p63
      %p270 = pneg %p87
      %p271 = pneg %p84
      %p272 = pneg %p108
      %p273 = pneg %p105
      %p274 = pneg %p129
      %p275 = pneg %p126
      %p276 = pneg %p150
      %p277 = pneg %p147
      %p278 = pneg %p176
      %p279 = pneg %p173
      %p280 = scmp.lt.s32.totalorder %s19, 1
      %s281 = scalar_select %p280, %s19, 1
      %s282 = smul.addr %s281, 8
      %s283 = smul.addr %s282, 8
      %s284 = scalar_lea.vmem %s6, %s283
      %p285 = pneg %p202
      %p286 = pneg %p199
      %p287 = scmp.lt.s32.totalorder %s19, 1
      %s288 = scalar_select %p287, %s19, 1
      %s289 = smul.addr %s288, 8
      %s290 = smul.addr %s289, 8
      %s291 = scalar_lea.vmem %s7, %s290
      %p292 = scmp.lt.s32.totalorder %s19, 1
      %s293 = scalar_select %p292, %s19, 1
      %s294 = smul.addr %s293, 8
      %s295 = smul.addr %s294, 4
      %s296 = scalar_lea.vmem %s0, %s295
      %p297 = scmp.lt.s32.totalorder %s19, 1
      %s298 = scalar_select %p297, %s19, 1
      %s299 = smul.addr %s298, 8
      %s300 = smul.addr %s299, 4
      %s301 = scalar_lea.vmem %s1, %s300
      %p302 = scmp.lt.s32.totalorder %s19, 1
      %s303 = scalar_select %p302, %s19, 1
      %s304 = smul.addr %s303, 8
      %s305 = smul.addr %s304, 8
      %s306 = scalar_lea.vmem %s6, %s305
      %p307 = scmp.lt.s32.totalorder %s19, 1
      %s308 = scalar_select %p307, %s19, 1
      %s309 = smul.addr %s308, 8
      %s310 = smul.addr %s309, 8
      %s311 = scalar_lea.vmem %s7, %s310
      %v312 = vld [vmem:[%s296] sm:$0xf]
      %v313 = vld [vmem:[%s296 + $0x4] sm:$0xf]
      %v314 = vld [vmem:[%s296 + $0x8] sm:$0xf]
      %v315 = vld [vmem:[%s296 + $0xc] sm:$0xf]
      %v316 = vld [vmem:[%s296 + $0x10] sm:$0xf]
      %v317 = vld [vmem:[%s296 + $0x14] sm:$0xf]
      %v318 = vld [vmem:[%s296 + $0x18] sm:$0xf]
      %v319 = vld [vmem:[%s296 + $0x1c] sm:$0xf]
      %v320 = vunpack.c.l.bf16 %v312
      %v321 = vunpack.c.l.bf16 %v313
      %v322 = vunpack.c.l.bf16 %v314
      %v323 = vunpack.c.l.bf16 %v315
      %v324 = vunpack.c.l.bf16 %v316
      %v325 = vunpack.c.l.bf16 %v317
      %v326 = vunpack.c.l.bf16 %v318
      %v327 = vunpack.c.l.bf16 %v319
      %v328 = vld [vmem:[%s2] sm:$0x1]
      %v330 = vlaneseq
      %v331 = vshrl.u32 %v330, 7
      %v332 = vsub.s32 0, %v331
      %v333 = vrot.slane %v328, %v332
      %v335 = vmul.f32 %v320, %v333
      %v336 = vmul.f32 %v321, %v333
      %v337 = vmul.f32 %v322, %v333
      %v338 = vmul.f32 %v323, %v333
      %v339 = vmul.f32 %v324, %v333
      %v340 = vmul.f32 %v325, %v333
      %v341 = vmul.f32 %v326, %v333
      %v342 = vmul.f32 %v327, %v333
      %v343 = vld [vmem:[%s3] sm:$0x1]
      %v345 = vlaneseq
      %v346 = vshrl.u32 %v345, 7
      %v347 = vsub.s32 0, %v346
      %v348 = vrot.slane %v343, %v347
      %v350 = vadd.f32 %v335, %v348
      %v351 = vadd.f32 %v336, %v348
      %v352 = vadd.f32 %v337, %v348
      %v353 = vadd.f32 %v338, %v348
      %v354 = vadd.f32 %v339, %v348
      %v355 = vadd.f32 %v340, %v348
      %v356 = vadd.f32 %v341, %v348
      %v357 = vadd.f32 %v342, %v348
      %v358 = vld [vmem:[%s301] sm:$0xf]
      %v359 = vld [vmem:[%s301 + $0x4] sm:$0xf]
      %v360 = vld [vmem:[%s301 + $0x8] sm:$0xf]
      %v361 = vld [vmem:[%s301 + $0xc] sm:$0xf]
      %v362 = vld [vmem:[%s301 + $0x10] sm:$0xf]
      %v363 = vld [vmem:[%s301 + $0x14] sm:$0xf]
      %v364 = vld [vmem:[%s301 + $0x18] sm:$0xf]
      %v365 = vld [vmem:[%s301 + $0x1c] sm:$0xf]
      %v366 = vunpack.c.l.bf16 %v358
      %v367 = vunpack.c.l.bf16 %v359
      %v368 = vunpack.c.l.bf16 %v360
      %v369 = vunpack.c.l.bf16 %v361
      %v370 = vunpack.c.l.bf16 %v362
      %v371 = vunpack.c.l.bf16 %v363
      %v372 = vunpack.c.l.bf16 %v364
      %v373 = vunpack.c.l.bf16 %v365
      %v374 = vld [vmem:[%s4] sm:$0x1]
      %v376 = vlaneseq
      %v377 = vshrl.u32 %v376, 7
      %v378 = vsub.s32 0, %v377
      %v379 = vrot.slane %v374, %v378
      %v381 = vmul.f32 %v366, %v379
      %v382 = vmul.f32 %v367, %v379
      %v383 = vmul.f32 %v368, %v379
      %v384 = vmul.f32 %v369, %v379
      %v385 = vmul.f32 %v370, %v379
      %v386 = vmul.f32 %v371, %v379
      %v387 = vmul.f32 %v372, %v379
      %v388 = vmul.f32 %v373, %v379
      %v389 = vadd.f32 %v350, %v381
      %v390 = vadd.f32 %v351, %v382
      %v391 = vadd.f32 %v352, %v383
      %v392 = vadd.f32 %v353, %v384
      %v393 = vadd.f32 %v354, %v385
      %v394 = vadd.f32 %v355, %v386
      %v395 = vadd.f32 %v356, %v387
      %v396 = vadd.f32 %v357, %v388
      %v397 = vld [vmem:[%s5] sm:$0x1]
      %v399 = vlaneseq
      %v400 = vshrl.u32 %v399, 7
      %v401 = vsub.s32 0, %v400
      %v402 = vrot.slane %v397, %v401
      %v404 = vadd.f32 %v389, %v402
      %v405 = vadd.f32 %v390, %v402
      %v406 = vadd.f32 %v391, %v402
      %v407 = vadd.f32 %v392, %v402
      %v408 = vadd.f32 %v393, %v402
      %v409 = vadd.f32 %v394, %v402
      %v410 = vadd.f32 %v395, %v402
      %v411 = vadd.f32 %v396, %v402
      %412 = vst [vmem:[%s311] sm:$0xff] %v404
      %413 = vst [vmem:[%s311 + $0x8] sm:$0xff] %v405
      %414 = vst [vmem:[%s311 + $0x10] sm:$0xff] %v406
      %415 = vst [vmem:[%s311 + $0x18] sm:$0xff] %v407
      %416 = vst [vmem:[%s311 + $0x20] sm:$0xff] %v408
      %417 = vst [vmem:[%s311 + $0x28] sm:$0xff] %v409
      %418 = vst [vmem:[%s311 + $0x30] sm:$0xff] %v410
      %419 = vst [vmem:[%s311 + $0x38] sm:$0xff] %v411
      %v420 = vmax.f32 %v404, 0.0
      %v421 = vmax.f32 %v405, 0.0
      %v422 = vmax.f32 %v406, 0.0
      %v423 = vmax.f32 %v407, 0.0
      %v424 = vmax.f32 %v408, 0.0
      %v425 = vmax.f32 %v409, 0.0
      %v426 = vmax.f32 %v410, 0.0
      %v427 = vmax.f32 %v411, 0.0
      %428 = vst [vmem:[%s306] sm:$0xff] %v420
      %429 = vst [vmem:[%s306 + $0x8] sm:$0xff] %v421
      %430 = vst [vmem:[%s306 + $0x10] sm:$0xff] %v422
      %431 = vst [vmem:[%s306 + $0x18] sm:$0xff] %v423
      %432 = vst [vmem:[%s306 + $0x20] sm:$0xff] %v424
      %433 = vst [vmem:[%s306 + $0x28] sm:$0xff] %v425
      %434 = vst [vmem:[%s306 + $0x30] sm:$0xff] %v426
      %435 = vst [vmem:[%s306 + $0x38] sm:$0xff] %v427
      %p436 = scmp.lt.s32.totalorder %s19, 1
      %s437 = scalar_select %p436, %s19, 1
      %s438 = smul.addr %s437, 8
      %s439 = smul.addr %s438, 8
      %s440 = scalar_lea.vmem %s6, %s439
      %p441 = scmp.lt.s32.totalorder %s19, 1
      %s442 = scalar_select %p441, %s19, 1
      %s443 = smul.addr %s442, 8
      %s444 = smul.addr %s443, 8
      %s445 = scalar_lea.vmem %s7, %s444
      // Predicated region
      $region45: #{basic_block_forward.5} parent=43 // pred_check
        %p446 = pneg %p173
      $region46: #{basic_block_forward.5} parent=43 // pred_check_branch
        %448 = sbr.rel (%p446) target = $region48
      $region47: #{basic_block_forward.5} parent=43 // pred_region
        _
      $region48: #{basic_block_forward.5} parent=43 // pred_fallthru
        _
      // Predicated region
      $region49: #{basic_block_forward.5} parent=43 // pred_check
        %p449 = pneg %p199
      $region50: #{basic_block_forward.5} parent=43 // pred_check_branch
        %451 = sbr.rel (%p449) target = $region52
      $region51: #{basic_block_forward.5} parent=43 // pred_region
        _
      $region52: #{basic_block_forward.5} parent=43 // pred_fallthru
        _
    $region44: #{basic_block_forward.5} parent=5 // pred_fallthru
      _
    %p452 = scmp.le.s32.totalorder 2, %s14
    // Predicated region
    $region53: #{basic_block_forward.5} parent=5 // pred_check
      %p453 = pneg %p452
    $region54: #{basic_block_forward.5} parent=5 // pred_check_branch
      %455 = sbr.rel (%p453) target = $region56
    $region55: #{basic_block_forward.5} parent=5 // pred_region
      %s456 = ssub.s32 %s14, 2
      // Predicated region
      $region57: #{basic_block_forward.5} parent=55 // pred_check
        %p457 = pneg %p179
      $region58: #{basic_block_forward.5} parent=55 // pred_check_branch
        %459 = sbr.rel (%p457) target = $region60
      $region59: #{basic_block_forward.5} parent=55 // pred_region
        %p460 = scmp.lt.s32.totalorder %s20, 1
        %s461 = scalar_select %p460, %s20, 1
        %s462 = smul.addr %s461, 8
        %s463 = smul.addr %s462, 8
        %s464 = scalar_lea.vmem %s6, %s463
      $region60: #{basic_block_forward.5} parent=55 // pred_fallthru
        _
      // Predicated region
      $region61: #{basic_block_forward.5} parent=55 // pred_check
        %p465 = pneg %p205
      $region62: #{basic_block_forward.5} parent=55 // pred_check_branch
        %467 = sbr.rel (%p465) target = $region64
      $region63: #{basic_block_forward.5} parent=55 // pred_region
        %p468 = scmp.lt.s32.totalorder %s20, 1
        %s469 = scalar_select %p468, %s20, 1
        %s470 = smul.addr %s469, 8
        %s471 = smul.addr %s470, 8
        %s472 = scalar_lea.vmem %s7, %s471
      $region64: #{basic_block_forward.5} parent=55 // pred_fallthru
        _
    $region56: #{basic_block_forward.5} parent=5 // pred_fallthru
      _
  $region6: #{basic_block_forward.5} parent=0 // loop_footer
    %s18 = sadd.s32 1, %s14
  $region7: #{basic_block_forward.5} parent=0 // loop_footer_branch
    %13 = sbr.rel target = $region3
  $region8: #{basic_block_forward.5} parent=0 // loop_exit
    _

// kernel: basic_block_forward.3
$region0: #{basic_block_forward.3}
  #allocation0 [shape = 'u32[]', space=smem, size = 0x4, offset = 0x4, fixed_abs, tag = 'smem constant byte address 0x4 - core index']
  #allocation1 [shape = 'u32[144,128]{1,0:T(1,128)}', space=vmem, size = 0x12000, scoped, tag = 'internal scratch']
  #allocation2 [shape = 'f32[64,128]{1,0:T(8,128)}', space=vmem, size = 0x8000, scoped, tag = 'scratch operand']
  %s0 = inlined_call_operand.vmem [shape: bf16[8,9,9,4], index: 0, kind: input, shape index: {}]
  %s1 = inlined_call_operand.vmem [shape: bf16[3,3,4,128], index: 1, kind: input, shape index: {}]
  %s2 = inlined_call_operand.vmem [shape: bf16[4,128], index: 2, kind: input, shape index: {}]
  %s3 = inlined_call_operand.vmem [shape: bf16[2,8,8,128], index: 3, kind: output, shape index: {0}]
  %s4 = inlined_call_operand.vmem [shape: bf16[2,8,8,128], index: 4, kind: output, shape index: {1}]
  %s5 = inlined_call_operand.vmem [shape: f32[2,1,1,128], index: 5, kind: output, shape index: {2}]
  %s6 = inlined_call_operand.vmem [shape: f32[2,1,1,128], index: 6, kind: output, shape index: {3}]
  %s7 = inlined_call_operand.vmem [shape: f32[2,1,1,128], index: 7, kind: output, shape index: {4}]
  %s8 = inlined_call_operand.vmem [shape: f32[2,1,1,128], index: 8, kind: output, shape index: {5}]
  %9 = xla_tuple %s3, %s4, %s5, %s6, %s7, %s8
  %s10 = sld [smem:[#allocation0]]
  $region85: #{basic_block_forward.3} parent=0
    _
  %s12 = ssub.s32 1, %s10
  %s13 = scalar_select 0, %s12, %s10
  loop: start=0, step=1, limit=4
  $region2: #{basic_block_forward.3} parent=0 // loop_pre_header
    _
  $region3: #{basic_block_forward.3} parent=0 // loop_header
    %s15 = sphi 0, %s19
    %p16 = scmp.ge.s32.totalorder %s15, 4
    %s25 = sphi 0, %s27
    %s28 = sphi 0, %s25
    %s29 = sphi 0, %s28
    %s45 = sphi 0, %s29
    %s49 = sphi 0, %s49
    %s51 = sphi 0, %s49
    %s52 = sphi 0, %s51
    %s66 = sphi 0, %s52
    %s70 = sphi 0, %s70
    %s72 = sphi 0, %s70
    %s73 = sphi 0, %s72
    %s87 = sphi 0, %s73
    %s93 = sphi 0, %s95
    %s96 = sphi 0, %s93
    %s97 = sphi 0, %s96
    %s113 = sphi 0, %s97
    %s119 = sphi 0, %s121
    %s122 = sphi 0, %s119
    %s123 = sphi 0, %s122
    %s139 = sphi 0, %s123
    %s145 = sphi 0, %s147
    %s148 = sphi 0, %s145
    %s149 = sphi 0, %s148
    %s165 = sphi 0, %s149
    %s171 = sphi 0, %s173
    %s174 = sphi 0, %s171
    %s175 = sphi 0, %s174
    %s191 = sphi 0, %s175
    %s197 = sphi 0, %s199
    %s200 = sphi 0, %s197
    %s201 = sphi 0, %s200
    %s217 = sphi 0, %s201
    %s223 = sphi 0, %s225
    %s226 = sphi 0, %s223
    %s227 = sphi 0, %s226
    %s243 = sphi 0, %s227
  $region4: #{basic_block_forward.3} parent=0 // loop_header_branch
    %18 = sbr.rel (%p16) target = $region8
  $region5: #{basic_block_forward.3} parent=0 // loop_body
    %s20 = ssub.s32 %s15, 1
    %s21 = ssub.s32 %s15, 2
    %s22 = sadd.s32 %s15, 1
    %s23 = ssub.s32 %s15, %s22
    %p24 = scmp.eq.s32.totalorder %s23, 0
    %s26 = sadd.s32 %s25, 1
    %s27 = scalar_select %p24, %s25, %s26
    %p30 = pneg %p24
    %p31 = scmp.eq.s32.totalorder %s15, 1
    %p32 = por %p30, %p31
    %p33 = scmp.ne.s32.totalorder %s25, %s28
    %p34 = scmp.eq.s32.totalorder %s15, 0
    %p35 = por %p33, %p34
    %p36 = scmp.ne.s32.totalorder %s25, %s28
    %p37 = scmp.eq.s32.totalorder %s20, 1
    %p38 = por %p36, %p37
    %p39 = scmp.ne.s32.totalorder %s28, %s29
    %p40 = scmp.eq.s32.totalorder %s20, 0
    %p41 = por %p39, %p40
    %p42 = scmp.ne.s32.totalorder %s28, %s29
    %p43 = scmp.eq.s32.totalorder %s21, 1
    %p44 = por %p42, %p43
    %p46 = scmp.ne.s32.totalorder %s29, %s45
    %p47 = scmp.eq.s32.totalorder %s21, 0
    %p48 = por %p46, %p47
    %s50 = sadd.s32 %s49, 1
    %p53 = scmp.eq.s32.totalorder %s15, 1
    %p54 = scmp.ne.s32.totalorder %s49, %s51
    %p55 = scmp.eq.s32.totalorder %s15, 0
    %p56 = por %p54, %p55
    %p57 = scmp.ne.s32.totalorder %s49, %s51
    %p58 = scmp.eq.s32.totalorder %s20, 1
    %p59 = por %p57, %p58
    %p60 = scmp.ne.s32.totalorder %s51, %s52
    %p61 = scmp.eq.s32.totalorder %s20, 0
    %p62 = por %p60, %p61
    %p63 = scmp.ne.s32.totalorder %s51, %s52
    %p64 = scmp.eq.s32.totalorder %s21, 1
    %p65 = por %p63, %p64
    %p67 = scmp.ne.s32.totalorder %s52, %s66
    %p68 = scmp.eq.s32.totalorder %s21, 0
    %p69 = por %p67, %p68
    %s71 = sadd.s32 %s70, 1
    %p74 = scmp.eq.s32.totalorder %s15, 1
    %p75 = scmp.ne.s32.totalorder %s70, %s72
    %p76 = scmp.eq.s32.totalorder %s15, 0
    %p77 = por %p75, %p76
    %p78 = scmp.ne.s32.totalorder %s70, %s72
    %p79 = scmp.eq.s32.totalorder %s20, 1
    %p80 = por %p78, %p79
    %p81 = scmp.ne.s32.totalorder %s72, %s73
    %p82 = scmp.eq.s32.totalorder %s20, 0
    %p83 = por %p81, %p82
    %p84 = scmp.ne.s32.totalorder %s72, %s73
    %p85 = scmp.eq.s32.totalorder %s21, 1
    %p86 = por %p84, %p85
    %p88 = scmp.ne.s32.totalorder %s73, %s87
    %p89 = scmp.eq.s32.totalorder %s21, 0
    %p90 = por %p88, %p89
    %s91 = ssub.s32 %s15, %s22
    %p92 = scmp.eq.s32.totalorder %s91, 0
    %s94 = sadd.s32 %s93, 1
    %s95 = scalar_select %p92, %s93, %s94
    %p98 = pneg %p92
    %p99 = scmp.eq.s32.totalorder %s15, 1
    %p100 = por %p98, %p99
    %p101 = scmp.ne.s32.totalorder %s93, %s96
    %p102 = scmp.eq.s32.totalorder %s15, 0
    %p103 = por %p101, %p102
    %p104 = scmp.ne.s32.totalorder %s93, %s96
    %p105 = scmp.eq.s32.totalorder %s20, 1
    %p106 = por %p104, %p105
    %p107 = scmp.ne.s32.totalorder %s96, %s97
    %p108 = scmp.eq.s32.totalorder %s20, 0
    %p109 = por %p107, %p108
    %p110 = scmp.ne.s32.totalorder %s96, %s97
    %p111 = scmp.eq.s32.totalorder %s21, 1
    %p112 = por %p110, %p111
    %p114 = scmp.ne.s32.totalorder %s97, %s113
    %p115 = scmp.eq.s32.totalorder %s21, 0
    %p116 = por %p114, %p115
    %s117 = ssub.s32 %s15, %s22
    %p118 = scmp.eq.s32.totalorder %s117, 0
    %s120 = sadd.s32 %s119, 1
    %s121 = scalar_select %p118, %s119, %s120
    %p124 = pneg %p118
    %p125 = scmp.eq.s32.totalorder %s15, 1
    %p126 = por %p124, %p125
    %p127 = scmp.ne.s32.totalorder %s119, %s122
    %p128 = scmp.eq.s32.totalorder %s15, 0
    %p129 = por %p127, %p128
    %p130 = scmp.ne.s32.totalorder %s119, %s122
    %p131 = scmp.eq.s32.totalorder %s20, 1
    %p132 = por %p130, %p131
    %p133 = scmp.ne.s32.totalorder %s122, %s123
    %p134 = scmp.eq.s32.totalorder %s20, 0
    %p135 = por %p133, %p134
    %p136 = scmp.ne.s32.totalorder %s122, %s123
    %p137 = scmp.eq.s32.totalorder %s21, 1
    %p138 = por %p136, %p137
    %p140 = scmp.ne.s32.totalorder %s123, %s139
    %p141 = scmp.eq.s32.totalorder %s21, 0
    %p142 = por %p140, %p141
    %s143 = ssub.s32 %s15, %s22
    %p144 = scmp.eq.s32.totalorder %s143, 0
    %s146 = sadd.s32 %s145, 1
    %s147 = scalar_select %p144, %s145, %s146
    %p150 = pneg %p144
    %p151 = scmp.eq.s32.totalorder %s15, 1
    %p152 = por %p150, %p151
    %p153 = scmp.ne.s32.totalorder %s145, %s148
    %p154 = scmp.eq.s32.totalorder %s15, 0
    %p155 = por %p153, %p154
    %p156 = scmp.ne.s32.totalorder %s145, %s148
    %p157 = scmp.eq.s32.totalorder %s20, 1
    %p158 = por %p156, %p157
    %p159 = scmp.ne.s32.totalorder %s148, %s149
    %p160 = scmp.eq.s32.totalorder %s20, 0
    %p161 = por %p159, %p160
    %p162 = scmp.ne.s32.totalorder %s148, %s149
    %p163 = scmp.eq.s32.totalorder %s21, 1
    %p164 = por %p162, %p163
    %p166 = scmp.ne.s32.totalorder %s149, %s165
    %p167 = scmp.eq.s32.totalorder %s21, 0
    %p168 = por %p166, %p167
    %s169 = ssub.s32 %s15, %s22
    %p170 = scmp.eq.s32.totalorder %s169, 0
    %s172 = sadd.s32 %s171, 1
    %s173 = scalar_select %p170, %s171, %s172
    %p176 = pneg %p170
    %p177 = scmp.eq.s32.totalorder %s15, 1
    %p178 = por %p176, %p177
    %p179 = scmp.ne.s32.totalorder %s171, %s174
    %p180 = scmp.eq.s32.totalorder %s15, 0
    %p181 = por %p179, %p180
    %p182 = scmp.ne.s32.totalorder %s171, %s174
    %p183 = scmp.eq.s32.totalorder %s20, 1
    %p184 = por %p182, %p183
    %p185 = scmp.ne.s32.totalorder %s174, %s175
    %p186 = scmp.eq.s32.totalorder %s20, 0
    %p187 = por %p185, %p186
    %p188 = scmp.ne.s32.totalorder %s174, %s175
    %p189 = scmp.eq.s32.totalorder %s21, 1
    %p190 = por %p188, %p189
    %p192 = scmp.ne.s32.totalorder %s175, %s191
    %p193 = scmp.eq.s32.totalorder %s21, 0
    %p194 = por %p192, %p193
    %s195 = ssub.s32 %s15, %s22
    %p196 = scmp.eq.s32.totalorder %s195, 0
    %s198 = sadd.s32 %s197, 1
    %s199 = scalar_select %p196, %s197, %s198
    %p202 = pneg %p196
    %p203 = scmp.eq.s32.totalorder %s15, 1
    %p204 = por %p202, %p203
    %p205 = scmp.ne.s32.totalorder %s197, %s200
    %p206 = scmp.eq.s32.totalorder %s15, 0
    %p207 = por %p205, %p206
    %p208 = scmp.ne.s32.totalorder %s197, %s200
    %p209 = scmp.eq.s32.totalorder %s20, 1
    %p210 = por %p208, %p209
    %p211 = scmp.ne.s32.totalorder %s200, %s201
    %p212 = scmp.eq.s32.totalorder %s20, 0
    %p213 = por %p211, %p212
    %p214 = scmp.ne.s32.totalorder %s200, %s201
    %p215 = scmp.eq.s32.totalorder %s21, 1
    %p216 = por %p214, %p215
    %p218 = scmp.ne.s32.totalorder %s201, %s217
    %p219 = scmp.eq.s32.totalorder %s21, 0
    %p220 = por %p218, %p219
    %s221 = ssub.s32 %s15, %s22
    %p222 = scmp.eq.s32.totalorder %s221, 0
    %s224 = sadd.s32 %s223, 1
    %s225 = scalar_select %p222, %s223, %s224
    %p228 = pneg %p222
    %p229 = scmp.eq.s32.totalorder %s15, 1
    %p230 = por %p228, %p229
    %p231 = scmp.ne.s32.totalorder %s223, %s226
    %p232 = scmp.eq.s32.totalorder %s15, 0
    %p233 = por %p231, %p232
    %p234 = scmp.ne.s32.totalorder %s223, %s226
    %p235 = scmp.eq.s32.totalorder %s20, 1
    %p236 = por %p234, %p235
    %p237 = scmp.ne.s32.totalorder %s226, %s227
    %p238 = scmp.eq.s32.totalorder %s20, 0
    %p239 = por %p237, %p238
    %p240 = scmp.ne.s32.totalorder %s226, %s227
    %p241 = scmp.eq.s32.totalorder %s21, 1
    %p242 = por %p240, %p241
    %p244 = scmp.ne.s32.totalorder %s227, %s243
    %p245 = scmp.eq.s32.totalorder %s21, 0
    %p246 = por %p244, %p245
    %p247 = scmp.le.s32.totalorder 1, %s15
    %p248 = scmp.lt.s32.totalorder %s15, 3
    %p249 = pnand %p247, %p248
    %p250 = pneg %p249
    // Predicated region
    $region9: #{basic_block_forward.3} parent=5 // pred_check
      _
    $region10: #{basic_block_forward.3} parent=5 // pred_check_branch
      %252 = sbr.rel (%p249) target = $region12
    $region11: #{basic_block_forward.3} parent=5 // pred_region
      %s253 = ssub.s32 %s15, 1
      // Predicated region
      $region13: #{basic_block_forward.3} parent=11 // pred_check
        %p254 = pneg %p62
      $region14: #{basic_block_forward.3} parent=11 // pred_check_branch
        %256 = sbr.rel (%p254) target = $region16
      $region15: #{basic_block_forward.3} parent=11 // pred_region
        _
      $region16: #{basic_block_forward.3} parent=11 // pred_fallthru
        _
      // Predicated region
      $region17: #{basic_block_forward.3} parent=11 // pred_check
        %p257 = pneg %p83
      $region18: #{basic_block_forward.3} parent=11 // pred_check_branch
        %259 = sbr.rel (%p257) target = $region20
      $region19: #{basic_block_forward.3} parent=11 // pred_region
        _
      $region20: #{basic_block_forward.3} parent=11 // pred_fallthru
        _
    $region12: #{basic_block_forward.3} parent=5 // pred_fallthru
      _
    %p260 = scmp.lt.s32.totalorder %s15, 2
    // Predicated region
    $region21: #{basic_block_forward.3} parent=5 // pred_check
      %p261 = pneg %p260
    $region22: #{basic_block_forward.3} parent=5 // pred_check_branch
      %263 = sbr.rel (%p261) target = $region24
    $region23: #{basic_block_forward.3} parent=5 // pred_region
      // Predicated region
      $region25: #{basic_block_forward.3} parent=23 // pred_check
        %p264 = pneg %p35
      $region26: #{basic_block_forward.3} parent=23 // pred_check_branch
        %266 = sbr.rel (%p264) target = $region28
      $region27: #{basic_block_forward.3} parent=23 // pred_region
        %s267 = smul.u32 4, %s15
        %p268 = scmp.lt.s32.totalorder %s267, 7
        %s269 = scalar_select %p268, %s267, 7
        %s270 = smul.addr %s269, 18
        %s271 = smul.addr %s270, 4
        %s272 = scalar_lea.vmem %s0, %s271
        %s273 = smul.u32 4, %s15
      $region28: #{basic_block_forward.3} parent=23 // pred_fallthru
        _
    $region24: #{basic_block_forward.3} parent=5 // pred_fallthru
      _
    %p274 = scmp.le.s32.totalorder 1, %s15
    %p275 = scmp.lt.s32.totalorder %s15, 3
    %p276 = pnand %p274, %p275
    %p277 = pneg %p276
    // Predicated region
    $region29: #{basic_block_forward.3} parent=5 // pred_check
      _
    $region30: #{basic_block_forward.3} parent=5 // pred_check_branch
      %279 = sbr.rel (%p276) target = $region32
    $region31: #{basic_block_forward.3} parent=5 // pred_region
      %s280 = ssub.s32 %s15, 1
      %s281 = smul.u32 4, %s20
      %p282 = scmp.lt.s32.totalorder %s281, 7
      %s283 = scalar_select %p282, %s281, 7
      %s284 = smul.addr %s283, 18
      %s285 = smul.addr %s284, 4
      %s286 = scalar_lea.vmem %s0, %s285
      %p287 = pneg %p41
      %p288 = pneg %p38
      %p289 = pneg %p62
      %p290 = pneg %p59
      %p291 = pneg %p83
      %p292 = pneg %p80
      %p293 = pneg %p109
      %p294 = pneg %p106
      %p295 = scmp.lt.s32.totalorder %s20, 1
      %s296 = scalar_select %p295, %s20, 1
      %s297 = smul.addr %s296, 8
      %s298 = smul.addr %s297, 4
      %s299 = scalar_lea.vmem %s3, %s298
      %p300 = pneg %p135
      %p301 = pneg %p132
      %p302 = scmp.lt.s32.totalorder %s20, 1
      %s303 = scalar_select %p302, %s20, 1
      %s304 = smul.addr %s303, 8
      %s305 = smul.addr %s304, 4
      %s306 = scalar_lea.vmem %s4, %s305
      %p307 = pneg %p161
      %p308 = pneg %p158
      %p309 = scmp.lt.s32.totalorder %s20, 1
      %s310 = scalar_select %p309, %s20, 1
      %s311 = scalar_lea.vmem %s5, %s310
      %p312 = pneg %p187
      %p313 = pneg %p184
      %p314 = scmp.lt.s32.totalorder %s20, 1
      %s315 = scalar_select %p314, %s20, 1
      %s316 = scalar_lea.vmem %s6, %s315
      %p317 = pneg %p213
      %p318 = pneg %p210
      %p319 = scmp.lt.s32.totalorder %s20, 1
      %s320 = scalar_select %p319, %s20, 1
      %s321 = scalar_lea.vmem %s7, %s320
      %p322 = pneg %p239
      %p323 = pneg %p236
      %p324 = scmp.lt.s32.totalorder %s20, 1
      %s325 = scalar_select %p324, %s20, 1
      %s326 = scalar_lea.vmem %s8, %s325
      %s327 = smul.u32 4, %s20
      %p328 = scmp.lt.s32.totalorder %s327, 7
      %s329 = scalar_select %p328, %s327, 7
      %s330 = smul.addr %s329, 18
      %s331 = smul.addr %s330, 4
      %s332 = scalar_lea.vmem %s0, %s331
      %s333 = smul.u32 4, %s20
      %p334 = scmp.lt.s32.totalorder %s20, 1
      %s335 = scalar_select %p334, %s20, 1
      %s336 = smul.addr %s335, 8
      %s337 = smul.addr %s336, 4
      %s338 = scalar_lea.vmem %s3, %s337
      %p339 = scmp.lt.s32.totalorder %s20, 1
      %s340 = scalar_select %p339, %s20, 1
      %s341 = smul.addr %s340, 8
      %s342 = smul.addr %s341, 4
      %s343 = scalar_lea.vmem %s4, %s342
      %p344 = scmp.lt.s32.totalorder %s20, 1
      %s345 = scalar_select %p344, %s20, 1
      %s346 = scalar_lea.vmem %s5, %s345
      %p347 = scmp.lt.s32.totalorder %s20, 1
      %s348 = scalar_select %p347, %s20, 1
      %s349 = scalar_lea.vmem %s6, %s348
      %p350 = scmp.lt.s32.totalorder %s20, 1
      %s351 = scalar_select %p350, %s20, 1
      %s352 = scalar_lea.vmem %s7, %s351
      %p353 = scmp.lt.s32.totalorder %s20, 1
      %s354 = scalar_select %p353, %s20, 1
      %s355 = scalar_lea.vmem %s8, %s354
      %357 = vst [vmem:[#allocation2] sm:$0xff] 0.0
      %358 = vst [vmem:[#allocation2 + $0x8] sm:$0xff] 0.0
      %359 = vst [vmem:[#allocation2 + $0x10] sm:$0xff] 0.0
      %360 = vst [vmem:[#allocation2 + $0x18] sm:$0xff] 0.0
      %361 = vst [vmem:[#allocation2 + $0x20] sm:$0xff] 0.0
      %362 = vst [vmem:[#allocation2 + $0x28] sm:$0xff] 0.0
      %363 = vst [vmem:[#allocation2 + $0x30] sm:$0xff] 0.0
      %364 = vst [vmem:[#allocation2 + $0x38] sm:$0xff] 0.0
      %v365 = vld [vmem:[%s332] sm:$0xf]
      %v366 = vld [vmem:[%s332 + $0x8] sm:$0xf]
      %v367 = vld [vmem:[%s332 + $0x10] sm:$0xf]
      %v368 = vld [vmem:[%s332 + $0x18] sm:$0xf]
      %v369 = vld [vmem:[%s332 + $0x20] sm:$0xf]
      %v370 = vld [vmem:[%s332 + $0x28] sm:$0xf]
      %v371 = vld [vmem:[%s332 + $0x30] sm:$0xf]
      %v372 = vld [vmem:[%s332 + $0x38] sm:$0xf]
      %v373 = vld [vmem:[#allocation2] sm:$0xff]
      %v374 = vld [vmem:[#allocation2 + $0x8] sm:$0xff]
      %v375 = vld [vmem:[#allocation2 + $0x10] sm:$0xff]
      %v376 = vld [vmem:[#allocation2 + $0x18] sm:$0xff]
      %v377 = vld [vmem:[#allocation2 + $0x20] sm:$0xff]
      %v378 = vld [vmem:[#allocation2 + $0x28] sm:$0xff]
      %v379 = vld [vmem:[#allocation2 + $0x30] sm:$0xff]
      %v380 = vld [vmem:[#allocation2 + $0x38] sm:$0xff]
      %v381 = vld [vmem:[%s1] sm:$0x3]
      %v390 = vunpack.c.l.b16 %v365
      %v391 = vunpack.c.l.b16 %v366
      %v392 = vunpack.c.l.b16 %v367
      %v393 = vunpack.c.l.b16 %v368
      %v394 = vunpack.c.l.b16 %v369
      %v395 = vunpack.c.l.b16 %v370
      %v396 = vunpack.c.l.b16 %v371
      %v397 = vunpack.c.l.b16 %v372
      %v398 = vpack.c.b16 %v391, %v390
      %v399 = vpack.c.b16 %v393, %v392
      %v400 = vpack.c.b16 %v395, %v394
      %v401 = vpack.c.b16 %v397, %v396
      %vm402 = vcmask 31744
      %v404 = vsel %vm402, %v398, 0
      %v407 = vsel %vm402, %v399, 0
      %v410 = vsel %vm402, %v400, 0
      %v413 = vsel %vm402, %v401, 0
      %vm415 = vcmask 1041408
      %v417 = vsel %vm415, %v381, 0
      %419 = vmatprep.subr.bf16.mxu0 0
      %420 = vmatpush1.bf16.msra.mxu0 %v417
      %421 = vmatprep.subr.bf16.mxu0 0
      %422 = vmatpush1.bf16.msra.mxu0 0
      %423 = vmatprep.subr.bf16.mxu0 0
      %424 = vmatpush1.bf16.msra.mxu0 0
      %425 = vmatprep.subr.bf16.mxu0 0
      %426 = vmatpush1.bf16.msra.mxu0 0
      %427 = vmatprep.subr.bf16.mxu0 0
      %428 = vmatpush1.bf16.msra.mxu0 0
      %429 = vmatprep.subr.bf16.mxu0 0
      %430 = vmatpush1.bf16.msra.mxu0 0
      %431 = vmatprep.subr.bf16.mxu0 0
      %432 = vmatpush1.bf16.msra.mxu0 0
      %433 = vmatprep.subr.bf16.mxu0 0
      %434 = vmatpush1.bf16.msra.mxu0 0
      %435 = vmatprep.subr.bf16.mxu0 0
      %436 = vmatpush1.bf16.msra.mxu0 0
      %437 = vmatprep.subr.bf16.mxu0 0
      %438 = vmatpush1.bf16.msra.mxu0 0
      %439 = vmatprep.subr.bf16.mxu0 0
      %440 = vmatpush1.bf16.msra.mxu0 0
      %441 = vmatprep.subr.bf16.mxu0 0
      %442 = vmatpush1.bf16.msra.mxu0 0
      %443 = vmatprep.subr.bf16.mxu0 0
      %444 = vmatpush1.bf16.msra.mxu0 0
      %445 = vmatprep.subr.bf16.mxu0 0
      %446 = vmatpush1.bf16.msra.mxu0 0
      %447 = vmatprep.subr.bf16.mxu0 0
      %448 = vmatpush1.bf16.msra.mxu0 0
      %449 = vmatprep.subr.bf16.mxu0 0
      %450 = vmatpush1.bf16.msra.mxu0 0
      %451 = vmatprep.mubr.bf16.mxu0 0
      %452 = vmatmul.mubr.bf16.gmra.mrb[0].mxu0 %v404
      %v453 = vpop.f32.mrb[0].mxu0
      %v454 = vadd.f32 0.0, %v453
      %v455 = vpop.f32.mrb[0].mxu0
      %v456 = vpop.f32.mrb[0].mxu0
      %v457 = vadd.f32 0.0, %v456
      %v458 = vpop.f32.mrb[0].mxu0
      %459 = vmatprep.mubr.bf16.mxu0 0
      %460 = vmatmul.mubr.bf16.gmra.mrb[0].mxu0 %v407
      %v461 = vpop.f32.mrb[0].mxu0
      %v462 = vadd.f32 0.0, %v461
      %v463 = vpop.f32.mrb[0].mxu0
      %v464 = vpop.f32.mrb[0].mxu0
      %v465 = vadd.f32 0.0, %v464
      %v466 = vpop.f32.mrb[0].mxu0
      %467 = vmatprep.mubr.bf16.mxu0 0
      %468 = vmatmul.mubr.bf16.gmra.mrb[0].mxu0 %v410
      %v469 = vpop.f32.mrb[0].mxu0
      %v470 = vadd.f32 0.0, %v469
      %v471 = vpop.f32.mrb[0].mxu0
      %v472 = vpop.f32.mrb[0].mxu0
      %v473 = vadd.f32 0.0, %v472
      %v474 = vpop.f32.mrb[0].mxu0
      %475 = vmatprep.mubr.bf16.mxu0 0
      %476 = vmatmul.mubr.bf16.gmra.mrb[0].mxu0 %v413
      %v477 = vpop.f32.mrb[0].mxu0
      %v478 = vadd.f32 0.0, %v477
      %v479 = vpop.f32.mrb[0].mxu0
      %v480 = vpop.f32.mrb[0].mxu0
      %v481 = vadd.f32 0.0, %v480
      %v482 = vpop.f32.mrb[0].mxu0
      %483 = vdwg.mxu0
      %v484 = vadd.f32 %v373, %v454
      %v485 = vadd.f32 %v374, %v457
      %v486 = vadd.f32 %v375, %v462
      %v487 = vadd.f32 %v376, %v465
      %v488 = vadd.f32 %v377, %v470
      %v489 = vadd.f32 %v378, %v473
      %v490 = vadd.f32 %v379, %v478
      %v491 = vadd.f32 %v380, %v481
      %492 = vst [vmem:[#allocation2] sm:$0xff] %v484
      %493 = vst [vmem:[#allocation2 + $0x8] sm:$0xff] %v485
      %494 = vst [vmem:[#allocation2 + $0x10] sm:$0xff] %v486
      %495 = vst [vmem:[#allocation2 + $0x18] sm:$0xff] %v487
      %496 = vst [vmem:[#allocation2 + $0x20] sm:$0xff] %v488
      %497 = vst [vmem:[#allocation2 + $0x28] sm:$0xff] %v489
      %498 = vst [vmem:[#allocation2 + $0x30] sm:$0xff] %v490
      %499 = vst [vmem:[#allocation2 + $0x38] sm:$0xff] %v491
      %s500 = scalar_lea.vmem %s332, 72
      %v501 = vld [vmem:[%s500] sm:$0xf]
      %v502 = vld [vmem:[%s500 + $0x8] sm:$0xf]
      %v503 = vld [vmem:[%s500 + $0x10] sm:$0xf]
      %v504 = vld [vmem:[%s500 + $0x18] sm:$0xf]
      %v505 = vld [vmem:[%s500 + $0x20] sm:$0xf]
      %v506 = vld [vmem:[%s500 + $0x28] sm:$0xf]
      %v507 = vld [vmem:[%s500 + $0x30] sm:$0xf]
      %v508 = vld [vmem:[%s500 + $0x38] sm:$0xf]
      %v509 = vld [vmem:[#allocation2] sm:$0xff]
      %v510 = vld [vmem:[#allocation2 + $0x8] sm:$0xff]
      %v511 = vld [vmem:[#allocation2 + $0x10] sm:$0xff]
      %v512 = vld [vmem:[#allocation2 + $0x18] sm:$0xff]
      %v513 = vld [vmem:[#allocation2 + $0x20] sm:$0xff]
      %v514 = vld [vmem:[#allocation2 + $0x28] sm:$0xff]
      %v515 = vld [vmem:[#allocation2 + $0x30] sm:$0xff]
      %v516 = vld [vmem:[#allocation2 + $0x38] sm:$0xff]
      %s517 = scalar_lea.vmem %s1, 2
      %v518 = vld [vmem:[%s517] sm:$0x3]
      %v527 = vunpack.c.l.b16 %v501
      %v528 = vunpack.c.l.b16 %v502
      %v529 = vunpack.c.l.b16 %v503
      %v530 = vunpack.c.l.b16 %v504
      %v531 = vunpack.c.l.b16 %v505
      %v532 = vunpack.c.l.b16 %v506
      %v533 = vunpack.c.l.b16 %v507
      %v534 = vunpack.c.l.b16 %v508
      %v535 = vpack.c.b16 %v528, %v527
      %v536 = vpack.c.b16 %v530, %v529
      %v537 = vpack.c.b16 %v532, %v531
      %v538 = vpack.c.b16 %v534, %v533
      %v540 = vsel %vm402, %v535, 0
      %v543 = vsel %vm402, %v536, 0
      %v546 = vsel %vm402, %v537, 0
      %v549 = vsel %vm402, %v538, 0
      %v552 = vsel %vm415, %v518, 0
      %554 = vmatprep.subr.bf16.mxu0 0
      %555 = vmatpush1.bf16.msra.mxu0 %v552
      %556 = vmatprep.subr.bf16.mxu0 0
      %557 = vmatpush1.bf16.msra.mxu0 0
      %558 = vmatprep.subr.bf16.mxu0 0
      %559 = vmatpush1.bf16.msra.mxu0 0
      %560 = vmatprep.subr.bf16.mxu0 0
      %561 = vmatpush1.bf16.msra.mxu0 0
      %562 = vmatprep.subr.bf16.mxu0 0
      %563 = vmatpush1.bf16.msra.mxu0 0
      %564 = vmatprep.subr.bf16.mxu0 0
      %565 = vmatpush1.bf16.msra.mxu0 0
      %566 = vmatprep.subr.bf16.mxu0 0
      %567 = vmatpush1.bf16.msra.mxu0 0
      %568 = vmatprep.subr.bf16.mxu0 0
      %569 = vmatpush1.bf16.msra.mxu0 0
      %570 = vmatprep.subr.bf16.mxu0 0
      %571 = vmatpush1.bf16.msra.mxu0 0
      %572 = vmatprep.subr.bf16.mxu0 0
      %573 = vmatpush1.bf16.msra.mxu0 0
      %574 = vmatprep.subr.bf16.mxu0 0
      %575 = vmatpush1.bf16.msra.mxu0 0
      %576 = vmatprep.subr.bf16.mxu0 0
      %577 = vmatpush1.bf16.msra.mxu0 0
      %578 = vmatprep.subr.bf16.mxu0 0
      %579 = vmatpush1.bf16.msra.mxu0 0
      %580 = vmatprep.subr.bf16.mxu0 0
      %581 = vmatpush1.bf16.msra.mxu0 0
      %582 = vmatprep.subr.bf16.mxu0 0
      %583 = vmatpush1.bf16.msra.mxu0 0
      %584 = vmatprep.subr.bf16.mxu0 0
      %585 = vmatpush1.bf16.msra.mxu0 0
      %586 = vmatprep.mubr.bf16.mxu0 0
      %587 = vmatmul.mubr.bf16.gmra.mrb[0].mxu0 %v540
      %v588 = vpop.f32.mrb[0].mxu0
      %v589 = vadd.f32 0.0, %v588
      %v590 = vpop.f32.mrb[0].mxu0
      %v591 = vpop.f32.mrb[0].mxu0
      %v592 = vadd.f32 0.0, %v591
      %v593 = vpop.f32.mrb[0].mxu0
      %594 = vmatprep.mubr.bf16.mxu0 0
      %595 = vmatmul.mubr.bf16.gmra.mrb[0].mxu0 %v543
      %v596 = vpop.f32.mrb[0].mxu0
      %v597 = vadd.f32 0.0, %v596
      %v598 = vpop.f32.mrb[0].mxu0
      %v599 = vpop.f32.mrb[0].mxu0
      %v600 = vadd.f32 0.0, %v599
      %v601 = vpop.f32.mrb[0].mxu0
      %602 = vmatprep.mubr.bf16.mxu0 0
      %603 = vmatmul.mubr.bf16.gmra.mrb[0].mxu0 %v546
      %v604 = vpop.f32.mrb[0].mxu0
      %v605 = vadd.f32 0.0, %v604
      %v606 = vpop.f32.mrb[0].mxu0
      %v607 = vpop.f32.mrb[0].mxu0
      %v608 = vadd.f32 0.0, %v607
      %v609 = vpop.f32.mrb[0].mxu0
      %610 = vmatprep.mubr.bf16.mxu0 0
      %611 = vmatmul.mubr.bf16.gmra.mrb[0].mxu0 %v549
      %v612 = vpop.f32.mrb[0].mxu0
      %v613 = vadd.f32 0.0, %v612
      %v614 = vpop.f32.mrb[0].mxu0
      %v615 = vpop.f32.mrb[0].mxu0
      %v616 = vadd.f32 0.0, %v615
      %v617 = vpop.f32.mrb[0].mxu0
      %618 = vdwg.mxu0
      %v619 = vadd.f32 %v509, %v589
      %v620 = vadd.f32 %v510, %v592
      %v621 = vadd.f32 %v511, %v597
      %v622 = vadd.f32 %v512, %v600
      %v623 = vadd.f32 %v513, %v605
      %v624 = vadd.f32 %v514, %v608
      %v625 = vadd.f32 %v515, %v613
      %v626 = vadd.f32 %v516, %v616
      %627 = vst [vmem:[#allocation2] sm:$0xff] %v619
      %628 = vst [vmem:[#allocation2 + $0x8] sm:$0xff] %v620
      %629 = vst [vmem:[#allocation2 + $0x10] sm:$0xff] %v621
      %630 = vst [vmem:[#allocation2 + $0x18] sm:$0xff] %v622
      %631 = vst [vmem:[#allocation2 + $0x20] sm:$0xff] %v623
      %632 = vst [vmem:[#allocation2 + $0x28] sm:$0xff] %v624
      %633 = vst [vmem:[#allocation2 + $0x30] sm:$0xff] %v625
      %634 = vst [vmem:[#allocation2 + $0x38] sm:$0xff] %v626
      %v635 = vld [vmem:[%s332] sm:$0xf]
      %v636 = vld [vmem:[%s332 + $0x4] sm:$0x1]
      %v637 = vld [vmem:[%s332 + $0x8] sm:$0xf]
      %v638 = vld [vmem:[%s332 + $0xc] sm:$0x1]
      %v639 = vld [vmem:[%s332 + $0x10] sm:$0xf]
      %v640 = vld [vmem:[%s332 + $0x14] sm:$0x1]
      %v641 = vld [vmem:[%s332 + $0x18] sm:$0xf]
      %v642 = vld [vmem:[%s332 + $0x1c] sm:$0x1]
      %v643 = vld [vmem:[%s332 + $0x20] sm:$0xf]
      %v644 = vld [vmem:[%s332 + $0x24] sm:$0x1]
      %v645 = vld [vmem:[%s332 + $0x28] sm:$0xf]
      %v646 = vld [vmem:[%s332 + $0x2c] sm:$0x1]
      %v647 = vld [vmem:[%s332 + $0x30] sm:$0xf]
      %v648 = vld [vmem:[%s332 + $0x34] sm:$0x1]
      %v649 = vld [vmem:[%s332 + $0x38] sm:$0xf]
      %v650 = vld [vmem:[%s332 + $0x3c] sm:$0x1]
      %vm651 = vsmask.f32 3328
      %vm652 = vsmask.f32 7440
      %vm653 = vmor %vm651, %vm652
      %v655 = vshrl.u32 %v635, 16
      %v657 = vrot.slane %v655, 4
      %v658 = vshll.u32 %v635, 16
      %v660 = vrot.slane %v658, 5
      %v661 = vor.u32 %v657, %v660
      %v662 = vrot.slane %v661, 4
      %v664 = vshll.u32 %v636, 16
      %v666 = vrot.slane %v664, 5
      %v667 = vsel %vm653, %v662, %v666
      %v669 = vshrl.u32 %v637, 16
      %v671 = vrot.slane %v669, 4
      %v672 = vshll.u32 %v637, 16
      %v674 = vrot.slane %v672, 5
      %v675 = vor.u32 %v671, %v674
      %v676 = vrot.slane %v675, 4
      %v678 = vshll.u32 %v638, 16
      %v680 = vrot.slane %v678, 5
      %v681 = vsel %vm653, %v676, %v680
      %v683 = vshrl.u32 %v639, 16
      %v685 = vrot.slane %v683, 4
      %v686 = vshll.u32 %v639, 16
      %v688 = vrot.slane %v686, 5
      %v689 = vor.u32 %v685, %v688
      %v690 = vrot.slane %v689, 4
      %v692 = vshll.u32 %v640, 16
      %v694 = vrot.slane %v692, 5
      %v695 = vsel %vm653, %v690, %v694
      %v697 = vshrl.u32 %v641, 16
      %v699 = vrot.slane %v697, 4
      %v700 = vshll.u32 %v641, 16
      %v702 = vrot.slane %v700, 5
      %v703 = vor.u32 %v699, %v702
      %v704 = vrot.slane %v703, 4
      %v706 = vshll.u32 %v642, 16
      %v708 = vrot.slane %v706, 5
      %v709 = vsel %vm653, %v704, %v708
      %v711 = vshrl.u32 %v643, 16
      %v713 = vrot.slane %v711, 4
      %v714 = vshll.u32 %v643, 16
      %v716 = vrot.slane %v714, 5
      %v717 = vor.u32 %v713, %v716
      %v718 = vrot.slane %v717, 4
      %v720 = vshll.u32 %v644, 16
      %v722 = vrot.slane %v720, 5
      %v723 = vsel %vm653, %v718, %v722
      %v725 = vshrl.u32 %v645, 16
      %v727 = vrot.slane %v725, 4
      %v728 = vshll.u32 %v645, 16
      %v730 = vrot.slane %v728, 5
      %v731 = vor.u32 %v727, %v730
      %v732 = vrot.slane %v731, 4
      %v734 = vshll.u32 %v646, 16
      %v736 = vrot.slane %v734, 5
      %v737 = vsel %vm653, %v732, %v736
      %v739 = vshrl.u32 %v647, 16
      %v741 = vrot.slane %v739, 4
      %v742 = vshll.u32 %v647, 16
      %v744 = vrot.slane %v742, 5
      %v745 = vor.u32 %v741, %v744
      %v746 = vrot.slane %v745, 4
      %v748 = vshll.u32 %v648, 16
      %v750 = vrot.slane %v748, 5
      %v751 = vsel %vm653, %v746, %v750
      %v753 = vshrl.u32 %v649, 16
      %v755 = vrot.slane %v753, 4
      %v756 = vshll.u32 %v649, 16
      %v758 = vrot.slane %v756, 5
      %v759 = vor.u32 %v755, %v758
      %v760 = vrot.slane %v759, 4
      %v762 = vshll.u32 %v650, 16
      %v764 = vrot.slane %v762, 5
      %v765 = vsel %vm653, %v760, %v764
      %v766 = vld [vmem:[#allocation2] sm:$0xff]
      %v767 = vld [vmem:[#allocation2 + $0x8] sm:$0xff]
      %v768 = vld [vmem:[#allocation2 + $0x10] sm:$0xff]
      %v769 = vld [vmem:[#allocation2 + $0x18] sm:$0xff]
      %v770 = vld [vmem:[#allocation2 + $0x20] sm:$0xff]
      %v771 = vld [vmem:[#allocation2 + $0x28] sm:$0xff]
      %v772 = vld [vmem:[#allocation2 + $0x30] sm:$0xff]
      %v773 = vld [vmem:[#allocation2 + $0x38] sm:$0xff]
      %s774 = scalar_lea.vmem %s1, 4
      %v775 = vld [vmem:[%s774] sm:$0x3]
      %v776 = vunpack.c.l.b16 %v667
      %v777 = vunpack.c.l.b16 %v681
      %v778 = vunpack.c.l.b16 %v695
      %v779 = vunpack.c.l.b16 %v709
      %v780 = vunpack.c.l.b16 %v723
      %v781 = vunpack.c.l.b16 %v737
      %v782 = vunpack.c.l.b16 %v751
      %v783 = vunpack.c.l.b16 %v765
      %v784 = vpack.c.b16 %v777, %v776
      %v785 = vpack.c.b16 %v779, %v778
      %v786 = vpack.c.b16 %v781, %v780
      %v787 = vpack.c.b16 %v783, %v782
      %v789 = vsel %vm402, %v784, 0
      %v792 = vsel %vm402, %v785, 0
      %v795 = vsel %vm402, %v786, 0
      %v798 = vsel %vm402, %v787, 0
      %v801 = vsel %vm415, %v775, 0
      %803 = vmatprep.subr.bf16.mxu0 0
      %804 = vmatpush1.bf16.msra.mxu0 %v801
      %805 = vmatprep.subr.bf16.mxu0 0
      %806 = vmatpush1.bf16.msra.mxu0 0
      %807 = vmatprep.subr.bf16.mxu0 0
      %808 = vmatpush1.bf16.msra.mxu0 0
      %809 = vmatprep.subr.bf16.mxu0 0
      %810 = vmatpush1.bf16.msra.mxu0 0
      %811 = vmatprep.subr.bf16.mxu0 0
      %812 = vmatpush1.bf16.msra.mxu0 0
      %813 = vmatprep.subr.bf16.mxu0 0
      %814 = vmatpush1.bf16.msra.mxu0 0
      %815 = vmatprep.subr.bf16.mxu0 0
      %816 = vmatpush1.bf16.msra.mxu0 0
      %817 = vmatprep.subr.bf16.mxu0 0
      %818 = vmatpush1.bf16.msra.mxu0 0
      %819 = vmatprep.subr.bf16.mxu0 0
      %820 = vmatpush1.bf16.msra.mxu0 0
      %821 = vmatprep.subr.bf16.mxu0 0
      %822 = vmatpush1.bf16.msra.mxu0 0
      %823 = vmatprep.subr.bf16.mxu0 0
      %824 = vmatpush1.bf16.msra.mxu0 0
      %825 = vmatprep.subr.bf16.mxu0 0
      %826 = vmatpush1.bf16.msra.mxu0 0
      %827 = vmatprep.subr.bf16.mxu0 0
      %828 = vmatpush1.bf16.msra.mxu0 0
      %829 = vmatprep.subr.bf16.mxu0 0
      %830 = vmatpush1.bf16.msra.mxu0 0
      %831 = vmatprep.subr.bf16.mxu0 0
      %832 = vmatpush1.bf16.msra.mxu0 0
      %833 = vmatprep.subr.bf16.mxu0 0
      %834 = vmatpush1.bf16.msra.mxu0 0
      %835 = vmatprep.mubr.bf16.mxu0 0
      %836 = vmatmul.mubr.bf16.gmra.mrb[0].mxu0 %v789
      %v837 = vpop.f32.mrb[0].mxu0
      %v838 = vadd.f32 0.0, %v837
      %v839 = vpop.f32.mrb[0].mxu0
      %v840 = vpop.f32.mrb[0].mxu0
      %v841 = vadd.f32 0.0, %v840
      %v842 = vpop.f32.mrb[0].mxu0
      %843 = vmatprep.mubr.bf16.mxu0 0
      %844 = vmatmul.mubr.bf16.gmra.mrb[0].mxu0 %v792
      %v845 = vpop.f32.mrb[0].mxu0
      %v846 = vadd.f32 0.0, %v845
      %v847 = vpop.f32.mrb[0].mxu0
      %v848 = vpop.f32.mrb[0].mxu0
      %v849 = vadd.f32 0.0, %v848
      %v850 = vpop.f32.mrb[0].mxu0
      %851 = vmatprep.mubr.bf16.mxu0 0
      %852 = vmatmul.mubr.bf16.gmra.mrb[0].mxu0 %v795
      %v853 = vpop.f32.mrb[0].mxu0
      %v854 = vadd.f32 0.0, %v853
      %v855 = vpop.f32.mrb[0].mxu0
      %v856 = vpop.f32.mrb[0].mxu0
      %v857 = vadd.f32 0.0, %v856
      %v858 = vpop.f32.mrb[0].mxu0
      %859 = vmatprep.mubr.bf16.mxu0 0
      %860 = vmatmul.mubr.bf16.gmra.mrb[0].mxu0 %v798
      %v861 = vpop.f32.mrb[0].mxu0
      %v862 = vadd.f32 0.0, %v861
      %v863 = vpop.f32.mrb[0].mxu0
      %v864 = vpop.f32.mrb[0].mxu0
      %v865 = vadd.f32 0.0, %v864
      %v866 = vpop.f32.mrb[0].mxu0
      %867 = vdwg.mxu0
      %v868 = vadd.f32 %v766, %v838
      %v869 = vadd.f32 %v767, %v841
      %v870 = vadd.f32 %v768, %v846
      %v871 = vadd.f32 %v769, %v849
      %v872 = vadd.f32 %v770, %v854
      %v873 = vadd.f32 %v771, %v857
      %v874 = vadd.f32 %v772, %v862
      %v875 = vadd.f32 %v773, %v865
      %876 = vst [vmem:[#allocation2] sm:$0xff] %v868
      %877 = vst [vmem:[#allocation2 + $0x8] sm:$0xff] %v869
      %878 = vst [vmem:[#allocation2 + $0x10] sm:$0xff] %v870
      %879 = vst [vmem:[#allocation2 + $0x18] sm:$0xff] %v871
      %880 = vst [vmem:[#allocation2 + $0x20] sm:$0xff] %v872
      %881 = vst [vmem:[#allocation2 + $0x28] sm:$0xff] %v873
      %882 = vst [vmem:[#allocation2 + $0x30] sm:$0xff] %v874
      %883 = vst [vmem:[#allocation2 + $0x38] sm:$0xff] %v875
      %s884 = scalar_lea.vmem %s332, 144
      %v885 = vld [vmem:[%s884] sm:$0xf]
      %v886 = vld [vmem:[%s884 + $0x8] sm:$0xf]
      %v887 = vld [vmem:[%s884 + $0x10] sm:$0xf]
      %v888 = vld [vmem:[%s884 + $0x18] sm:$0xf]
      %v889 = vld [vmem:[%s884 + $0x20] sm:$0xf]
      %v890 = vld [vmem:[%s884 + $0x28] sm:$0xf]
      %v891 = vld [vmem:[%s884 + $0x30] sm:$0xf]
      %v892 = vld [vmem:[%s884 + $0x38] sm:$0xf]
      %v893 = vld [vmem:[#allocation2] sm:$0xff]
      %v894 = vld [vmem:[#allocation2 + $0x8] sm:$0xff]
      %v895 = vld [vmem:[#allocation2 + $0x10] sm:$0xff]
      %v896 = vld [vmem:[#allocation2 + $0x18] sm:$0xff]
      %v897 = vld [vmem:[#allocation2 + $0x20] sm:$0xff]
      %v898 = vld [vmem:[#allocation2 + $0x28] sm:$0xff]
      %v899 = vld [vmem:[#allocation2 + $0x30] sm:$0xff]
      %v900 = vld [vmem:[#allocation2 + $0x38] sm:$0xff]
      %s901 = scalar_lea.vmem %s1, 6
      %v902 = vld [vmem:[%s901] sm:$0x3]
      %v911 = vunpack.c.l.b16 %v885
      %v912 = vunpack.c.l.b16 %v886
      %v913 = vunpack.c.l.b16 %v887
      %v914 = vunpack.c.l.b16 %v888
      %v915 = vunpack.c.l.b16 %v889
      %v916 = vunpack.c.l.b16 %v890
      %v917 = vunpack.c.l.b16 %v891
      %v918 = vunpack.c.l.b16 %v892
      %v919 = vpack.c.b16 %v912, %v911
      %v920 = vpack.c.b16 %v914, %v913
      %v921 = vpack.c.b16 %v916, %v915
      %v922 = vpack.c.b16 %v918, %v917
      %v924 = vsel %vm402, %v919, 0
      %v927 = vsel %vm402, %v920, 0
      %v930 = vsel %vm402, %v921, 0
      %v933 = vsel %vm402, %v922, 0
      %v936 = vsel %vm415, %v902, 0
      %938 = vmatprep.subr.bf16.mxu0 0
      %939 = vmatpush1.bf16.msra.mxu0 %v936
      %940 = vmatprep.subr.bf16.mxu0 0
      %941 = vmatpush1.bf16.msra.mxu0 0
      %942 = vmatprep.subr.bf16.mxu0 0
      %943 = vmatpush1.bf16.msra.mxu0 0
      %944 = vmatprep.subr.bf16.mxu0 0
      %945 = vmatpush1.bf16.msra.mxu0 0
      %946 = vmatprep.subr.bf16.mxu0 0
      %947 = vmatpush1.bf16.msra.mxu0 0
      %948 = vmatprep.subr.bf16.mxu0 0
      %949 = vmatpush1.bf16.msra.mxu0 0
      %950 = vmatprep.subr.bf16.mxu0 0
      %951 = vmatpush1.bf16.msra.mxu0 0
      %952 = vmatprep.subr.bf16.mxu0 0
      %953 = vmatpush1.bf16.msra.mxu0 0
      %954 = vmatprep.subr.bf16.mxu0 0
      %955 = vmatpush1.bf16.msra.mxu0 0
      %956 = vmatprep.subr.bf16.mxu0 0
      %957 = vmatpush1.bf16.msra.mxu0 0
      %958 = vmatprep.subr.bf16.mxu0 0
      %959 = vmatpush1.bf16.msra.mxu0 0
      %960 = vmatprep.subr.bf16.mxu0 0
      %961 = vmatpush1.bf16.msra.mxu0 0
      %962 = vmatprep.subr.bf16.mxu0 0
      %963 = vmatpush1.bf16.msra.mxu0 0
      %964 = vmatprep.subr.bf16.mxu0 0
      %965 = vmatpush1.bf16.msra.mxu0 0
      %966 = vmatprep.subr.bf16.mxu0 0
      %967 = vmatpush1.bf16.msra.mxu0 0
      %968 = vmatprep.subr.bf16.mxu0 0
      %969 = vmatpush1.bf16.msra.mxu0 0
      %970 = vmatprep.mubr.bf16.mxu0 0
      %971 = vmatmul.mubr.bf16.gmra.mrb[0].mxu0 %v924
      %v972 = vpop.f32.mrb[0].mxu0
      %v973 = vadd.f32 0.0, %v972
      %v974 = vpop.f32.mrb[0].mxu0
      %v975 = vpop.f32.mrb[0].mxu0
      %v976 = vadd.f32 0.0, %v975
      %v977 = vpop.f32.mrb[0].mxu0
      %978 = vmatprep.mubr.bf16.mxu0 0
      %979 = vmatmul.mubr.bf16.gmra.mrb[0].mxu0 %v927
      %v980 = vpop.f32.mrb[0].mxu0
      %v981 = vadd.f32 0.0, %v980
      %v982 = vpop.f32.mrb[0].mxu0
      %v983 = vpop.f32.mrb[0].mxu0
      %v984 = vadd.f32 0.0, %v983
      %v985 = vpop.f32.mrb[0].mxu0
      %986 = vmatprep.mubr.bf16.mxu0 0
      %987 = vmatmul.mubr.bf16.gmra.mrb[0].mxu0 %v930
      %v988 = vpop.f32.mrb[0].mxu0
      %v989 = vadd.f32 0.0, %v988
      %v990 = vpop.f32.mrb[0].mxu0
      %v991 = vpop.f32.mrb[0].mxu0
      %v992 = vadd.f32 0.0, %v991
      %v993 = vpop.f32.mrb[0].mxu0
      %994 = vmatprep.mubr.bf16.mxu0 0
      %995 = vmatmul.mubr.bf16.gmra.mrb[0].mxu0 %v933
      %v996 = vpop.f32.mrb[0].mxu0
      %v997 = vadd.f32 0.0, %v996
      %v998 = vpop.f32.mrb[0].mxu0
      %v999 = vpop.f32.mrb[0].mxu0
      %v1000 = vadd.f32 0.0, %v999
      %v1001 = vpop.f32.mrb[0].mxu0
      %1002 = vdwg.mxu0
      %v1003 = vadd.f32 %v893, %v973
      %v1004 = vadd.f32 %v894, %v976
      %v1005 = vadd.f32 %v895, %v981
      %v1006 = vadd.f32 %v896, %v984
      %v1007 = vadd.f32 %v897, %v989
      %v1008 = vadd.f32 %v898, %v992
      %v1009 = vadd.f32 %v899, %v997
      %v1010 = vadd.f32 %v900, %v1000
      %1011 = vst [vmem:[#allocation2] sm:$0xff] %v1003
      %1012 = vst [vmem:[#allocation2 + $0x8] sm:$0xff] %v1004
      %1013 = vst [vmem:[#allocation2 + $0x10] sm:$0xff] %v1005
      %1014 = vst [vmem:[#allocation2 + $0x18] sm:$0xff] %v1006
      %1015 = vst [vmem:[#allocation2 + $0x20] sm:$0xff] %v1007
      %1016 = vst [vmem:[#allocation2 + $0x28] sm:$0xff] %v1008
      %1017 = vst [vmem:[#allocation2 + $0x30] sm:$0xff] %v1009
      %1018 = vst [vmem:[#allocation2 + $0x38] sm:$0xff] %v1010
      %s1019 = scalar_lea.vmem %s332, 216
      %v1020 = vld [vmem:[%s1019] sm:$0xf]
      %v1021 = vld [vmem:[%s1019 + $0x8] sm:$0xf]
      %v1022 = vld [vmem:[%s1019 + $0x10] sm:$0xf]
      %v1023 = vld [vmem:[%s1019 + $0x18] sm:$0xf]
      %v1024 = vld [vmem:[%s1019 + $0x20] sm:$0xf]
      %v1025 = vld [vmem:[%s1019 + $0x28] sm:$0xf]
      %v1026 = vld [vmem:[%s1019 + $0x30] sm:$0xf]
      %v1027 = vld [vmem:[%s1019 + $0x38] sm:$0xf]
      %v1028 = vld [vmem:[#allocation2] sm:$0xff]
      %v1029 = vld [vmem:[#allocation2 + $0x8] sm:$0xff]
      %v1030 = vld [vmem:[#allocation2 + $0x10] sm:$0xff]
      %v1031 = vld [vmem:[#allocation2 + $0x18] sm:$0xff]
      %v1032 = vld [vmem:[#allocation2 + $0x20] sm:$0xff]
      %v1033 = vld [vmem:[#allocation2 + $0x28] sm:$0xff]
      %v1034 = vld [vmem:[#allocation2 + $0x30] sm:$0xff]
      %v1035 = vld [vmem:[#allocation2 + $0x38] sm:$0xff]
      %s1036 = scalar_lea.vmem %s1, 8
      %v1037 = vld [vmem:[%s1036] sm:$0x3]
      %v1046 = vunpack.c.l.b16 %v1020
      %v1047 = vunpack.c.l.b16 %v1021
      %v1048 = vunpack.c.l.b16 %v1022
      %v1049 = vunpack.c.l.b16 %v1023
      %v1050 = vunpack.c.l.b16 %v1024
      %v1051 = vunpack.c.l.b16 %v1025
      %v1052 = vunpack.c.l.b16 %v1026
      %v1053 = vunpack.c.l.b16 %v1027
      %v1054 = vpack.c.b16 %v1047, %v1046
      %v1055 = vpack.c.b16 %v1049, %v1048
      %v1056 = vpack.c.b16 %v1051, %v1050
      %v1057 = vpack.c.b16 %v1053, %v1052
      %v1059 = vsel %vm402, %v1054, 0
      %v1062 = vsel %vm402, %v1055, 0
      %v1065 = vsel %vm402, %v1056, 0
      %v1068 = vsel %vm402, %v1057, 0
      %v1071 = vsel %vm415, %v1037, 0
      %1073 = vmatprep.subr.bf16.mxu0 0
      %1074 = vmatpush1.bf16.msra.mxu0 %v1071
      %1075 = vmatprep.subr.bf16.mxu0 0
      %1076 = vmatpush1.bf16.msra.mxu0 0
      %1077 = vmatprep.subr.bf16.mxu0 0
      %1078 = vmatpush1.bf16.msra.mxu0 0
      %1079 = vmatprep.subr.bf16.mxu0 0
      %1080 = vmatpush1.bf16.msra.mxu0 0
      %1081 = vmatprep.subr.bf16.mxu0 0
      %1082 = vmatpush1.bf16.msra.mxu0 0
      %1083 = vmatprep.subr.bf16.mxu0 0
      %1084 = vmatpush1.bf16.msra.mxu0 0
      %1085 = vmatprep.subr.bf16.mxu0 0
      %1086 = vmatpush1.bf16.msra.mxu0 0
      %1087 = vmatprep.subr.bf16.mxu0 0
      %1088 = vmatpush1.bf16.msra.mxu0 0
      %1089 = vmatprep.subr.bf16.mxu0 0
      %1090 = vmatpush1.bf16.msra.mxu0 0
      %1091 = vmatprep.subr.bf16.mxu0 0
      %1092 = vmatpush1.bf16.msra.mxu0 0
      %1093 = vmatprep.subr.bf16.mxu0 0
      %1094 = vmatpush1.bf16.msra.mxu0 0
      %1095 = vmatprep.subr.bf16.mxu0 0
      %1096 = vmatpush1.bf16.msra.mxu0 0
      %1097 = vmatprep.subr.bf16.mxu0 0
      %1098 = vmatpush1.bf16.msra.mxu0 0
      %1099 = vmatprep.subr.bf16.mxu0 0
      %1100 = vmatpush1.bf16.msra.mxu0 0
      %1101 = vmatprep.subr.bf16.mxu0 0
      %1102 = vmatpush1.bf16.msra.mxu0 0
      %1103 = vmatprep.subr.bf16.mxu0 0
      %1104 = vmatpush1.bf16.msra.mxu0 0
      %1105 = vmatprep.mubr.bf16.mxu0 0
      %1106 = vmatmul.mubr.bf16.gmra.mrb[0].mxu0 %v1059
      %v1107 = vpop.f32.mrb[0].mxu0
      %v1108 = vadd.f32 0.0, %v1107
      %v1109 = vpop.f32.mrb[0].mxu0
      %v1110 = vpop.f32.mrb[0].mxu0
      %v1111 = vadd.f32 0.0, %v1110
      %v1112 = vpop.f32.mrb[0].mxu0
      %1113 = vmatprep.mubr.bf16.mxu0 0
      %1114 = vmatmul.mubr.bf16.gmra.mrb[0].mxu0 %v1062
      %v1115 = vpop.f32.mrb[0].mxu0
      %v1116 = vadd.f32 0.0, %v1115
      %v1117 = vpop.f32.mrb[0].mxu0
      %v1118 = vpop.f32.mrb[0].mxu0
      %v1119 = vadd.f32 0.0, %v1118
      %v1120 = vpop.f32.mrb[0].mxu0
      %1121 = vmatprep.mubr.bf16.mxu0 0
      %1122 = vmatmul.mubr.bf16.gmra.mrb[0].mxu0 %v1065
      %v1123 = vpop.f32.mrb[0].mxu0
      %v1124 = vadd.f32 0.0, %v1123
      %v1125 = vpop.f32.mrb[0].mxu0
      %v1126 = vpop.f32.mrb[0].mxu0
      %v1127 = vadd.f32 0.0, %v1126
      %v1128 = vpop.f32.mrb[0].mxu0
      %1129 = vmatprep.mubr.bf16.mxu0 0
      %1130 = vmatmul.mubr.bf16.gmra.mrb[0].mxu0 %v1068
      %v1131 = vpop.f32.mrb[0].mxu0
      %v1132 = vadd.f32 0.0, %v1131
      %v1133 = vpop.f32.mrb[0].mxu0
      %v1134 = vpop.f32.mrb[0].mxu0
      %v1135 = vadd.f32 0.0, %v1134
      %v1136 = vpop.f32.mrb[0].mxu0
      %1137 = vdwg.mxu0
      %v1138 = vadd.f32 %v1028, %v1108
      %v1139 = vadd.f32 %v1029, %v1111
      %v1140 = vadd.f32 %v1030, %v1116
      %v1141 = vadd.f32 %v1031, %v1119
      %v1142 = vadd.f32 %v1032, %v1124
      %v1143 = vadd.f32 %v1033, %v1127
      %v1144 = vadd.f32 %v1034, %v1132
      %v1145 = vadd.f32 %v1035, %v1135
      %1146 = vst [vmem:[#allocation2] sm:$0xff] %v1138
      %1147 = vst [vmem:[#allocation2 + $0x8] sm:$0xff] %v1139
      %1148 = vst [vmem:[#allocation2 + $0x10] sm:$0xff] %v1140
      %1149 = vst [vmem:[#allocation2 + $0x18] sm:$0xff] %v1141
      %1150 = vst [vmem:[#allocation2 + $0x20] sm:$0xff] %v1142
      %1151 = vst [vmem:[#allocation2 + $0x28] sm:$0xff] %v1143
      %1152 = vst [vmem:[#allocation2 + $0x30] sm:$0xff] %v1144
      %1153 = vst [vmem:[#allocation2 + $0x38] sm:$0xff] %v1145
      %v1154 = vld [vmem:[%s884] sm:$0xf]
      %v1155 = vld [vmem:[%s884 + $0x4] sm:$0x1]
      %v1156 = vld [vmem:[%s884 + $0x8] sm:$0xf]
      %v1157 = vld [vmem:[%s884 + $0xc] sm:$0x1]
      %v1158 = vld [vmem:[%s884 + $0x10] sm:$0xf]
      %v1159 = vld [vmem:[%s884 + $0x14] sm:$0x1]
      %v1160 = vld [vmem:[%s884 + $0x18] sm:$0xf]
      %v1161 = vld [vmem:[%s884 + $0x1c] sm:$0x1]
      %v1162 = vld [vmem:[%s884 + $0x20] sm:$0xf]
      %v1163 = vld [vmem:[%s884 + $0x24] sm:$0x1]
      %v1164 = vld [vmem:[%s884 + $0x28] sm:$0xf]
      %v1165 = vld [vmem:[%s884 + $0x2c] sm:$0x1]
      %v1166 = vld [vmem:[%s884 + $0x30] sm:$0xf]
      %v1167 = vld [vmem:[%s884 + $0x34] sm:$0x1]
      %v1168 = vld [vmem:[%s884 + $0x38] sm:$0xf]
      %v1169 = vld [vmem:[%s884 + $0x3c] sm:$0x1]
      %v1171 = vshrl.u32 %v1154, 16
      %v1173 = vrot.slane %v1171, 4
      %v1174 = vshll.u32 %v1154, 16
      %v1176 = vrot.slane %v1174, 5
      %v1177 = vor.u32 %v1173, %v1176
      %v1178 = vrot.slane %v1177, 4
      %v1180 = vshll.u32 %v1155, 16
      %v1182 = vrot.slane %v1180, 5
      %v1183 = vsel %vm653, %v1178, %v1182
      %v1185 = vshrl.u32 %v1156, 16
      %v1187 = vrot.slane %v1185, 4
      %v1188 = vshll.u32 %v1156, 16
      %v1190 = vrot.slane %v1188, 5
      %v1191 = vor.u32 %v1187, %v1190
      %v1192 = vrot.slane %v1191, 4
      %v1194 = vshll.u32 %v1157, 16
      %v1196 = vrot.slane %v1194, 5
      %v1197 = vsel %vm653, %v1192, %v1196
      %v1199 = vshrl.u32 %v1158, 16
      %v1201 = vrot.slane %v1199, 4
      %v1202 = vshll.u32 %v1158, 16
      %v1204 = vrot.slane %v1202, 5
      %v1205 = vor.u32 %v1201, %v1204
      %v1206 = vrot.slane %v1205, 4
      %v1208 = vshll.u32 %v1159, 16
      %v1210 = vrot.slane %v1208, 5
      %v1211 = vsel %vm653, %v1206, %v1210
      %v1213 = vshrl.u32 %v1160, 16
      %v1215 = vrot.slane %v1213, 4
      %v1216 = vshll.u32 %v1160, 16
      %v1218 = vrot.slane %v1216, 5
      %v1219 = vor.u32 %v1215, %v1218
      %v1220 = vrot.slane %v1219, 4
      %v1222 = vshll.u32 %v1161, 16
      %v1224 = vrot.slane %v1222, 5
      %v1225 = vsel %vm653, %v1220, %v1224
      %v1227 = vshrl.u32 %v1162, 16
      %v1229 = vrot.slane %v1227, 4
      %v1230 = vshll.u32 %v1162, 16
      %v1232 = vrot.slane %v1230, 5
      %v1233 = vor.u32 %v1229, %v1232
      %v1234 = vrot.slane %v1233, 4
      %v1236 = vshll.u32 %v1163, 16
      %v1238 = vrot.slane %v1236, 5
      %v1239 = vsel %vm653, %v1234, %v1238
      %v1241 = vshrl.u32 %v1164, 16
      %v1243 = vrot.slane %v1241, 4
      %v1244 = vshll.u32 %v1164, 16
      %v1246 = vrot.slane %v1244, 5
      %v1247 = vor.u32 %v1243, %v1246
      %v1248 = vrot.slane %v1247, 4
      %v1250 = vshll.u32 %v1165, 16
      %v1252 = vrot.slane %v1250, 5
      %v1253 = vsel %vm653, %v1248, %v1252
      %v1255 = vshrl.u32 %v1166, 16
      %v1257 = vrot.slane %v1255, 4
      %v1258 = vshll.u32 %v1166, 16
      %v1260 = vrot.slane %v1258, 5
      %v1261 = vor.u32 %v1257, %v1260
      %v1262 = vrot.slane %v1261, 4
      %v1264 = vshll.u32 %v1167, 16
      %v1266 = vrot.slane %v1264, 5
      %v1267 = vsel %vm653, %v1262, %v1266
      %v1269 = vshrl.u32 %v1168, 16
      %v1271 = vrot.slane %v1269, 4
      %v1272 = vshll.u32 %v1168, 16
      %v1274 = vrot.slane %v1272, 5
      %v1275 = vor.u32 %v1271, %v1274
      %v1276 = vrot.slane %v1275, 4
      %v1278 = vshll.u32 %v1169, 16
      %v1280 = vrot.slane %v1278, 5
      %v1281 = vsel %vm653, %v1276, %v1280
      %v1282 = vld [vmem:[#allocation2] sm:$0xff]
      %v1283 = vld [vmem:[#allocation2 + $0x8] sm:$0xff]
      %v1284 = vld [vmem:[#allocation2 + $0x10] sm:$0xff]
      %v1285 = vld [vmem:[#allocation2 + $0x18] sm:$0xff]
      %v1286 = vld [vmem:[#allocation2 + $0x20] sm:$0xff]
      %v1287 = vld [vmem:[#allocation2 + $0x28] sm:$0xff]
      %v1288 = vld [vmem:[#allocation2 + $0x30] sm:$0xff]
      %v1289 = vld [vmem:[#allocation2 + $0x38] sm:$0xff]
      %s1290 = scalar_lea.vmem %s1, 10
      %v1291 = vld [vmem:[%s1290] sm:$0x3]
      %v1292 = vunpack.c.l.b16 %v1183
      %v1293 = vunpack.c.l.b16 %v1197
      %v1294 = vunpack.c.l.b16 %v1211
      %v1295 = vunpack.c.l.b16 %v1225
      %v1296 = vunpack.c.l.b16 %v1239
      %v1297 = vunpack.c.l.b16 %v1253
      %v1298 = vunpack.c.l.b16 %v1267
      %v1299 = vunpack.c.l.b16 %v1281
      %v1300 = vpack.c.b16 %v1293, %v1292
      %v1301 = vpack.c.b16 %v1295, %v1294
      %v1302 = vpack.c.b16 %v1297, %v1296
      %v1303 = vpack.c.b16 %v1299, %v1298
      %v1305 = vsel %vm402, %v1300, 0
      %v1308 = vsel %vm402, %v1301, 0
      %v1311 = vsel %vm402, %v1302, 0
      %v1314 = vsel %vm402, %v1303, 0
      %v1317 = vsel %vm415, %v1291, 0
      %1319 = vmatprep.subr.bf16.mxu0 0
      %1320 = vmatpush1.bf16.msra.mxu0 %v1317
      %1321 = vmatprep.subr.bf16.mxu0 0
      %1322 = vmatpush1.bf16.msra.mxu0 0
      %1323 = vmatprep.subr.bf16.mxu0 0
      %1324 = vmatpush1.bf16.msra.mxu0 0
      %1325 = vmatprep.subr.bf16.mxu0 0
      %1326 = vmatpush1.bf16.msra.mxu0 0
      %1327 = vmatprep.subr.bf16.mxu0 0
      %1328 = vmatpush1.bf16.msra.mxu0 0
      %1329 = vmatprep.subr.bf16.mxu0 0
      %1330 = vmatpush1.bf16.msra.mxu0 0
      %1331 = vmatprep.subr.bf16.mxu0 0
      %1332 = vmatpush1.bf16.msra.mxu0 0
      %1333 = vmatprep.subr.bf16.mxu0 0
      %1334 = vmatpush1.bf16.msra.mxu0 0
      %1335 = vmatprep.subr.bf16.mxu0 0
      %1336 = vmatpush1.bf16.msra.mxu0 0
      %1337 = vmatprep.subr.bf16.mxu0 0
      %1338 = vmatpush1.bf16.msra.mxu0 0
      %1339 = vmatprep.subr.bf16.mxu0 0
      %1340 = vmatpush1.bf16.msra.mxu0 0
      %1341 = vmatprep.subr.bf16.mxu0 0
      %1342 = vmatpush1.bf16.msra.mxu0 0
      %1343 = vmatprep.subr.bf16.mxu0 0
      %1344 = vmatpush1.bf16.msra.mxu0 0
      %1345 = vmatprep.subr.bf16.mxu0 0
      %1346 = vmatpush1.bf16.msra.mxu0 0
      %1347 = vmatprep.subr.bf16.mxu0 0
      %1348 = vmatpush1.bf16.msra.mxu0 0
      %1349 = vmatprep.subr.bf16.mxu0 0
      %1350 = vmatpush1.bf16.msra.mxu0 0
      %1351 = vmatprep.mubr.bf16.mxu0 0
      %1352 = vmatmul.mubr.bf16.gmra.mrb[0].mxu0 %v1305
      %v1353 = vpop.f32.mrb[0].mxu0
      %v1354 = vadd.f32 0.0, %v1353
      %v1355 = vpop.f32.mrb[0].mxu0
      %v1356 = vpop.f32.mrb[0].mxu0
      %v1357 = vadd.f32 0.0, %v1356
      %v1358 = vpop.f32.mrb[0].mxu0
      %1359 = vmatprep.mubr.bf16.mxu0 0
      %1360 = vmatmul.mubr.bf16.gmra.mrb[0].mxu0 %v1308
      %v1361 = vpop.f32.mrb[0].mxu0
      %v1362 = vadd.f32 0.0, %v1361
      %v1363 = vpop.f32.mrb[0].mxu0
      %v1364 = vpop.f32.mrb[0].mxu0
      %v1365 = vadd.f32 0.0, %v1364
      %v1366 = vpop.f32.mrb[0].mxu0
      %1367 = vmatprep.mubr.bf16.mxu0 0
      %1368 = vmatmul.mubr.bf16.gmra.mrb[0].mxu0 %v1311
      %v1369 = vpop.f32.mrb[0].mxu0
      %v1370 = vadd.f32 0.0, %v1369
      %v1371 = vpop.f32.mrb[0].mxu0
      %v1372 = vpop.f32.mrb[0].mxu0
      %v1373 = vadd.f32 0.0, %v1372
      %v1374 = vpop.f32.mrb[0].mxu0
      %1375 = vmatprep.mubr.bf16.mxu0 0
      %1376 = vmatmul.mubr.bf16.gmra.mrb[0].mxu0 %v1314
      %v1377 = vpop.f32.mrb[0].mxu0
      %v1378 = vadd.f32 0.0, %v1377
      %v1379 = vpop.f32.mrb[0].mxu0
      %v1380 = vpop.f32.mrb[0].mxu0
      %v1381 = vadd.f32 0.0, %v1380
      %v1382 = vpop.f32.mrb[0].mxu0
      %1383 = vdwg.mxu0
      %v1384 = vadd.f32 %v1282, %v1354
      %v1385 = vadd.f32 %v1283, %v1357
      %v1386 = vadd.f32 %v1284, %v1362
      %v1387 = vadd.f32 %v1285, %v1365
      %v1388 = vadd.f32 %v1286, %v1370
      %v1389 = vadd.f32 %v1287, %v1373
      %v1390 = vadd.f32 %v1288, %v1378
      %v1391 = vadd.f32 %v1289, %v1381
      %1392 = vst [vmem:[#allocation2] sm:$0xff] %v1384
      %1393 = vst [vmem:[#allocation2 + $0x8] sm:$0xff] %v1385
      %1394 = vst [vmem:[#allocation2 + $0x10] sm:$0xff] %v1386
      %1395 = vst [vmem:[#allocation2 + $0x18] sm:$0xff] %v1387
      %1396 = vst [vmem:[#allocation2 + $0x20] sm:$0xff] %v1388
      %1397 = vst [vmem:[#allocation2 + $0x28] sm:$0xff] %v1389
      %1398 = vst [vmem:[#allocation2 + $0x30] sm:$0xff] %v1390
      %1399 = vst [vmem:[#allocation2 + $0x38] sm:$0xff] %v1391
      %s1400 = scalar_lea.vmem %s332, 8
      %v1401 = vld [vmem:[%s1400] sm:$0xf]
      %v1402 = vld [vmem:[%s1400 + $0x8] sm:$0xf]
      %v1403 = vld [vmem:[%s1400 + $0x10] sm:$0xf]
      %v1404 = vld [vmem:[%s1400 + $0x18] sm:$0xf]
      %v1405 = vld [vmem:[%s1400 + $0x20] sm:$0xf]
      %v1406 = vld [vmem:[%s1400 + $0x28] sm:$0xf]
      %v1407 = vld [vmem:[%s1400 + $0x30] sm:$0xf]
      %v1408 = vld [vmem:[%s1400 + $0x38] sm:$0xf]
      %v1409 = vld [vmem:[#allocation2] sm:$0xff]
      %v1410 = vld [vmem:[#allocation2 + $0x8] sm:$0xff]
      %v1411 = vld [vmem:[#allocation2 + $0x10] sm:$0xff]
      %v1412 = vld [vmem:[#allocation2 + $0x18] sm:$0xff]
      %v1413 = vld [vmem:[#allocation2 + $0x20] sm:$0xff]
      %v1414 = vld [vmem:[#allocation2 + $0x28] sm:$0xff]
      %v1415 = vld [vmem:[#allocation2 + $0x30] sm:$0xff]
      %v1416 = vld [vmem:[#allocation2 + $0x38] sm:$0xff]
      %s1417 = scalar_lea.vmem %s1, 12
      %v1418 = vld [vmem:[%s1417] sm:$0x3]
      %v1427 = vunpack.c.l.b16 %v1401
      %v1428 = vunpack.c.l.b16 %v1402
      %v1429 = vunpack.c.l.b16 %v1403
      %v1430 = vunpack.c.l.b16 %v1404
      %v1431 = vunpack.c.l.b16 %v1405
      %v1432 = vunpack.c.l.b16 %v1406
      %v1433 = vunpack.c.l.b16 %v1407
      %v1434 = vunpack.c.l.b16 %v1408
      %v1435 = vpack.c.b16 %v1428, %v1427
      %v1436 = vpack.c.b16 %v1430, %v1429
      %v1437 = vpack.c.b16 %v1432, %v1431
      %v1438 = vpack.c.b16 %v1434, %v1433
      %v1440 = vsel %vm402, %v1435, 0
      %v1443 = vsel %vm402, %v1436, 0
      %v1446 = vsel %vm402, %v1437, 0
      %v1449 = vsel %vm402, %v1438, 0
      %v1452 = vsel %vm415, %v1418, 0
      %1454 = vmatprep.subr.bf16.mxu0 0
      %1455 = vmatpush1.bf16.msra.mxu0 %v1452
      %1456 = vmatprep.subr.bf16.mxu0 0
      %1457 = vmatpush1.bf16.msra.mxu0 0
      %1458 = vmatprep.subr.bf16.mxu0 0
      %1459 = vmatpush1.bf16.msra.mxu0 0
      %1460 = vmatprep.subr.bf16.mxu0 0
      %1461 = vmatpush1.bf16.msra.mxu0 0
      %1462 = vmatprep.subr.bf16.mxu0 0
      %1463 = vmatpush1.bf16.msra.mxu0 0
      %1464 = vmatprep.subr.bf16.mxu0 0
      %1465 = vmatpush1.bf16.msra.mxu0 0
      %1466 = vmatprep.subr.bf16.mxu0 0
      %1467 = vmatpush1.bf16.msra.mxu0 0
      %1468 = vmatprep.subr.bf16.mxu0 0
      %1469 = vmatpush1.bf16.msra.mxu0 0
      %1470 = vmatprep.subr.bf16.mxu0 0
      %1471 = vmatpush1.bf16.msra.mxu0 0
      %1472 = vmatprep.subr.bf16.mxu0 0
      %1473 = vmatpush1.bf16.msra.mxu0 0
      %1474 = vmatprep.subr.bf16.mxu0 0
      %1475 = vmatpush1.bf16.msra.mxu0 0
      %1476 = vmatprep.subr.bf16.mxu0 0
      %1477 = vmatpush1.bf16.msra.mxu0 0
      %1478 = vmatprep.subr.bf16.mxu0 0
      %1479 = vmatpush1.bf16.msra.mxu0 0
      %1480 = vmatprep.subr.bf16.mxu0 0
      %1481 = vmatpush1.bf16.msra.mxu0 0
      %1482 = vmatprep.subr.bf16.mxu0 0
      %1483 = vmatpush1.bf16.msra.mxu0 0
      %1484 = vmatprep.subr.bf16.mxu0 0
      %1485 = vmatpush1.bf16.msra.mxu0 0
      %1486 = vmatprep.mubr.bf16.mxu0 0
      %1487 = vmatmul.mubr.bf16.gmra.mrb[0].mxu0 %v1440
      %v1488 = vpop.f32.mrb[0].mxu0
      %v1489 = vadd.f32 0.0, %v1488
      %v1490 = vpop.f32.mrb[0].mxu0
      %v1491 = vpop.f32.mrb[0].mxu0
      %v1492 = vadd.f32 0.0, %v1491
      %v1493 = vpop.f32.mrb[0].mxu0
      %1494 = vmatprep.mubr.bf16.mxu0 0
      %1495 = vmatmul.mubr.bf16.gmra.mrb[0].mxu0 %v1443
      %v1496 = vpop.f32.mrb[0].mxu0
      %v1497 = vadd.f32 0.0, %v1496
      %v1498 = vpop.f32.mrb[0].mxu0
      %v1499 = vpop.f32.mrb[0].mxu0
      %v1500 = vadd.f32 0.0, %v1499
      %v1501 = vpop.f32.mrb[0].mxu0
      %1502 = vmatprep.mubr.bf16.mxu0 0
      %1503 = vmatmul.mubr.bf16.gmra.mrb[0].mxu0 %v1446
      %v1504 = vpop.f32.mrb[0].mxu0
      %v1505 = vadd.f32 0.0, %v1504
      %v1506 = vpop.f32.mrb[0].mxu0
      %v1507 = vpop.f32.mrb[0].mxu0
      %v1508 = vadd.f32 0.0, %v1507
      %v1509 = vpop.f32.mrb[0].mxu0
      %1510 = vmatprep.mubr.bf16.mxu0 0
      %1511 = vmatmul.mubr.bf16.gmra.mrb[0].mxu0 %v1449
      %v1512 = vpop.f32.mrb[0].mxu0
      %v1513 = vadd.f32 0.0, %v1512
      %v1514 = vpop.f32.mrb[0].mxu0
      %v1515 = vpop.f32.mrb[0].mxu0
      %v1516 = vadd.f32 0.0, %v1515
      %v1517 = vpop.f32.mrb[0].mxu0
      %1518 = vdwg.mxu0
      %v1519 = vadd.f32 %v1409, %v1489
      %v1520 = vadd.f32 %v1410, %v1492
      %v1521 = vadd.f32 %v1411, %v1497
      %v1522 = vadd.f32 %v1412, %v1500
      %v1523 = vadd.f32 %v1413, %v1505
      %v1524 = vadd.f32 %v1414, %v1508
      %v1525 = vadd.f32 %v1415, %v1513
      %v1526 = vadd.f32 %v1416, %v1516
      %1527 = vst [vmem:[#allocation2] sm:$0xff] %v1519
      %1528 = vst [vmem:[#allocation2 + $0x8] sm:$0xff] %v1520
      %1529 = vst [vmem:[#allocation2 + $0x10] sm:$0xff] %v1521
      %1530 = vst [vmem:[#allocation2 + $0x18] sm:$0xff] %v1522
      %1531 = vst [vmem:[#allocation2 + $0x20] sm:$0xff] %v1523
      %1532 = vst [vmem:[#allocation2 + $0x28] sm:$0xff] %v1524
      %1533 = vst [vmem:[#allocation2 + $0x30] sm:$0xff] %v1525
      %1534 = vst [vmem:[#allocation2 + $0x38] sm:$0xff] %v1526
      %s1535 = scalar_lea.vmem %s332, 80
      %v1536 = vld [vmem:[%s1535] sm:$0xf]
      %v1537 = vld [vmem:[%s1535 + $0x8] sm:$0xf]
      %v1538 = vld [vmem:[%s1535 + $0x10] sm:$0xf]
      %v1539 = vld [vmem:[%s1535 + $0x18] sm:$0xf]
      %v1540 = vld [vmem:[%s1535 + $0x20] sm:$0xf]
      %v1541 = vld [vmem:[%s1535 + $0x28] sm:$0xf]
      %v1542 = vld [vmem:[%s1535 + $0x30] sm:$0xf]
      %v1543 = vld [vmem:[%s1535 + $0x38] sm:$0xf]
      %v1544 = vld [vmem:[#allocation2] sm:$0xff]
      %v1545 = vld [vmem:[#allocation2 + $0x8] sm:$0xff]
      %v1546 = vld [vmem:[#allocation2 + $0x10] sm:$0xff]
      %v1547 = vld [vmem:[#allocation2 + $0x18] sm:$0xff]
      %v1548 = vld [vmem:[#allocation2 + $0x20] sm:$0xff]
      %v1549 = vld [vmem:[#allocation2 + $0x28] sm:$0xff]
      %v1550 = vld [vmem:[#allocation2 + $0x30] sm:$0xff]
      %v1551 = vld [vmem:[#allocation2 + $0x38] sm:$0xff]
      %s1552 = scalar_lea.vmem %s1, 14
      %v1553 = vld [vmem:[%s1552] sm:$0x3]
      %v1562 = vunpack.c.l.b16 %v1536
      %v1563 = vunpack.c.l.b16 %v1537
      %v1564 = vunpack.c.l.b16 %v1538
      %v1565 = vunpack.c.l.b16 %v1539
      %v1566 = vunpack.c.l.b16 %v1540
      %v1567 = vunpack.c.l.b16 %v1541
      %v1568 = vunpack.c.l.b16 %v1542
      %v1569 = vunpack.c.l.b16 %v1543
      %v1570 = vpack.c.b16 %v1563, %v1562
      %v1571 = vpack.c.b16 %v1565, %v1564
      %v1572 = vpack.c.b16 %v1567, %v1566
      %v1573 = vpack.c.b16 %v1569, %v1568
      %v1575 = vsel %vm402, %v1570, 0
      %v1578 = vsel %vm402, %v1571, 0
      %v1581 = vsel %vm402, %v1572, 0
      %v1584 = vsel %vm402, %v1573, 0
      %v1587 = vsel %vm415, %v1553, 0
      %1589 = vmatprep.subr.bf16.mxu0 0
      %1590 = vmatpush1.bf16.msra.mxu0 %v1587
      %1591 = vmatprep.subr.bf16.mxu0 0
      %1592 = vmatpush1.bf16.msra.mxu0 0
      %1593 = vmatprep.subr.bf16.mxu0 0
      %1594 = vmatpush1.bf16.msra.mxu0 0
      %1595 = vmatprep.subr.bf16.mxu0 0
      %1596 = vmatpush1.bf16.msra.mxu0 0
      %1597 = vmatprep.subr.bf16.mxu0 0
      %1598 = vmatpush1.bf16.msra.mxu0 0
      %1599 = vmatprep.subr.bf16.mxu0 0
      %1600 = vmatpush1.bf16.msra.mxu0 0
      %1601 = vmatprep.subr.bf16.mxu0 0
      %1602 = vmatpush1.bf16.msra.mxu0 0
      %1603 = vmatprep.subr.bf16.mxu0 0
      %1604 = vmatpush1.bf16.msra.mxu0 0
      %1605 = vmatprep.subr.bf16.mxu0 0
      %1606 = vmatpush1.bf16.msra.mxu0 0
      %1607 = vmatprep.subr.bf16.mxu0 0
      %1608 = vmatpush1.bf16.msra.mxu0 0
      %1609 = vmatprep.subr.bf16.mxu0 0
      %1610 = vmatpush1.bf16.msra.mxu0 0
      %1611 = vmatprep.subr.bf16.mxu0 0
      %1612 = vmatpush1.bf16.msra.mxu0 0
      %1613 = vmatprep.subr.bf16.mxu0 0
      %1614 = vmatpush1.bf16.msra.mxu0 0
      %1615 = vmatprep.subr.bf16.mxu0 0
      %1616 = vmatpush1.bf16.msra.mxu0 0
      %1617 = vmatprep.subr.bf16.mxu0 0
      %1618 = vmatpush1.bf16.msra.mxu0 0
      %1619 = vmatprep.subr.bf16.mxu0 0
      %1620 = vmatpush1.bf16.msra.mxu0 0
      %1621 = vmatprep.mubr.bf16.mxu0 0
      %1622 = vmatmul.mubr.bf16.gmra.mrb[0].mxu0 %v1575
      %v1623 = vpop.f32.mrb[0].mxu0
      %v1624 = vadd.f32 0.0, %v1623
      %v1625 = vpop.f32.mrb[0].mxu0
      %v1626 = vpop.f32.mrb[0].mxu0
      %v1627 = vadd.f32 0.0, %v1626
      %v1628 = vpop.f32.mrb[0].mxu0
      %1629 = vmatprep.mubr.bf16.mxu0 0
      %1630 = vmatmul.mubr.bf16.gmra.mrb[0].mxu0 %v1578
      %v1631 = vpop.f32.mrb[0].mxu0
      %v1632 = vadd.f32 0.0, %v1631
      %v1633 = vpop.f32.mrb[0].mxu0
      %v1634 = vpop.f32.mrb[0].mxu0
      %v1635 = vadd.f32 0.0, %v1634
      %v1636 = vpop.f32.mrb[0].mxu0
      %1637 = vmatprep.mubr.bf16.mxu0 0
      %1638 = vmatmul.mubr.bf16.gmra.mrb[0].mxu0 %v1581
      %v1639 = vpop.f32.mrb[0].mxu0
      %v1640 = vadd.f32 0.0, %v1639
      %v1641 = vpop.f32.mrb[0].mxu0
      %v1642 = vpop.f32.mrb[0].mxu0
      %v1643 = vadd.f32 0.0, %v1642
      %v1644 = vpop.f32.mrb[0].mxu0
      %1645 = vmatprep.mubr.bf16.mxu0 0
      %1646 = vmatmul.mubr.bf16.gmra.mrb[0].mxu0 %v1584
      %v1647 = vpop.f32.mrb[0].mxu0
      %v1648 = vadd.f32 0.0, %v1647
      %v1649 = vpop.f32.mrb[0].mxu0
      %v1650 = vpop.f32.mrb[0].mxu0
      %v1651 = vadd.f32 0.0, %v1650
      %v1652 = vpop.f32.mrb[0].mxu0
      %1653 = vdwg.mxu0
      %v1654 = vadd.f32 %v1544, %v1624
      %v1655 = vadd.f32 %v1545, %v1627
      %v1656 = vadd.f32 %v1546, %v1632
      %v1657 = vadd.f32 %v1547, %v1635
      %v1658 = vadd.f32 %v1548, %v1640
      %v1659 = vadd.f32 %v1549, %v1643
      %v1660 = vadd.f32 %v1550, %v1648
      %v1661 = vadd.f32 %v1551, %v1651
      %1662 = vst [vmem:[#allocation2] sm:$0xff] %v1654
      %1663 = vst [vmem:[#allocation2 + $0x8] sm:$0xff] %v1655
      %1664 = vst [vmem:[#allocation2 + $0x10] sm:$0xff] %v1656
      %1665 = vst [vmem:[#allocation2 + $0x18] sm:$0xff] %v1657
      %1666 = vst [vmem:[#allocation2 + $0x20] sm:$0xff] %v1658
      %1667 = vst [vmem:[#allocation2 + $0x28] sm:$0xff] %v1659
      %1668 = vst [vmem:[#allocation2 + $0x30] sm:$0xff] %v1660
      %1669 = vst [vmem:[#allocation2 + $0x38] sm:$0xff] %v1661
      %v1670 = vld [vmem:[%s1400] sm:$0xf]
      %v1671 = vld [vmem:[%s1400 + $0x4] sm:$0x1]
      %v1672 = vld [vmem:[%s1400 + $0x8] sm:$0xf]
      %v1673 = vld [vmem:[%s1400 + $0xc] sm:$0x1]
      %v1674 = vld [vmem:[%s1400 + $0x10] sm:$0xf]
      %v1675 = vld [vmem:[%s1400 + $0x14] sm:$0x1]
      %v1676 = vld [vmem:[%s1400 + $0x18] sm:$0xf]
      %v1677 = vld [vmem:[%s1400 + $0x1c] sm:$0x1]
      %v1678 = vld [vmem:[%s1400 + $0x20] sm:$0xf]
      %v1679 = vld [vmem:[%s1400 + $0x24] sm:$0x1]
      %v1680 = vld [vmem:[%s1400 + $0x28] sm:$0xf]
      %v1681 = vld [vmem:[%s1400 + $0x2c] sm:$0x1]
      %v1682 = vld [vmem:[%s1400 + $0x30] sm:$0xf]
      %v1683 = vld [vmem:[%s1400 + $0x34] sm:$0x1]
      %v1684 = vld [vmem:[%s1400 + $0x38] sm:$0xf]
      %v1685 = vld [vmem:[%s1400 + $0x3c] sm:$0x1]
      %v1687 = vshrl.u32 %v1670, 16
      %v1689 = vrot.slane %v1687, 4
      %v1690 = vshll.u32 %v1670, 16
      %v1692 = vrot.slane %v1690, 5
      %v1693 = vor.u32 %v1689, %v1692
      %v1694 = vrot.slane %v1693, 4
      %v1696 = vshll.u32 %v1671, 16
      %v1698 = vrot.slane %v1696, 5
      %v1699 = vsel %vm653, %v1694, %v1698
      %v1701 = vshrl.u32 %v1672, 16
      %v1703 = vrot.slane %v1701, 4
      %v1704 = vshll.u32 %v1672, 16
      %v1706 = vrot.slane %v1704, 5
      %v1707 = vor.u32 %v1703, %v1706
      %v1708 = vrot.slane %v1707, 4
      %v1710 = vshll.u32 %v1673, 16
      %v1712 = vrot.slane %v1710, 5
      %v1713 = vsel %vm653, %v1708, %v1712
      %v1715 = vshrl.u32 %v1674, 16
      %v1717 = vrot.slane %v1715, 4
      %v1718 = vshll.u32 %v1674, 16
      %v1720 = vrot.slane %v1718, 5
      %v1721 = vor.u32 %v1717, %v1720
      %v1722 = vrot.slane %v1721, 4
      %v1724 = vshll.u32 %v1675, 16
      %v1726 = vrot.slane %v1724, 5
      %v1727 = vsel %vm653, %v1722, %v1726
      %v1729 = vshrl.u32 %v1676, 16
      %v1731 = vrot.slane %v1729, 4
      %v1732 = vshll.u32 %v1676, 16
      %v1734 = vrot.slane %v1732, 5
      %v1735 = vor.u32 %v1731, %v1734
      %v1736 = vrot.slane %v1735, 4
      %v1738 = vshll.u32 %v1677, 16
      %v1740 = vrot.slane %v1738, 5
      %v1741 = vsel %vm653, %v1736, %v1740
      %v1743 = vshrl.u32 %v1678, 16
      %v1745 = vrot.slane %v1743, 4
      %v1746 = vshll.u32 %v1678, 16
      %v1748 = vrot.slane %v1746, 5
      %v1749 = vor.u32 %v1745, %v1748
      %v1750 = vrot.slane %v1749, 4
      %v1752 = vshll.u32 %v1679, 16
      %v1754 = vrot.slane %v1752, 5
      %v1755 = vsel %vm653, %v1750, %v1754
      %v1757 = vshrl.u32 %v1680, 16
      %v1759 = vrot.slane %v1757, 4
      %v1760 = vshll.u32 %v1680, 16
      %v1762 = vrot.slane %v1760, 5
      %v1763 = vor.u32 %v1759, %v1762
      %v1764 = vrot.slane %v1763, 4
      %v1766 = vshll.u32 %v1681, 16
      %v1768 = vrot.slane %v1766, 5
      %v1769 = vsel %vm653, %v1764, %v1768
      %v1771 = vshrl.u32 %v1682, 16
      %v1773 = vrot.slane %v1771, 4
      %v1774 = vshll.u32 %v1682, 16
      %v1776 = vrot.slane %v1774, 5
      %v1777 = vor.u32 %v1773, %v1776
      %v1778 = vrot.slane %v1777, 4
      %v1780 = vshll.u32 %v1683, 16
      %v1782 = vrot.slane %v1780, 5
      %v1783 = vsel %vm653, %v1778, %v1782
      %v1785 = vshrl.u32 %v1684, 16
      %v1787 = vrot.slane %v1785, 4
      %v1788 = vshll.u32 %v1684, 16
      %v1790 = vrot.slane %v1788, 5
      %v1791 = vor.u32 %v1787, %v1790
      %v1792 = vrot.slane %v1791, 4
      %v1794 = vshll.u32 %v1685, 16
      %v1796 = vrot.slane %v1794, 5
      %v1797 = vsel %vm653, %v1792, %v1796
      %v1798 = vld [vmem:[#allocation2] sm:$0xff]
      %v1799 = vld [vmem:[#allocation2 + $0x8] sm:$0xff]
      %v1800 = vld [vmem:[#allocation2 + $0x10] sm:$0xff]
      %v1801 = vld [vmem:[#allocation2 + $0x18] sm:$0xff]
      %v1802 = vld [vmem:[#allocation2 + $0x20] sm:$0xff]
      %v1803 = vld [vmem:[#allocation2 + $0x28] sm:$0xff]
      %v1804 = vld [vmem:[#allocation2 + $0x30] sm:$0xff]
      %v1805 = vld [vmem:[#allocation2 + $0x38] sm:$0xff]
      %s1806 = scalar_lea.vmem %s1, 16
      %v1807 = vld [vmem:[%s1806] sm:$0x3]
      %v1808 = vunpack.c.l.b16 %v1699
      %v1809 = vunpack.c.l.b16 %v1713
      %v1810 = vunpack.c.l.b16 %v1727
      %v1811 = vunpack.c.l.b16 %v1741
      %v1812 = vunpack.c.l.b16 %v1755
      %v1813 = vunpack.c.l.b16 %v1769
      %v1814 = vunpack.c.l.b16 %v1783
      %v1815 = vunpack.c.l.b16 %v1797
      %v1816 = vpack.c.b16 %v1809, %v1808
      %v1817 = vpack.c.b16 %v1811, %v1810
      %v1818 = vpack.c.b16 %v1813, %v1812
      %v1819 = vpack.c.b16 %v1815, %v1814
      %v1821 = vsel %vm402, %v1816, 0
      %v1824 = vsel %vm402, %v1817, 0
      %v1827 = vsel %vm402, %v1818, 0
      %v1830 = vsel %vm402, %v1819, 0
      %v1833 = vsel %vm415, %v1807, 0
      %1835 = vmatprep.subr.bf16.mxu0 0
      %1836 = vmatpush1.bf16.msra.mxu0 %v1833
      %1837 = vmatprep.subr.bf16.mxu0 0
      %1838 = vmatpush1.bf16.msra.mxu0 0
      %1839 = vmatprep.subr.bf16.mxu0 0
      %1840 = vmatpush1.bf16.msra.mxu0 0
      %1841 = vmatprep.subr.bf16.mxu0 0
      %1842 = vmatpush1.bf16.msra.mxu0 0
      %1843 = vmatprep.subr.bf16.mxu0 0
      %1844 = vmatpush1.bf16.msra.mxu0 0
      %1845 = vmatprep.subr.bf16.mxu0 0
      %1846 = vmatpush1.bf16.msra.mxu0 0
      %1847 = vmatprep.subr.bf16.mxu0 0
      %1848 = vmatpush1.bf16.msra.mxu0 0
      %1849 = vmatprep.subr.bf16.mxu0 0
      %1850 = vmatpush1.bf16.msra.mxu0 0
      %1851 = vmatprep.subr.bf16.mxu0 0
      %1852 = vmatpush1.bf16.msra.mxu0 0
      %1853 = vmatprep.subr.bf16.mxu0 0
      %1854 = vmatpush1.bf16.msra.mxu0 0
      %1855 = vmatprep.subr.bf16.mxu0 0
      %1856 = vmatpush1.bf16.msra.mxu0 0
      %1857 = vmatprep.subr.bf16.mxu0 0
      %1858 = vmatpush1.bf16.msra.mxu0 0
      %1859 = vmatprep.subr.bf16.mxu0 0
      %1860 = vmatpush1.bf16.msra.mxu0 0
      %1861 = vmatprep.subr.bf16.mxu0 0
      %1862 = vmatpush1.bf16.msra.mxu0 0
      %1863 = vmatprep.subr.bf16.mxu0 0
      %1864 = vmatpush1.bf16.msra.mxu0 0
      %1865 = vmatprep.subr.bf16.mxu0 0
      %1866 = vmatpush1.bf16.msra.mxu0 0
      %1867 = vmatprep.mubr.bf16.mxu0 0
      %1868 = vmatmul.mubr.bf16.gmra.mrb[0].mxu0 %v1821
      %v1869 = vpop.f32.mrb[0].mxu0
      %v1870 = vadd.f32 0.0, %v1869
      %v1871 = vpop.f32.mrb[0].mxu0
      %v1872 = vpop.f32.mrb[0].mxu0
      %v1873 = vadd.f32 0.0, %v1872
      %v1874 = vpop.f32.mrb[0].mxu0
      %1875 = vmatprep.mubr.bf16.mxu0 0
      %1876 = vmatmul.mubr.bf16.gmra.mrb[0].mxu0 %v1824
      %v1877 = vpop.f32.mrb[0].mxu0
      %v1878 = vadd.f32 0.0, %v1877
      %v1879 = vpop.f32.mrb[0].mxu0
      %v1880 = vpop.f32.mrb[0].mxu0
      %v1881 = vadd.f32 0.0, %v1880
      %v1882 = vpop.f32.mrb[0].mxu0
      %1883 = vmatprep.mubr.bf16.mxu0 0
      %1884 = vmatmul.mubr.bf16.gmra.mrb[0].mxu0 %v1827
      %v1885 = vpop.f32.mrb[0].mxu0
      %v1886 = vadd.f32 0.0, %v1885
      %v1887 = vpop.f32.mrb[0].mxu0
      %v1888 = vpop.f32.mrb[0].mxu0
      %v1889 = vadd.f32 0.0, %v1888
      %v1890 = vpop.f32.mrb[0].mxu0
      %1891 = vmatprep.mubr.bf16.mxu0 0
      %1892 = vmatmul.mubr.bf16.gmra.mrb[0].mxu0 %v1830
      %v1893 = vpop.f32.mrb[0].mxu0
      %v1894 = vadd.f32 0.0, %v1893
      %v1895 = vpop.f32.mrb[0].mxu0
      %v1896 = vpop.f32.mrb[0].mxu0
      %v1897 = vadd.f32 0.0, %v1896
      %v1898 = vpop.f32.mrb[0].mxu0
      %1899 = vdwg.mxu0
      %v1900 = vadd.f32 %v1798, %v1870
      %v1901 = vadd.f32 %v1799, %v1873
      %v1902 = vadd.f32 %v1800, %v1878
      %v1903 = vadd.f32 %v1801, %v1881
      %v1904 = vadd.f32 %v1802, %v1886
      %v1905 = vadd.f32 %v1803, %v1889
      %v1906 = vadd.f32 %v1804, %v1894
      %v1907 = vadd.f32 %v1805, %v1897
      %1908 = vst [vmem:[#allocation2] sm:$0xff] %v1900
      %1909 = vst [vmem:[#allocation2 + $0x8] sm:$0xff] %v1901
      %1910 = vst [vmem:[#allocation2 + $0x10] sm:$0xff] %v1902
      %1911 = vst [vmem:[#allocation2 + $0x18] sm:$0xff] %v1903
      %1912 = vst [vmem:[#allocation2 + $0x20] sm:$0xff] %v1904
      %1913 = vst [vmem:[#allocation2 + $0x28] sm:$0xff] %v1905
      %1914 = vst [vmem:[#allocation2 + $0x30] sm:$0xff] %v1906
      %1915 = vst [vmem:[#allocation2 + $0x38] sm:$0xff] %v1907
      %v1916 = vld [vmem:[#allocation2] sm:$0xff]
      %v1917 = vld [vmem:[#allocation2 + $0x8] sm:$0xff]
      %v1918 = vld [vmem:[#allocation2 + $0x10] sm:$0xff]
      %v1919 = vld [vmem:[#allocation2 + $0x18] sm:$0xff]
      %v1920 = vld [vmem:[#allocation2 + $0x20] sm:$0xff]
      %v1921 = vld [vmem:[#allocation2 + $0x28] sm:$0xff]
      %v1922 = vld [vmem:[#allocation2 + $0x30] sm:$0xff]
      %v1923 = vld [vmem:[#allocation2 + $0x38] sm:$0xff]
      %v1924 = vpack.c.bf16 %v1916, %v1916
      %v1925 = vpack.c.bf16 %v1917, %v1917
      %v1926 = vpack.c.bf16 %v1918, %v1918
      %v1927 = vpack.c.bf16 %v1919, %v1919
      %v1928 = vpack.c.bf16 %v1920, %v1920
      %v1929 = vpack.c.bf16 %v1921, %v1921
      %v1930 = vpack.c.bf16 %v1922, %v1922
      %v1931 = vpack.c.bf16 %v1923, %v1923
      %1932 = vst [vmem:[%s338] sm:$0xf] %v1924
      %1933 = vst [vmem:[%s338 + $0x4] sm:$0xf] %v1925
      %1934 = vst [vmem:[%s338 + $0x8] sm:$0xf] %v1926
      %1935 = vst [vmem:[%s338 + $0xc] sm:$0xf] %v1927
      %1936 = vst [vmem:[%s338 + $0x10] sm:$0xf] %v1928
      %1937 = vst [vmem:[%s338 + $0x14] sm:$0xf] %v1929
      %1938 = vst [vmem:[%s338 + $0x18] sm:$0xf] %v1930
      %1939 = vst [vmem:[%s338 + $0x1c] sm:$0xf] %v1931
      %v1940 = vadd.f32 %v1916, %v1917
      %v1941 = vadd.f32 %v1940, %v1918
      %v1942 = vadd.f32 %v1941, %v1919
      %v1943 = vadd.f32 %v1942, %v1920
      %v1944 = vadd.f32 %v1943, %v1921
      %v1945 = vadd.f32 %v1944, %v1922
      %v1946 = vadd.f32 %v1945, %v1923
      %v1947 = vrot.slane %v1946, 4
      %v1948 = vadd.f32 %v1946, %v1947
      %v1949 = vrot.slane %v1948, 2
      %v1950 = vadd.f32 %v1948, %v1949
      %v1951 = vrot.slane %v1950, 1
      %v1952 = vadd.f32 %v1950, %v1951
      %1953 = vst [vmem:[%s346] sm:$0x1] %v1952
      %v1954 = vmul.f32 %v1916, %v1916
      %v1955 = vmul.f32 %v1917, %v1917
      %v1956 = vmul.f32 %v1918, %v1918
      %v1957 = vmul.f32 %v1919, %v1919
      %v1958 = vmul.f32 %v1920, %v1920
      %v1959 = vmul.f32 %v1921, %v1921
      %v1960 = vmul.f32 %v1922, %v1922
      %v1961 = vmul.f32 %v1923, %v1923
      %v1962 = vadd.f32 %v1954, %v1955
      %v1963 = vadd.f32 %v1962, %v1956
      %v1964 = vadd.f32 %v1963, %v1957
      %v1965 = vadd.f32 %v1964, %v1958
      %v1966 = vadd.f32 %v1965, %v1959
      %v1967 = vadd.f32 %v1966, %v1960
      %v1968 = vadd.f32 %v1967, %v1961
      %v1969 = vrot.slane %v1968, 4
      %v1970 = vadd.f32 %v1968, %v1969
      %v1971 = vrot.slane %v1970, 2
      %v1972 = vadd.f32 %v1970, %v1971
      %v1973 = vrot.slane %v1972, 1
      %v1974 = vadd.f32 %v1972, %v1973
      %1975 = vst [vmem:[%s349] sm:$0x1] %v1974
      %v1976 = vld [vmem:[%s2] sm:$0x3]
      %v1978 = vsel %vm415, %v1976, 0
      %1980 = vmatprep.subr.bf16.mxu0 0
      %1981 = vmatpush1.bf16.msra.mxu0 %v1978
      %1982 = vmatprep.subr.bf16.mxu0 0
      %1983 = vmatpush1.bf16.msra.mxu0 0
      %1984 = vmatprep.subr.bf16.mxu0 0
      %1985 = vmatpush1.bf16.msra.mxu0 0
      %1986 = vmatprep.subr.bf16.mxu0 0
      %1987 = vmatpush1.bf16.msra.mxu0 0
      %1988 = vmatprep.subr.bf16.mxu0 0
      %1989 = vmatpush1.bf16.msra.mxu0 0
      %1990 = vmatprep.subr.bf16.mxu0 0
      %1991 = vmatpush1.bf16.msra.mxu0 0
      %1992 = vmatprep.subr.bf16.mxu0 0
      %1993 = vmatpush1.bf16.msra.mxu0 0
      %1994 = vmatprep.subr.bf16.mxu0 0
      %1995 = vmatpush1.bf16.msra.mxu0 0
      %1996 = vmatprep.subr.bf16.mxu0 0
      %1997 = vmatpush1.bf16.msra.mxu0 0
      %1998 = vmatprep.subr.bf16.mxu0 0
      %1999 = vmatpush1.bf16.msra.mxu0 0
      %2000 = vmatprep.subr.bf16.mxu0 0
      %2001 = vmatpush1.bf16.msra.mxu0 0
      %2002 = vmatprep.subr.bf16.mxu0 0
      %2003 = vmatpush1.bf16.msra.mxu0 0
      %2004 = vmatprep.subr.bf16.mxu0 0
      %2005 = vmatpush1.bf16.msra.mxu0 0
      %2006 = vmatprep.subr.bf16.mxu0 0
      %2007 = vmatpush1.bf16.msra.mxu0 0
      %2008 = vmatprep.subr.bf16.mxu0 0
      %2009 = vmatpush1.bf16.msra.mxu0 0
      %2010 = vmatprep.subr.bf16.mxu0 0
      %2011 = vmatpush1.bf16.msra.mxu0 0
      %2012 = vmatprep.mubr.bf16.mxu0 0
      %2013 = vmatmul.mubr.bf16.gmra.mrb[0].mxu0 %v1059
      %v2014 = vpop.f32.mrb[0].mxu0
      %v2015 = vadd.f32 0.0, %v2014
      %v2016 = vpop.f32.mrb[0].mxu0
      %v2017 = vpop.f32.mrb[0].mxu0
      %v2018 = vadd.f32 0.0, %v2017
      %v2019 = vpop.f32.mrb[0].mxu0
      %2020 = vmatprep.mubr.bf16.mxu0 0
      %2021 = vmatmul.mubr.bf16.gmra.mrb[0].mxu0 %v1062
      %v2022 = vpop.f32.mrb[0].mxu0
      %v2023 = vadd.f32 0.0, %v2022
      %v2024 = vpop.f32.mrb[0].mxu0
      %v2025 = vpop.f32.mrb[0].mxu0
      %v2026 = vadd.f32 0.0, %v2025
      %v2027 = vpop.f32.mrb[0].mxu0
      %2028 = vmatprep.mubr.bf16.mxu0 0
      %2029 = vmatmul.mubr.bf16.gmra.mrb[0].mxu0 %v1065
      %v2030 = vpop.f32.mrb[0].mxu0
      %v2031 = vadd.f32 0.0, %v2030
      %v2032 = vpop.f32.mrb[0].mxu0
      %v2033 = vpop.f32.mrb[0].mxu0
      %v2034 = vadd.f32 0.0, %v2033
      %v2035 = vpop.f32.mrb[0].mxu0
      %2036 = vmatprep.mubr.bf16.mxu0 0
      %2037 = vmatmul.mubr.bf16.gmra.mrb[0].mxu0 %v1068
      %v2038 = vpop.f32.mrb[0].mxu0
      %v2039 = vadd.f32 0.0, %v2038
      %v2040 = vpop.f32.mrb[0].mxu0
      %v2041 = vpop.f32.mrb[0].mxu0
      %v2042 = vadd.f32 0.0, %v2041
      %v2043 = vpop.f32.mrb[0].mxu0
      %2044 = vdwg.mxu0
      %v2045 = vpack.c.bf16 %v2015, %v2015
      %v2046 = vpack.c.bf16 %v2018, %v2018
      %v2047 = vpack.c.bf16 %v2023, %v2023
      %v2048 = vpack.c.bf16 %v2026, %v2026
      %v2049 = vpack.c.bf16 %v2031, %v2031
      %v2050 = vpack.c.bf16 %v2034, %v2034
      %v2051 = vpack.c.bf16 %v2039, %v2039
      %v2052 = vpack.c.bf16 %v2042, %v2042
      %2053 = vst [vmem:[%s343] sm:$0xf] %v2045
      %2054 = vst [vmem:[%s343 + $0x4] sm:$0xf] %v2046
      %2055 = vst [vmem:[%s343 + $0x8] sm:$0xf] %v2047
      %2056 = vst [vmem:[%s343 + $0xc] sm:$0xf] %v2048
      %2057 = vst [vmem:[%s343 + $0x10] sm:$0xf] %v2049
      %2058 = vst [vmem:[%s343 + $0x14] sm:$0xf] %v2050
      %2059 = vst [vmem:[%s343 + $0x18] sm:$0xf] %v2051
      %2060 = vst [vmem:[%s343 + $0x1c] sm:$0xf] %v2052
      %v2061 = vadd.f32 %v2015, %v2018
      %v2062 = vadd.f32 %v2061, %v2023
      %v2063 = vadd.f32 %v2062, %v2026
      %v2064 = vadd.f32 %v2063, %v2031
      %v2065 = vadd.f32 %v2064, %v2034
      %v2066 = vadd.f32 %v2065, %v2039
      %v2067 = vadd.f32 %v2066, %v2042
      %v2068 = vrot.slane %v2067, 4
      %v2069 = vadd.f32 %v2067, %v2068
      %v2070 = vrot.slane %v2069, 2
      %v2071 = vadd.f32 %v2069, %v2070
      %v2072 = vrot.slane %v2071, 1
      %v2073 = vadd.f32 %v2071, %v2072
      %2074 = vst [vmem:[%s352] sm:$0x1] %v2073
      %v2075 = vmul.f32 %v2015, %v2015
      %v2076 = vmul.f32 %v2018, %v2018
      %v2077 = vmul.f32 %v2023, %v2023
      %v2078 = vmul.f32 %v2026, %v2026
      %v2079 = vmul.f32 %v2031, %v2031
      %v2080 = vmul.f32 %v2034, %v2034
      %v2081 = vmul.f32 %v2039, %v2039
      %v2082 = vmul.f32 %v2042, %v2042
      %v2083 = vadd.f32 %v2075, %v2076
      %v2084 = vadd.f32 %v2083, %v2077
      %v2085 = vadd.f32 %v2084, %v2078
      %v2086 = vadd.f32 %v2085, %v2079
      %v2087 = vadd.f32 %v2086, %v2080
      %v2088 = vadd.f32 %v2087, %v2081
      %v2089 = vadd.f32 %v2088, %v2082
      %v2090 = vrot.slane %v2089, 4
      %v2091 = vadd.f32 %v2089, %v2090
      %v2092 = vrot.slane %v2091, 2
      %v2093 = vadd.f32 %v2091, %v2092
      %v2094 = vrot.slane %v2093, 1
      %v2095 = vadd.f32 %v2093, %v2094
      %2096 = vst [vmem:[%s355] sm:$0x1] %v2095
      %p2097 = scmp.lt.s32.totalorder %s20, 1
      %s2098 = scalar_select %p2097, %s20, 1
      %s2099 = smul.addr %s2098, 8
      %s2100 = smul.addr %s2099, 4
      %s2101 = scalar_lea.vmem %s3, %s2100
      %p2102 = scmp.lt.s32.totalorder %s20, 1
      %s2103 = scalar_select %p2102, %s20, 1
      %s2104 = smul.addr %s2103, 8
      %s2105 = smul.addr %s2104, 4
      %s2106 = scalar_lea.vmem %s4, %s2105
      %p2107 = scmp.lt.s32.totalorder %s20, 1
      %s2108 = scalar_select %p2107, %s20, 1
      %s2109 = scalar_lea.vmem %s5, %s2108
      %p2110 = scmp.lt.s32.totalorder %s20, 1
      %s2111 = scalar_select %p2110, %s20, 1
      %s2112 = scalar_lea.vmem %s6, %s2111
      %p2113 = scmp.lt.s32.totalorder %s20, 1
      %s2114 = scalar_select %p2113, %s20, 1
      %s2115 = scalar_lea.vmem %s7, %s2114
      %p2116 = scmp.lt.s32.totalorder %s20, 1
      %s2117 = scalar_select %p2116, %s20, 1
      %s2118 = scalar_lea.vmem %s8, %s2117
      // Predicated region
      $region33: #{basic_block_forward.3} parent=31 // pred_check
        %p2119 = pneg %p106
      $region34: #{basic_block_forward.3} parent=31 // pred_check_branch
        %2121 = sbr.rel (%p2119) target = $region36
      $region35: #{basic_block_forward.3} parent=31 // pred_region
        _
      $region36: #{basic_block_forward.3} parent=31 // pred_fallthru
        _
      // Predicated region
      $region37: #{basic_block_forward.3} parent=31 // pred_check
        %p2122 = pneg %p132
      $region38: #{basic_block_forward.3} parent=31 // pred_check_branch
        %2124 = sbr.rel (%p2122) target = $region40
      $region39: #{basic_block_forward.3} parent=31 // pred_region
        _
      $region40: #{basic_block_forward.3} parent=31 // pred_fallthru
        _
      // Predicated region
      $region41: #{basic_block_forward.3} parent=31 // pred_check
        %p2125 = pneg %p158
      $region42: #{basic_block_forward.3} parent=31 // pred_check_branch
        %2127 = sbr.rel (%p2125) target = $region44
      $region43: #{basic_block_forward.3} parent=31 // pred_region
        _
      $region44: #{basic_block_forward.3} parent=31 // pred_fallthru
        _
      // Predicated region
      $region45: #{basic_block_forward.3} parent=31 // pred_check
        %p2128 = pneg %p184
      $region46: #{basic_block_forward.3} parent=31 // pred_check_branch
        %2130 = sbr.rel (%p2128) target = $region48
      $region47: #{basic_block_forward.3} parent=31 // pred_region
        _
      $region48: #{basic_block_forward.3} parent=31 // pred_fallthru
        _
      // Predicated region
      $region49: #{basic_block_forward.3} parent=31 // pred_check
        %p2131 = pneg %p210
      $region50: #{basic_block_forward.3} parent=31 // pred_check_branch
        %2133 = sbr.rel (%p2131) target = $region52
      $region51: #{basic_block_forward.3} parent=31 // pred_region
        _
      $region52: #{basic_block_forward.3} parent=31 // pred_fallthru
        _
      // Predicated region
      $region53: #{basic_block_forward.3} parent=31 // pred_check
        %p2134 = pneg %p236
      $region54: #{basic_block_forward.3} parent=31 // pred_check_branch
        %2136 = sbr.rel (%p2134) target = $region56
      $region55: #{basic_block_forward.3} parent=31 // pred_region
        _
      $region56: #{basic_block_forward.3} parent=31 // pred_fallthru
        _
    $region32: #{basic_block_forward.3} parent=5 // pred_fallthru
      _
    %p2137 = scmp.le.s32.totalorder 2, %s15
    // Predicated region
    $region57: #{basic_block_forward.3} parent=5 // pred_check
      %p2138 = pneg %p2137
    $region58: #{basic_block_forward.3} parent=5 // pred_check_branch
      %2140 = sbr.rel (%p2138) target = $region60
    $region59: #{basic_block_forward.3} parent=5 // pred_region
      %s2141 = ssub.s32 %s15, 2
      // Predicated region
      $region61: #{basic_block_forward.3} parent=59 // pred_check
        %p2142 = pneg %p112
      $region62: #{basic_block_forward.3} parent=59 // pred_check_branch
        %2144 = sbr.rel (%p2142) target = $region64
      $region63: #{basic_block_forward.3} parent=59 // pred_region
        %p2145 = scmp.lt.s32.totalorder %s21, 1
        %s2146 = scalar_select %p2145, %s21, 1
        %s2147 = smul.addr %s2146, 8
        %s2148 = smul.addr %s2147, 4
        %s2149 = scalar_lea.vmem %s3, %s2148
      $region64: #{basic_block_forward.3} parent=59 // pred_fallthru
        _
      // Predicated region
      $region65: #{basic_block_forward.3} parent=59 // pred_check
        %p2150 = pneg %p138
      $region66: #{basic_block_forward.3} parent=59 // pred_check_branch
        %2152 = sbr.rel (%p2150) target = $region68
      $region67: #{basic_block_forward.3} parent=59 // pred_region
        %p2153 = scmp.lt.s32.totalorder %s21, 1
        %s2154 = scalar_select %p2153, %s21, 1
        %s2155 = smul.addr %s2154, 8
        %s2156 = smul.addr %s2155, 4
        %s2157 = scalar_lea.vmem %s4, %s2156
      $region68: #{basic_block_forward.3} parent=59 // pred_fallthru
        _
      // Predicated region
      $region69: #{basic_block_forward.3} parent=59 // pred_check
        %p2158 = pneg %p164
      $region70: #{basic_block_forward.3} parent=59 // pred_check_branch
        %2160 = sbr.rel (%p2158) target = $region72
      $region71: #{basic_block_forward.3} parent=59 // pred_region
        %p2161 = scmp.lt.s32.totalorder %s21, 1
        %s2162 = scalar_select %p2161, %s21, 1
        %s2163 = scalar_lea.vmem %s5, %s2162
      $region72: #{basic_block_forward.3} parent=59 // pred_fallthru
        _
      // Predicated region
      $region73: #{basic_block_forward.3} parent=59 // pred_check
        %p2164 = pneg %p190
      $region74: #{basic_block_forward.3} parent=59 // pred_check_branch
        %2166 = sbr.rel (%p2164) target = $region76
      $region75: #{basic_block_forward.3} parent=59 // pred_region
        %p2167 = scmp.lt.s32.totalorder %s21, 1
        %s2168 = scalar_select %p2167, %s21, 1
        %s2169 = scalar_lea.vmem %s6, %s2168
      $region76: #{basic_block_forward.3} parent=59 // pred_fallthru
        _
      // Predicated region
      $region77: #{basic_block_forward.3} parent=59 // pred_check
        %p2170 = pneg %p216
      $region78: #{basic_block_forward.3} parent=59 // pred_check_branch
        %2172 = sbr.rel (%p2170) target = $region80
      $region79: #{basic_block_forward.3} parent=59 // pred_region
        %p2173 = scmp.lt.s32.totalorder %s21, 1
        %s2174 = scalar_select %p2173, %s21, 1
        %s2175 = scalar_lea.vmem %s7, %s2174
      $region80: #{basic_block_forward.3} parent=59 // pred_fallthru
        _
      // Predicated region
      $region81: #{basic_block_forward.3} parent=59 // pred_check
        %p2176 = pneg %p242
      $region82: #{basic_block_forward.3} parent=59 // pred_check_branch
        %2178 = sbr.rel (%p2176) target = $region84
      $region83: #{basic_block_forward.3} parent=59 // pred_region
        %p2179 = scmp.lt.s32.totalorder %s21, 1
        %s2180 = scalar_select %p2179, %s21, 1
        %s2181 = scalar_lea.vmem %s8, %s2180
      $region84: #{basic_block_forward.3} parent=59 // pred_fallthru
        _
    $region60: #{basic_block_forward.3} parent=5 // pred_fallthru
      _
  $region6: #{basic_block_forward.3} parent=0 // loop_footer
    %s19 = sadd.s32 1, %s15
  $region7: #{basic_block_forward.3} parent=0 // loop_footer_branch
    %14 = sbr.rel target = $region3
  $region8: #{basic_block_forward.3} parent=0 // loop_exit
    _

// kernel: basic_block_forward.4
$region0: #{basic_block_forward.4}
  #allocation0 [shape = 'u32[]', space=smem, size = 0x4, offset = 0x4, fixed_abs, tag = 'smem constant byte address 0x4 - core index']
  #allocation1 [shape = 'u32[144,128]{1,0:T(1,128)}', space=vmem, size = 0x12000, scoped, tag = 'internal scratch']
  #allocation2 [shape = 'f32[64,128]{1,0:T(8,128)}', space=vmem, size = 0x8000, scoped, tag = 'scratch operand']
  %s0 = inlined_call_operand.vmem [shape: bf16[2,10,10,128], index: 0, kind: input, shape index: {}]
  %s1 = inlined_call_operand.vmem [shape: bf16[3,3,128,128], index: 1, kind: input, shape index: {}]
  %s2 = inlined_call_operand.vmem [shape: bf16[2,8,8,128], index: 2, kind: output, shape index: {0}]
  %s3 = inlined_call_operand.vmem [shape: f32[2,1,1,128], index: 3, kind: output, shape index: {1}]
  %s4 = inlined_call_operand.vmem [shape: f32[2,1,1,128], index: 4, kind: output, shape index: {2}]
  %5 = xla_tuple %s2, %s3, %s4
  %s6 = sld [smem:[#allocation0]]
  $region57: #{basic_block_forward.4} parent=0
    _
  %s8 = ssub.s32 1, %s6
  %s9 = scalar_select 0, %s8, %s6
  loop: start=0, step=1, limit=4
  $region2: #{basic_block_forward.4} parent=0 // loop_pre_header
    _
  $region3: #{basic_block_forward.4} parent=0 // loop_header
    %s11 = sphi 0, %s15
    %p12 = scmp.ge.s32.totalorder %s11, 4
    %s21 = sphi 0, %s23
    %s24 = sphi 0, %s21
    %s25 = sphi 0, %s24
    %s41 = sphi 0, %s25
    %s45 = sphi 0, %s45
    %s47 = sphi 0, %s45
    %s48 = sphi 0, %s47
    %s62 = sphi 0, %s48
    %s68 = sphi 0, %s70
    %s71 = sphi 0, %s68
    %s72 = sphi 0, %s71
    %s88 = sphi 0, %s72
    %s94 = sphi 0, %s96
    %s97 = sphi 0, %s94
    %s98 = sphi 0, %s97
    %s114 = sphi 0, %s98
    %s120 = sphi 0, %s122
    %s123 = sphi 0, %s120
    %s124 = sphi 0, %s123
    %s140 = sphi 0, %s124
  $region4: #{basic_block_forward.4} parent=0 // loop_header_branch
    %14 = sbr.rel (%p12) target = $region8
  $region5: #{basic_block_forward.4} parent=0 // loop_body
    %s16 = ssub.s32 %s11, 1
    %s17 = ssub.s32 %s11, 2
    %s18 = sadd.s32 %s11, 1
    %s19 = ssub.s32 %s11, %s18
    %p20 = scmp.eq.s32.totalorder %s19, 0
    %s22 = sadd.s32 %s21, 1
    %s23 = scalar_select %p20, %s21, %s22
    %p26 = pneg %p20
    %p27 = scmp.eq.s32.totalorder %s11, 1
    %p28 = por %p26, %p27
    %p29 = scmp.ne.s32.totalorder %s21, %s24
    %p30 = scmp.eq.s32.totalorder %s11, 0
    %p31 = por %p29, %p30
    %p32 = scmp.ne.s32.totalorder %s21, %s24
    %p33 = scmp.eq.s32.totalorder %s16, 1
    %p34 = por %p32, %p33
    %p35 = scmp.ne.s32.totalorder %s24, %s25
    %p36 = scmp.eq.s32.totalorder %s16, 0
    %p37 = por %p35, %p36
    %p38 = scmp.ne.s32.totalorder %s24, %s25
    %p39 = scmp.eq.s32.totalorder %s17, 1
    %p40 = por %p38, %p39
    %p42 = scmp.ne.s32.totalorder %s25, %s41
    %p43 = scmp.eq.s32.totalorder %s17, 0
    %p44 = por %p42, %p43
    %s46 = sadd.s32 %s45, 1
    %p49 = scmp.eq.s32.totalorder %s11, 1
    %p50 = scmp.ne.s32.totalorder %s45, %s47
    %p51 = scmp.eq.s32.totalorder %s11, 0
    %p52 = por %p50, %p51
    %p53 = scmp.ne.s32.totalorder %s45, %s47
    %p54 = scmp.eq.s32.totalorder %s16, 1
    %p55 = por %p53, %p54
    %p56 = scmp.ne.s32.totalorder %s47, %s48
    %p57 = scmp.eq.s32.totalorder %s16, 0
    %p58 = por %p56, %p57
    %p59 = scmp.ne.s32.totalorder %s47, %s48
    %p60 = scmp.eq.s32.totalorder %s17, 1
    %p61 = por %p59, %p60
    %p63 = scmp.ne.s32.totalorder %s48, %s62
    %p64 = scmp.eq.s32.totalorder %s17, 0
    %p65 = por %p63, %p64
    %s66 = ssub.s32 %s11, %s18
    %p67 = scmp.eq.s32.totalorder %s66, 0
    %s69 = sadd.s32 %s68, 1
    %s70 = scalar_select %p67, %s68, %s69
    %p73 = pneg %p67
    %p74 = scmp.eq.s32.totalorder %s11, 1
    %p75 = por %p73, %p74
    %p76 = scmp.ne.s32.totalorder %s68, %s71
    %p77 = scmp.eq.s32.totalorder %s11, 0
    %p78 = por %p76, %p77
    %p79 = scmp.ne.s32.totalorder %s68, %s71
    %p80 = scmp.eq.s32.totalorder %s16, 1
    %p81 = por %p79, %p80
    %p82 = scmp.ne.s32.totalorder %s71, %s72
    %p83 = scmp.eq.s32.totalorder %s16, 0
    %p84 = por %p82, %p83
    %p85 = scmp.ne.s32.totalorder %s71, %s72
    %p86 = scmp.eq.s32.totalorder %s17, 1
    %p87 = por %p85, %p86
    %p89 = scmp.ne.s32.totalorder %s72, %s88
    %p90 = scmp.eq.s32.totalorder %s17, 0
    %p91 = por %p89, %p90
    %s92 = ssub.s32 %s11, %s18
    %p93 = scmp.eq.s32.totalorder %s92, 0
    %s95 = sadd.s32 %s94, 1
    %s96 = scalar_select %p93, %s94, %s95
    %p99 = pneg %p93
    %p100 = scmp.eq.s32.totalorder %s11, 1
    %p101 = por %p99, %p100
    %p102 = scmp.ne.s32.totalorder %s94, %s97
    %p103 = scmp.eq.s32.totalorder %s11, 0
    %p104 = por %p102, %p103
    %p105 = scmp.ne.s32.totalorder %s94, %s97
    %p106 = scmp.eq.s32.totalorder %s16, 1
    %p107 = por %p105, %p106
    %p108 = scmp.ne.s32.totalorder %s97, %s98
    %p109 = scmp.eq.s32.totalorder %s16, 0
    %p110 = por %p108, %p109
    %p111 = scmp.ne.s32.totalorder %s97, %s98
    %p112 = scmp.eq.s32.totalorder %s17, 1
    %p113 = por %p111, %p112
    %p115 = scmp.ne.s32.totalorder %s98, %s114
    %p116 = scmp.eq.s32.totalorder %s17, 0
    %p117 = por %p115, %p116
    %s118 = ssub.s32 %s11, %s18
    %p119 = scmp.eq.s32.totalorder %s118, 0
    %s121 = sadd.s32 %s120, 1
    %s122 = scalar_select %p119, %s120, %s121
    %p125 = pneg %p119
    %p126 = scmp.eq.s32.totalorder %s11, 1
    %p127 = por %p125, %p126
    %p128 = scmp.ne.s32.totalorder %s120, %s123
    %p129 = scmp.eq.s32.totalorder %s11, 0
    %p130 = por %p128, %p129
    %p131 = scmp.ne.s32.totalorder %s120, %s123
    %p132 = scmp.eq.s32.totalorder %s16, 1
    %p133 = por %p131, %p132
    %p134 = scmp.ne.s32.totalorder %s123, %s124
    %p135 = scmp.eq.s32.totalorder %s16, 0
    %p136 = por %p134, %p135
    %p137 = scmp.ne.s32.totalorder %s123, %s124
    %p138 = scmp.eq.s32.totalorder %s17, 1
    %p139 = por %p137, %p138
    %p141 = scmp.ne.s32.totalorder %s124, %s140
    %p142 = scmp.eq.s32.totalorder %s17, 0
    %p143 = por %p141, %p142
    %p144 = scmp.le.s32.totalorder 1, %s11
    %p145 = scmp.lt.s32.totalorder %s11, 3
    %p146 = pnand %p144, %p145
    %p147 = pneg %p146
    // Predicated region
    $region9: #{basic_block_forward.4} parent=5 // pred_check
      _
    $region10: #{basic_block_forward.4} parent=5 // pred_check_branch
      %149 = sbr.rel (%p146) target = $region12
    $region11: #{basic_block_forward.4} parent=5 // pred_region
      %s150 = ssub.s32 %s11, 1
      // Predicated region
      $region13: #{basic_block_forward.4} parent=11 // pred_check
        %p151 = pneg %p58
      $region14: #{basic_block_forward.4} parent=11 // pred_check_branch
        %153 = sbr.rel (%p151) target = $region16
      $region15: #{basic_block_forward.4} parent=11 // pred_region
        _
      $region16: #{basic_block_forward.4} parent=11 // pred_fallthru
        _
    $region12: #{basic_block_forward.4} parent=5 // pred_fallthru
      _
    %p154 = scmp.lt.s32.totalorder %s11, 2
    // Predicated region
    $region17: #{basic_block_forward.4} parent=5 // pred_check
      %p155 = pneg %p154
    $region18: #{basic_block_forward.4} parent=5 // pred_check_branch
      %157 = sbr.rel (%p155) target = $region20
    $region19: #{basic_block_forward.4} parent=5 // pred_region
      // Predicated region
      $region21: #{basic_block_forward.4} parent=19 // pred_check
        %p158 = pneg %p31
      $region22: #{basic_block_forward.4} parent=19 // pred_check_branch
        %160 = sbr.rel (%p158) target = $region24
      $region23: #{basic_block_forward.4} parent=19 // pred_region
        %p161 = scmp.lt.s32.totalorder %s11, 1
        %s162 = scalar_select %p161, %s11, 1
        %s163 = smul.addr %s162, 20
        %s164 = smul.addr %s163, 4
        %s165 = scalar_lea.vmem %s0, %s164
      $region24: #{basic_block_forward.4} parent=19 // pred_fallthru
        _
    $region20: #{basic_block_forward.4} parent=5 // pred_fallthru
      _
    %p166 = scmp.le.s32.totalorder 1, %s11
    %p167 = scmp.lt.s32.totalorder %s11, 3
    %p168 = pnand %p166, %p167
    %p169 = pneg %p168
    // Predicated region
    $region25: #{basic_block_forward.4} parent=5 // pred_check
      _
    $region26: #{basic_block_forward.4} parent=5 // pred_check_branch
      %171 = sbr.rel (%p168) target = $region28
    $region27: #{basic_block_forward.4} parent=5 // pred_region
      %s172 = ssub.s32 %s11, 1
      %p173 = scmp.lt.s32.totalorder %s16, 1
      %s174 = scalar_select %p173, %s16, 1
      %s175 = smul.addr %s174, 20
      %s176 = smul.addr %s175, 4
      %s177 = scalar_lea.vmem %s0, %s176
      %p178 = pneg %p37
      %p179 = pneg %p34
      %p180 = pneg %p58
      %p181 = pneg %p55
      %p182 = pneg %p84
      %p183 = pneg %p81
      %p184 = scmp.lt.s32.totalorder %s16, 1
      %s185 = scalar_select %p184, %s16, 1
      %s186 = smul.addr %s185, 8
      %s187 = smul.addr %s186, 4
      %s188 = scalar_lea.vmem %s2, %s187
      %p189 = pneg %p110
      %p190 = pneg %p107
      %p191 = scmp.lt.s32.totalorder %s16, 1
      %s192 = scalar_select %p191, %s16, 1
      %s193 = scalar_lea.vmem %s3, %s192
      %p194 = pneg %p136
      %p195 = pneg %p133
      %p196 = scmp.lt.s32.totalorder %s16, 1
      %s197 = scalar_select %p196, %s16, 1
      %s198 = scalar_lea.vmem %s4, %s197
      %p199 = scmp.lt.s32.totalorder %s16, 1
      %s200 = scalar_select %p199, %s16, 1
      %s201 = smul.addr %s200, 20
      %s202 = smul.addr %s201, 4
      %s203 = scalar_lea.vmem %s0, %s202
      %p204 = scmp.lt.s32.totalorder %s16, 1
      %s205 = scalar_select %p204, %s16, 1
      %s206 = smul.addr %s205, 8
      %s207 = smul.addr %s206, 4
      %s208 = scalar_lea.vmem %s2, %s207
      %p209 = scmp.lt.s32.totalorder %s16, 1
      %s210 = scalar_select %p209, %s16, 1
      %s211 = scalar_lea.vmem %s3, %s210
      %p212 = scmp.lt.s32.totalorder %s16, 1
      %s213 = scalar_select %p212, %s16, 1
      %s214 = scalar_lea.vmem %s4, %s213
      %216 = vst [vmem:[#allocation2] sm:$0xff] 0.0
      %217 = vst [vmem:[#allocation2 + $0x8] sm:$0xff] 0.0
      %218 = vst [vmem:[#allocation2 + $0x10] sm:$0xff] 0.0
      %219 = vst [vmem:[#allocation2 + $0x18] sm:$0xff] 0.0
      %220 = vst [vmem:[#allocation2 + $0x20] sm:$0xff] 0.0
      %221 = vst [vmem:[#allocation2 + $0x28] sm:$0xff] 0.0
      %222 = vst [vmem:[#allocation2 + $0x30] sm:$0xff] 0.0
      %223 = vst [vmem:[#allocation2 + $0x38] sm:$0xff] 0.0
      %v224 = vld [vmem:[%s203] sm:$0xf]
      %v225 = vld [vmem:[%s203 + $0x8] sm:$0xf]
      %v226 = vld [vmem:[%s203 + $0x10] sm:$0xf]
      %v227 = vld [vmem:[%s203 + $0x18] sm:$0xf]
      %v228 = vld [vmem:[%s203 + $0x20] sm:$0xf]
      %v229 = vld [vmem:[%s203 + $0x28] sm:$0xf]
      %v230 = vld [vmem:[%s203 + $0x30] sm:$0xf]
      %v231 = vld [vmem:[%s203 + $0x38] sm:$0xf]
      %v232 = vld [vmem:[#allocation2] sm:$0xff]
      %v233 = vld [vmem:[#allocation2 + $0x8] sm:$0xff]
      %v234 = vld [vmem:[#allocation2 + $0x10] sm:$0xff]
      %v235 = vld [vmem:[#allocation2 + $0x18] sm:$0xff]
      %v236 = vld [vmem:[#allocation2 + $0x20] sm:$0xff]
      %v237 = vld [vmem:[#allocation2 + $0x28] sm:$0xff]
      %v238 = vld [vmem:[#allocation2 + $0x30] sm:$0xff]
      %v239 = vld [vmem:[#allocation2 + $0x38] sm:$0xff]
      %v240 = vld [vmem:[%s1] sm:$0xf]
      %v241 = vld [vmem:[%s1 + $0x4] sm:$0xf]
      %v242 = vld [vmem:[%s1 + $0x8] sm:$0xf]
      %v243 = vld [vmem:[%s1 + $0xc] sm:$0xf]
      %v244 = vld [vmem:[%s1 + $0x10] sm:$0xf]
      %v245 = vld [vmem:[%s1 + $0x14] sm:$0xf]
      %v246 = vld [vmem:[%s1 + $0x18] sm:$0xf]
      %v247 = vld [vmem:[%s1 + $0x1c] sm:$0xf]
      %v248 = vld [vmem:[%s1 + $0x20] sm:$0xf]
      %v249 = vld [vmem:[%s1 + $0x24] sm:$0xf]
      %v250 = vld [vmem:[%s1 + $0x28] sm:$0xf]
      %v251 = vld [vmem:[%s1 + $0x2c] sm:$0xf]
      %v252 = vld [vmem:[%s1 + $0x30] sm:$0xf]
      %v253 = vld [vmem:[%s1 + $0x34] sm:$0xf]
      %v254 = vld [vmem:[%s1 + $0x38] sm:$0xf]
      %v255 = vld [vmem:[%s1 + $0x3c] sm:$0xf]
      %v264 = vunpack.c.l.b16 %v224
      %v265 = vunpack.c.l.b16 %v225
      %v266 = vunpack.c.l.b16 %v226
      %v267 = vunpack.c.l.b16 %v227
      %v268 = vunpack.c.l.b16 %v228
      %v269 = vunpack.c.l.b16 %v229
      %v270 = vunpack.c.l.b16 %v230
      %v271 = vunpack.c.l.b16 %v231
      %v272 = vpack.c.b16 %v265, %v264
      %v273 = vpack.c.b16 %v267, %v266
      %v274 = vpack.c.b16 %v269, %v268
      %v275 = vpack.c.b16 %v271, %v270
      %v296 = vunpack.c.l.b16 %v240
      %v297 = vunpack.c.l.b16 %v241
      %v298 = vunpack.c.l.b16 %v242
      %v299 = vunpack.c.l.b16 %v243
      %v300 = vunpack.c.l.b16 %v244
      %v301 = vunpack.c.l.b16 %v245
      %v302 = vunpack.c.l.b16 %v246
      %v303 = vunpack.c.l.b16 %v247
      %v304 = vunpack.c.l.b16 %v248
      %v305 = vunpack.c.l.b16 %v249
      %v306 = vunpack.c.l.b16 %v250
      %v307 = vunpack.c.l.b16 %v251
      %v308 = vunpack.c.l.b16 %v252
      %v309 = vunpack.c.l.b16 %v253
      %v310 = vunpack.c.l.b16 %v254
      %v311 = vunpack.c.l.b16 %v255
      %v312 = vpack.c.b16 %v297, %v296
      %v313 = vpack.c.b16 %v299, %v298
      %v314 = vpack.c.b16 %v301, %v300
      %v315 = vpack.c.b16 %v303, %v302
      %v316 = vpack.c.b16 %v305, %v304
      %v317 = vpack.c.b16 %v307, %v306
      %v318 = vpack.c.b16 %v309, %v308
      %v319 = vpack.c.b16 %v311, %v310
      %328 = vmatprep.subr.bf16.mxu0 0
      %329 = vmatpush1.bf16.msra.mxu0 %v312
      %330 = vmatprep.subr.bf16.mxu0 0
      %331 = vmatpush1.bf16.msra.mxu0 %v313
      %332 = vmatprep.subr.bf16.mxu0 0
      %333 = vmatpush1.bf16.msra.mxu0 %v314
      %334 = vmatprep.subr.bf16.mxu0 0
      %335 = vmatpush1.bf16.msra.mxu0 %v315
      %336 = vmatprep.subr.bf16.mxu0 0
      %337 = vmatpush1.bf16.msra.mxu0 %v316
      %338 = vmatprep.subr.bf16.mxu0 0
      %339 = vmatpush1.bf16.msra.mxu0 %v317
      %340 = vmatprep.subr.bf16.mxu0 0
      %341 = vmatpush1.bf16.msra.mxu0 %v318
      %342 = vmatprep.subr.bf16.mxu0 0
      %343 = vmatpush1.bf16.msra.mxu0 %v319
      %344 = vmatprep.subr.bf16.mxu0 0
      %345 = vmatpush1.bf16.msra.mxu0 0
      %346 = vmatprep.subr.bf16.mxu0 0
      %347 = vmatpush1.bf16.msra.mxu0 0
      %348 = vmatprep.subr.bf16.mxu0 0
      %349 = vmatpush1.bf16.msra.mxu0 0
      %350 = vmatprep.subr.bf16.mxu0 0
      %351 = vmatpush1.bf16.msra.mxu0 0
      %352 = vmatprep.subr.bf16.mxu0 0
      %353 = vmatpush1.bf16.msra.mxu0 0
      %354 = vmatprep.subr.bf16.mxu0 0
      %355 = vmatpush1.bf16.msra.mxu0 0
      %356 = vmatprep.subr.bf16.mxu0 0
      %357 = vmatpush1.bf16.msra.mxu0 0
      %358 = vmatprep.subr.bf16.mxu0 0
      %359 = vmatpush1.bf16.msra.mxu0 0
      %360 = vmatprep.mubr.bf16.mxu0 0
      %361 = vmatmul.mubr.bf16.gmra.mrb[0].mxu0 %v272
      %v362 = vpop.f32.mrb[0].mxu0
      %v363 = vadd.f32 0.0, %v362
      %v364 = vpop.f32.mrb[0].mxu0
      %v365 = vpop.f32.mrb[0].mxu0
      %v366 = vadd.f32 0.0, %v365
      %v367 = vpop.f32.mrb[0].mxu0
      %368 = vmatprep.mubr.bf16.mxu0 0
      %369 = vmatmul.mubr.bf16.gmra.mrb[0].mxu0 %v273
      %v370 = vpop.f32.mrb[0].mxu0
      %v371 = vadd.f32 0.0, %v370
      %v372 = vpop.f32.mrb[0].mxu0
      %v373 = vpop.f32.mrb[0].mxu0
      %v374 = vadd.f32 0.0, %v373
      %v375 = vpop.f32.mrb[0].mxu0
      %376 = vmatprep.mubr.bf16.mxu0 0
      %377 = vmatmul.mubr.bf16.gmra.mrb[0].mxu0 %v274
      %v378 = vpop.f32.mrb[0].mxu0
      %v379 = vadd.f32 0.0, %v378
      %v380 = vpop.f32.mrb[0].mxu0
      %v381 = vpop.f32.mrb[0].mxu0
      %v382 = vadd.f32 0.0, %v381
      %v383 = vpop.f32.mrb[0].mxu0
      %384 = vmatprep.mubr.bf16.mxu0 0
      %385 = vmatmul.mubr.bf16.gmra.mrb[0].mxu0 %v275
      %v386 = vpop.f32.mrb[0].mxu0
      %v387 = vadd.f32 0.0, %v386
      %v388 = vpop.f32.mrb[0].mxu0
      %v389 = vpop.f32.mrb[0].mxu0
      %v390 = vadd.f32 0.0, %v389
      %v391 = vpop.f32.mrb[0].mxu0
      %392 = vdwg.mxu0
      %v393 = vadd.f32 %v232, %v363
      %v394 = vadd.f32 %v233, %v366
      %v395 = vadd.f32 %v234, %v371
      %v396 = vadd.f32 %v235, %v374
      %v397 = vadd.f32 %v236, %v379
      %v398 = vadd.f32 %v237, %v382
      %v399 = vadd.f32 %v238, %v387
      %v400 = vadd.f32 %v239, %v390
      %401 = vst [vmem:[#allocation2] sm:$0xff] %v393
      %402 = vst [vmem:[#allocation2 + $0x8] sm:$0xff] %v394
      %403 = vst [vmem:[#allocation2 + $0x10] sm:$0xff] %v395
      %404 = vst [vmem:[#allocation2 + $0x18] sm:$0xff] %v396
      %405 = vst [vmem:[#allocation2 + $0x20] sm:$0xff] %v397
      %406 = vst [vmem:[#allocation2 + $0x28] sm:$0xff] %v398
      %407 = vst [vmem:[#allocation2 + $0x30] sm:$0xff] %v399
      %408 = vst [vmem:[#allocation2 + $0x38] sm:$0xff] %v400
      %v409 = vld [vmem:[%s203] sm:$0xf]
      %v410 = vld [vmem:[%s203 + $0x4] sm:$0x1]
      %v411 = vld [vmem:[%s203 + $0x8] sm:$0xf]
      %v412 = vld [vmem:[%s203 + $0xc] sm:$0x1]
      %v413 = vld [vmem:[%s203 + $0x10] sm:$0xf]
      %v414 = vld [vmem:[%s203 + $0x14] sm:$0x1]
      %v415 = vld [vmem:[%s203 + $0x18] sm:$0xf]
      %v416 = vld [vmem:[%s203 + $0x1c] sm:$0x1]
      %v417 = vld [vmem:[%s203 + $0x20] sm:$0xf]
      %v418 = vld [vmem:[%s203 + $0x24] sm:$0x1]
      %v419 = vld [vmem:[%s203 + $0x28] sm:$0xf]
      %v420 = vld [vmem:[%s203 + $0x2c] sm:$0x1]
      %v421 = vld [vmem:[%s203 + $0x30] sm:$0xf]
      %v422 = vld [vmem:[%s203 + $0x34] sm:$0x1]
      %v423 = vld [vmem:[%s203 + $0x38] sm:$0xf]
      %v424 = vld [vmem:[%s203 + $0x3c] sm:$0x1]
      %vm425 = vsmask.f32 3328
      %vm426 = vsmask.f32 7440
      %vm427 = vmor %vm425, %vm426
      %v429 = vshrl.u32 %v409, 16
      %v431 = vrot.slane %v429, 4
      %v432 = vshll.u32 %v409, 16
      %v434 = vrot.slane %v432, 5
      %v435 = vor.u32 %v431, %v434
      %v436 = vrot.slane %v435, 4
      %v438 = vshll.u32 %v410, 16
      %v440 = vrot.slane %v438, 5
      %v441 = vsel %vm427, %v436, %v440
      %v443 = vshrl.u32 %v411, 16
      %v445 = vrot.slane %v443, 4
      %v446 = vshll.u32 %v411, 16
      %v448 = vrot.slane %v446, 5
      %v449 = vor.u32 %v445, %v448
      %v450 = vrot.slane %v449, 4
      %v452 = vshll.u32 %v412, 16
      %v454 = vrot.slane %v452, 5
      %v455 = vsel %vm427, %v450, %v454
      %v457 = vshrl.u32 %v413, 16
      %v459 = vrot.slane %v457, 4
      %v460 = vshll.u32 %v413, 16
      %v462 = vrot.slane %v460, 5
      %v463 = vor.u32 %v459, %v462
      %v464 = vrot.slane %v463, 4
      %v466 = vshll.u32 %v414, 16
      %v468 = vrot.slane %v466, 5
      %v469 = vsel %vm427, %v464, %v468
      %v471 = vshrl.u32 %v415, 16
      %v473 = vrot.slane %v471, 4
      %v474 = vshll.u32 %v415, 16
      %v476 = vrot.slane %v474, 5
      %v477 = vor.u32 %v473, %v476
      %v478 = vrot.slane %v477, 4
      %v480 = vshll.u32 %v416, 16
      %v482 = vrot.slane %v480, 5
      %v483 = vsel %vm427, %v478, %v482
      %v485 = vshrl.u32 %v417, 16
      %v487 = vrot.slane %v485, 4
      %v488 = vshll.u32 %v417, 16
      %v490 = vrot.slane %v488, 5
      %v491 = vor.u32 %v487, %v490
      %v492 = vrot.slane %v491, 4
      %v494 = vshll.u32 %v418, 16
      %v496 = vrot.slane %v494, 5
      %v497 = vsel %vm427, %v492, %v496
      %v499 = vshrl.u32 %v419, 16
      %v501 = vrot.slane %v499, 4
      %v502 = vshll.u32 %v419, 16
      %v504 = vrot.slane %v502, 5
      %v505 = vor.u32 %v501, %v504
      %v506 = vrot.slane %v505, 4
      %v508 = vshll.u32 %v420, 16
      %v510 = vrot.slane %v508, 5
      %v511 = vsel %vm427, %v506, %v510
      %v513 = vshrl.u32 %v421, 16
      %v515 = vrot.slane %v513, 4
      %v516 = vshll.u32 %v421, 16
      %v518 = vrot.slane %v516, 5
      %v519 = vor.u32 %v515, %v518
      %v520 = vrot.slane %v519, 4
      %v522 = vshll.u32 %v422, 16
      %v524 = vrot.slane %v522, 5
      %v525 = vsel %vm427, %v520, %v524
      %v527 = vshrl.u32 %v423, 16
      %v529 = vrot.slane %v527, 4
      %v530 = vshll.u32 %v423, 16
      %v532 = vrot.slane %v530, 5
      %v533 = vor.u32 %v529, %v532
      %v534 = vrot.slane %v533, 4
      %v536 = vshll.u32 %v424, 16
      %v538 = vrot.slane %v536, 5
      %v539 = vsel %vm427, %v534, %v538
      %v540 = vld [vmem:[#allocation2] sm:$0xff]
      %v541 = vld [vmem:[#allocation2 + $0x8] sm:$0xff]
      %v542 = vld [vmem:[#allocation2 + $0x10] sm:$0xff]
      %v543 = vld [vmem:[#allocation2 + $0x18] sm:$0xff]
      %v544 = vld [vmem:[#allocation2 + $0x20] sm:$0xff]
      %v545 = vld [vmem:[#allocation2 + $0x28] sm:$0xff]
      %v546 = vld [vmem:[#allocation2 + $0x30] sm:$0xff]
      %v547 = vld [vmem:[#allocation2 + $0x38] sm:$0xff]
      %s548 = scalar_lea.vmem %s1, 64
      %v549 = vld [vmem:[%s548] sm:$0xf]
      %v550 = vld [vmem:[%s548 + $0x4] sm:$0xf]
      %v551 = vld [vmem:[%s548 + $0x8] sm:$0xf]
      %v552 = vld [vmem:[%s548 + $0xc] sm:$0xf]
      %v553 = vld [vmem:[%s548 + $0x10] sm:$0xf]
      %v554 = vld [vmem:[%s548 + $0x14] sm:$0xf]
      %v555 = vld [vmem:[%s548 + $0x18] sm:$0xf]
      %v556 = vld [vmem:[%s548 + $0x1c] sm:$0xf]
      %v557 = vld [vmem:[%s548 + $0x20] sm:$0xf]
      %v558 = vld [vmem:[%s548 + $0x24] sm:$0xf]
      %v559 = vld [vmem:[%s548 + $0x28] sm:$0xf]
      %v560 = vld [vmem:[%s548 + $0x2c] sm:$0xf]
      %v561 = vld [vmem:[%s548 + $0x30] sm:$0xf]
      %v562 = vld [vmem:[%s548 + $0x34] sm:$0xf]
      %v563 = vld [vmem:[%s548 + $0x38] sm:$0xf]
      %v564 = vld [vmem:[%s548 + $0x3c] sm:$0xf]
      %v565 = vunpack.c.l.b16 %v441
      %v566 = vunpack.c.l.b16 %v455
      %v567 = vunpack.c.l.b16 %v469
      %v568 = vunpack.c.l.b16 %v483
      %v569 = vunpack.c.l.b16 %v497
      %v570 = vunpack.c.l.b16 %v511
      %v571 = vunpack.c.l.b16 %v525
      %v572 = vunpack.c.l.b16 %v539
      %v573 = vpack.c.b16 %v566, %v565
      %v574 = vpack.c.b16 %v568, %v567
      %v575 = vpack.c.b16 %v570, %v569
      %v576 = vpack.c.b16 %v572, %v571
      %v597 = vunpack.c.l.b16 %v549
      %v598 = vunpack.c.l.b16 %v550
      %v599 = vunpack.c.l.b16 %v551
      %v600 = vunpack.c.l.b16 %v552
      %v601 = vunpack.c.l.b16 %v553
      %v602 = vunpack.c.l.b16 %v554
      %v603 = vunpack.c.l.b16 %v555
      %v604 = vunpack.c.l.b16 %v556
      %v605 = vunpack.c.l.b16 %v557
      %v606 = vunpack.c.l.b16 %v558
      %v607 = vunpack.c.l.b16 %v559
      %v608 = vunpack.c.l.b16 %v560
      %v609 = vunpack.c.l.b16 %v561
      %v610 = vunpack.c.l.b16 %v562
      %v611 = vunpack.c.l.b16 %v563
      %v612 = vunpack.c.l.b16 %v564
      %v613 = vpack.c.b16 %v598, %v597
      %v614 = vpack.c.b16 %v600, %v599
      %v615 = vpack.c.b16 %v602, %v601
      %v616 = vpack.c.b16 %v604, %v603
      %v617 = vpack.c.b16 %v606, %v605
      %v618 = vpack.c.b16 %v608, %v607
      %v619 = vpack.c.b16 %v610, %v609
      %v620 = vpack.c.b16 %v612, %v611
      %629 = vmatprep.subr.bf16.mxu0 0
      %630 = vmatpush1.bf16.msra.mxu0 %v613
      %631 = vmatprep.subr.bf16.mxu0 0
      %632 = vmatpush1.bf16.msra.mxu0 %v614
      %633 = vmatprep.subr.bf16.mxu0 0
      %634 = vmatpush1.bf16.msra.mxu0 %v615
      %635 = vmatprep.subr.bf16.mxu0 0
      %636 = vmatpush1.bf16.msra.mxu0 %v616
      %637 = vmatprep.subr.bf16.mxu0 0
      %638 = vmatpush1.bf16.msra.mxu0 %v617
      %639 = vmatprep.subr.bf16.mxu0 0
      %640 = vmatpush1.bf16.msra.mxu0 %v618
      %641 = vmatprep.subr.bf16.mxu0 0
      %642 = vmatpush1.bf16.msra.mxu0 %v619
      %643 = vmatprep.subr.bf16.mxu0 0
      %644 = vmatpush1.bf16.msra.mxu0 %v620
      %645 = vmatprep.subr.bf16.mxu0 0
      %646 = vmatpush1.bf16.msra.mxu0 0
      %647 = vmatprep.subr.bf16.mxu0 0
      %648 = vmatpush1.bf16.msra.mxu0 0
      %649 = vmatprep.subr.bf16.mxu0 0
      %650 = vmatpush1.bf16.msra.mxu0 0
      %651 = vmatprep.subr.bf16.mxu0 0
      %652 = vmatpush1.bf16.msra.mxu0 0
      %653 = vmatprep.subr.bf16.mxu0 0
      %654 = vmatpush1.bf16.msra.mxu0 0
      %655 = vmatprep.subr.bf16.mxu0 0
      %656 = vmatpush1.bf16.msra.mxu0 0
      %657 = vmatprep.subr.bf16.mxu0 0
      %658 = vmatpush1.bf16.msra.mxu0 0
      %659 = vmatprep.subr.bf16.mxu0 0
      %660 = vmatpush1.bf16.msra.mxu0 0
      %661 = vmatprep.mubr.bf16.mxu0 0
      %662 = vmatmul.mubr.bf16.gmra.mrb[0].mxu0 %v573
      %v663 = vpop.f32.mrb[0].mxu0
      %v664 = vadd.f32 0.0, %v663
      %v665 = vpop.f32.mrb[0].mxu0
      %v666 = vpop.f32.mrb[0].mxu0
      %v667 = vadd.f32 0.0, %v666
      %v668 = vpop.f32.mrb[0].mxu0
      %669 = vmatprep.mubr.bf16.mxu0 0
      %670 = vmatmul.mubr.bf16.gmra.mrb[0].mxu0 %v574
      %v671 = vpop.f32.mrb[0].mxu0
      %v672 = vadd.f32 0.0, %v671
      %v673 = vpop.f32.mrb[0].mxu0
      %v674 = vpop.f32.mrb[0].mxu0
      %v675 = vadd.f32 0.0, %v674
      %v676 = vpop.f32.mrb[0].mxu0
      %677 = vmatprep.mubr.bf16.mxu0 0
      %678 = vmatmul.mubr.bf16.gmra.mrb[0].mxu0 %v575
      %v679 = vpop.f32.mrb[0].mxu0
      %v680 = vadd.f32 0.0, %v679
      %v681 = vpop.f32.mrb[0].mxu0
      %v682 = vpop.f32.mrb[0].mxu0
      %v683 = vadd.f32 0.0, %v682
      %v684 = vpop.f32.mrb[0].mxu0
      %685 = vmatprep.mubr.bf16.mxu0 0
      %686 = vmatmul.mubr.bf16.gmra.mrb[0].mxu0 %v576
      %v687 = vpop.f32.mrb[0].mxu0
      %v688 = vadd.f32 0.0, %v687
      %v689 = vpop.f32.mrb[0].mxu0
      %v690 = vpop.f32.mrb[0].mxu0
      %v691 = vadd.f32 0.0, %v690
      %v692 = vpop.f32.mrb[0].mxu0
      %693 = vdwg.mxu0
      %v694 = vadd.f32 %v540, %v664
      %v695 = vadd.f32 %v541, %v667
      %v696 = vadd.f32 %v542, %v672
      %v697 = vadd.f32 %v543, %v675
      %v698 = vadd.f32 %v544, %v680
      %v699 = vadd.f32 %v545, %v683
      %v700 = vadd.f32 %v546, %v688
      %v701 = vadd.f32 %v547, %v691
      %702 = vst [vmem:[#allocation2] sm:$0xff] %v694
      %703 = vst [vmem:[#allocation2 + $0x8] sm:$0xff] %v695
      %704 = vst [vmem:[#allocation2 + $0x10] sm:$0xff] %v696
      %705 = vst [vmem:[#allocation2 + $0x18] sm:$0xff] %v697
      %706 = vst [vmem:[#allocation2 + $0x20] sm:$0xff] %v698
      %707 = vst [vmem:[#allocation2 + $0x28] sm:$0xff] %v699
      %708 = vst [vmem:[#allocation2 + $0x30] sm:$0xff] %v700
      %709 = vst [vmem:[#allocation2 + $0x38] sm:$0xff] %v701
      %v710 = vld [vmem:[%s203] sm:$0xe]
      %v711 = vld [vmem:[%s203 + $0x4] sm:$0x1]
      %v712 = vld [vmem:[%s203 + $0x8] sm:$0xe]
      %v713 = vld [vmem:[%s203 + $0xc] sm:$0x1]
      %v714 = vld [vmem:[%s203 + $0x10] sm:$0xe]
      %v715 = vld [vmem:[%s203 + $0x14] sm:$0x1]
      %v716 = vld [vmem:[%s203 + $0x18] sm:$0xe]
      %v717 = vld [vmem:[%s203 + $0x1c] sm:$0x1]
      %v718 = vld [vmem:[%s203 + $0x20] sm:$0xe]
      %v719 = vld [vmem:[%s203 + $0x24] sm:$0x1]
      %v720 = vld [vmem:[%s203 + $0x28] sm:$0xe]
      %v721 = vld [vmem:[%s203 + $0x2c] sm:$0x1]
      %v722 = vld [vmem:[%s203 + $0x30] sm:$0xe]
      %v723 = vld [vmem:[%s203 + $0x34] sm:$0x1]
      %v724 = vld [vmem:[%s203 + $0x38] sm:$0xe]
      %v725 = vld [vmem:[%s203 + $0x3c] sm:$0x1]
      %vm742 = vcmask 1042432
      %vm743 = vcmask 1046532
      %vm744 = vmor %vm742, %vm743
      %v745 = vrot.slane %v710, 5
      %v746 = vrot.slane %v745, 4
      %v747 = vrot.slane %v711, 5
      %v748 = vsel %vm744, %v746, %v747
      %v749 = vrot.slane %v712, 5
      %v750 = vrot.slane %v749, 4
      %v751 = vrot.slane %v713, 5
      %v752 = vsel %vm744, %v750, %v751
      %v753 = vrot.slane %v714, 5
      %v754 = vrot.slane %v753, 4
      %v755 = vrot.slane %v715, 5
      %v756 = vsel %vm744, %v754, %v755
      %v757 = vrot.slane %v716, 5
      %v758 = vrot.slane %v757, 4
      %v759 = vrot.slane %v717, 5
      %v760 = vsel %vm744, %v758, %v759
      %v761 = vrot.slane %v718, 5
      %v762 = vrot.slane %v761, 4
      %v763 = vrot.slane %v719, 5
      %v764 = vsel %vm744, %v762, %v763
      %v765 = vrot.slane %v720, 5
      %v766 = vrot.slane %v765, 4
      %v767 = vrot.slane %v721, 5
      %v768 = vsel %vm744, %v766, %v767
      %v769 = vrot.slane %v722, 5
      %v770 = vrot.slane %v769, 4
      %v771 = vrot.slane %v723, 5
      %v772 = vsel %vm744, %v770, %v771
      %v773 = vrot.slane %v724, 5
      %v774 = vrot.slane %v773, 4
      %v775 = vrot.slane %v725, 5
      %v776 = vsel %vm744, %v774, %v775
      %v777 = vld [vmem:[#allocation2] sm:$0xff]
      %v778 = vld [vmem:[#allocation2 + $0x8] sm:$0xff]
      %v779 = vld [vmem:[#allocation2 + $0x10] sm:$0xff]
      %v780 = vld [vmem:[#allocation2 + $0x18] sm:$0xff]
      %v781 = vld [vmem:[#allocation2 + $0x20] sm:$0xff]
      %v782 = vld [vmem:[#allocation2 + $0x28] sm:$0xff]
      %v783 = vld [vmem:[#allocation2 + $0x30] sm:$0xff]
      %v784 = vld [vmem:[#allocation2 + $0x38] sm:$0xff]
      %s785 = scalar_lea.vmem %s1, 128
      %v786 = vld [vmem:[%s785] sm:$0xf]
      %v787 = vld [vmem:[%s785 + $0x4] sm:$0xf]
      %v788 = vld [vmem:[%s785 + $0x8] sm:$0xf]
      %v789 = vld [vmem:[%s785 + $0xc] sm:$0xf]
      %v790 = vld [vmem:[%s785 + $0x10] sm:$0xf]
      %v791 = vld [vmem:[%s785 + $0x14] sm:$0xf]
      %v792 = vld [vmem:[%s785 + $0x18] sm:$0xf]
      %v793 = vld [vmem:[%s785 + $0x1c] sm:$0xf]
      %v794 = vld [vmem:[%s785 + $0x20] sm:$0xf]
      %v795 = vld [vmem:[%s785 + $0x24] sm:$0xf]
      %v796 = vld [vmem:[%s785 + $0x28] sm:$0xf]
      %v797 = vld [vmem:[%s785 + $0x2c] sm:$0xf]
      %v798 = vld [vmem:[%s785 + $0x30] sm:$0xf]
      %v799 = vld [vmem:[%s785 + $0x34] sm:$0xf]
      %v800 = vld [vmem:[%s785 + $0x38] sm:$0xf]
      %v801 = vld [vmem:[%s785 + $0x3c] sm:$0xf]
      %v802 = vunpack.c.l.b16 %v748
      %v803 = vunpack.c.l.b16 %v752
      %v804 = vunpack.c.l.b16 %v756
      %v805 = vunpack.c.l.b16 %v760
      %v806 = vunpack.c.l.b16 %v764
      %v807 = vunpack.c.l.b16 %v768
      %v808 = vunpack.c.l.b16 %v772
      %v809 = vunpack.c.l.b16 %v776
      %v810 = vpack.c.b16 %v803, %v802
      %v811 = vpack.c.b16 %v805, %v804
      %v812 = vpack.c.b16 %v807, %v806
      %v813 = vpack.c.b16 %v809, %v808
      %v834 = vunpack.c.l.b16 %v786
      %v835 = vunpack.c.l.b16 %v787
      %v836 = vunpack.c.l.b16 %v788
      %v837 = vunpack.c.l.b16 %v789
      %v838 = vunpack.c.l.b16 %v790
      %v839 = vunpack.c.l.b16 %v791
      %v840 = vunpack.c.l.b16 %v792
      %v841 = vunpack.c.l.b16 %v793
      %v842 = vunpack.c.l.b16 %v794
      %v843 = vunpack.c.l.b16 %v795
      %v844 = vunpack.c.l.b16 %v796
      %v845 = vunpack.c.l.b16 %v797
      %v846 = vunpack.c.l.b16 %v798
      %v847 = vunpack.c.l.b16 %v799
      %v848 = vunpack.c.l.b16 %v800
      %v849 = vunpack.c.l.b16 %v801
      %v850 = vpack.c.b16 %v835, %v834
      %v851 = vpack.c.b16 %v837, %v836
      %v852 = vpack.c.b16 %v839, %v838
      %v853 = vpack.c.b16 %v841, %v840
      %v854 = vpack.c.b16 %v843, %v842
      %v855 = vpack.c.b16 %v845, %v844
      %v856 = vpack.c.b16 %v847, %v846
      %v857 = vpack.c.b16 %v849, %v848
      %866 = vmatprep.subr.bf16.mxu0 0
      %867 = vmatpush1.bf16.msra.mxu0 %v850
      %868 = vmatprep.subr.bf16.mxu0 0
      %869 = vmatpush1.bf16.msra.mxu0 %v851
      %870 = vmatprep.subr.bf16.mxu0 0
      %871 = vmatpush1.bf16.msra.mxu0 %v852
      %872 = vmatprep.subr.bf16.mxu0 0
      %873 = vmatpush1.bf16.msra.mxu0 %v853
      %874 = vmatprep.subr.bf16.mxu0 0
      %875 = vmatpush1.bf16.msra.mxu0 %v854
      %876 = vmatprep.subr.bf16.mxu0 0
      %877 = vmatpush1.bf16.msra.mxu0 %v855
      %878 = vmatprep.subr.bf16.mxu0 0
      %879 = vmatpush1.bf16.msra.mxu0 %v856
      %880 = vmatprep.subr.bf16.mxu0 0
      %881 = vmatpush1.bf16.msra.mxu0 %v857
      %882 = vmatprep.subr.bf16.mxu0 0
      %883 = vmatpush1.bf16.msra.mxu0 0
      %884 = vmatprep.subr.bf16.mxu0 0
      %885 = vmatpush1.bf16.msra.mxu0 0
      %886 = vmatprep.subr.bf16.mxu0 0
      %887 = vmatpush1.bf16.msra.mxu0 0
      %888 = vmatprep.subr.bf16.mxu0 0
      %889 = vmatpush1.bf16.msra.mxu0 0
      %890 = vmatprep.subr.bf16.mxu0 0
      %891 = vmatpush1.bf16.msra.mxu0 0
      %892 = vmatprep.subr.bf16.mxu0 0
      %893 = vmatpush1.bf16.msra.mxu0 0
      %894 = vmatprep.subr.bf16.mxu0 0
      %895 = vmatpush1.bf16.msra.mxu0 0
      %896 = vmatprep.subr.bf16.mxu0 0
      %897 = vmatpush1.bf16.msra.mxu0 0
      %898 = vmatprep.mubr.bf16.mxu0 0
      %899 = vmatmul.mubr.bf16.gmra.mrb[0].mxu0 %v810
      %v900 = vpop.f32.mrb[0].mxu0
      %v901 = vadd.f32 0.0, %v900
      %v902 = vpop.f32.mrb[0].mxu0
      %v903 = vpop.f32.mrb[0].mxu0
      %v904 = vadd.f32 0.0, %v903
      %v905 = vpop.f32.mrb[0].mxu0
      %906 = vmatprep.mubr.bf16.mxu0 0
      %907 = vmatmul.mubr.bf16.gmra.mrb[0].mxu0 %v811
      %v908 = vpop.f32.mrb[0].mxu0
      %v909 = vadd.f32 0.0, %v908
      %v910 = vpop.f32.mrb[0].mxu0
      %v911 = vpop.f32.mrb[0].mxu0
      %v912 = vadd.f32 0.0, %v911
      %v913 = vpop.f32.mrb[0].mxu0
      %914 = vmatprep.mubr.bf16.mxu0 0
      %915 = vmatmul.mubr.bf16.gmra.mrb[0].mxu0 %v812
      %v916 = vpop.f32.mrb[0].mxu0
      %v917 = vadd.f32 0.0, %v916
      %v918 = vpop.f32.mrb[0].mxu0
      %v919 = vpop.f32.mrb[0].mxu0
      %v920 = vadd.f32 0.0, %v919
      %v921 = vpop.f32.mrb[0].mxu0
      %922 = vmatprep.mubr.bf16.mxu0 0
      %923 = vmatmul.mubr.bf16.gmra.mrb[0].mxu0 %v813
      %v924 = vpop.f32.mrb[0].mxu0
      %v925 = vadd.f32 0.0, %v924
      %v926 = vpop.f32.mrb[0].mxu0
      %v927 = vpop.f32.mrb[0].mxu0
      %v928 = vadd.f32 0.0, %v927
      %v929 = vpop.f32.mrb[0].mxu0
      %930 = vdwg.mxu0
      %v931 = vadd.f32 %v777, %v901
      %v932 = vadd.f32 %v778, %v904
      %v933 = vadd.f32 %v779, %v909
      %v934 = vadd.f32 %v780, %v912
      %v935 = vadd.f32 %v781, %v917
      %v936 = vadd.f32 %v782, %v920
      %v937 = vadd.f32 %v783, %v925
      %v938 = vadd.f32 %v784, %v928
      %939 = vst [vmem:[#allocation2] sm:$0xff] %v931
      %940 = vst [vmem:[#allocation2 + $0x8] sm:$0xff] %v932
      %941 = vst [vmem:[#allocation2 + $0x10] sm:$0xff] %v933
      %942 = vst [vmem:[#allocation2 + $0x18] sm:$0xff] %v934
      %943 = vst [vmem:[#allocation2 + $0x20] sm:$0xff] %v935
      %944 = vst [vmem:[#allocation2 + $0x28] sm:$0xff] %v936
      %945 = vst [vmem:[#allocation2 + $0x30] sm:$0xff] %v937
      %946 = vst [vmem:[#allocation2 + $0x38] sm:$0xff] %v938
      %s947 = scalar_lea.vmem %s203, 8
      %v948 = vld [vmem:[%s947] sm:$0xf]
      %v949 = vld [vmem:[%s947 + $0x8] sm:$0xf]
      %v950 = vld [vmem:[%s947 + $0x10] sm:$0xf]
      %v951 = vld [vmem:[%s947 + $0x18] sm:$0xf]
      %v952 = vld [vmem:[%s947 + $0x20] sm:$0xf]
      %v953 = vld [vmem:[%s947 + $0x28] sm:$0xf]
      %v954 = vld [vmem:[%s947 + $0x30] sm:$0xf]
      %v955 = vld [vmem:[%s947 + $0x38] sm:$0xf]
      %v956 = vld [vmem:[#allocation2] sm:$0xff]
      %v957 = vld [vmem:[#allocation2 + $0x8] sm:$0xff]
      %v958 = vld [vmem:[#allocation2 + $0x10] sm:$0xff]
      %v959 = vld [vmem:[#allocation2 + $0x18] sm:$0xff]
      %v960 = vld [vmem:[#allocation2 + $0x20] sm:$0xff]
      %v961 = vld [vmem:[#allocation2 + $0x28] sm:$0xff]
      %v962 = vld [vmem:[#allocation2 + $0x30] sm:$0xff]
      %v963 = vld [vmem:[#allocation2 + $0x38] sm:$0xff]
      %s964 = scalar_lea.vmem %s1, 192
      %v965 = vld [vmem:[%s964] sm:$0xf]
      %v966 = vld [vmem:[%s964 + $0x4] sm:$0xf]
      %v967 = vld [vmem:[%s964 + $0x8] sm:$0xf]
      %v968 = vld [vmem:[%s964 + $0xc] sm:$0xf]
      %v969 = vld [vmem:[%s964 + $0x10] sm:$0xf]
      %v970 = vld [vmem:[%s964 + $0x14] sm:$0xf]
      %v971 = vld [vmem:[%s964 + $0x18] sm:$0xf]
      %v972 = vld [vmem:[%s964 + $0x1c] sm:$0xf]
      %v973 = vld [vmem:[%s964 + $0x20] sm:$0xf]
      %v974 = vld [vmem:[%s964 + $0x24] sm:$0xf]
      %v975 = vld [vmem:[%s964 + $0x28] sm:$0xf]
      %v976 = vld [vmem:[%s964 + $0x2c] sm:$0xf]
      %v977 = vld [vmem:[%s964 + $0x30] sm:$0xf]
      %v978 = vld [vmem:[%s964 + $0x34] sm:$0xf]
      %v979 = vld [vmem:[%s964 + $0x38] sm:$0xf]
      %v980 = vld [vmem:[%s964 + $0x3c] sm:$0xf]
      %v989 = vunpack.c.l.b16 %v948
      %v990 = vunpack.c.l.b16 %v949
      %v991 = vunpack.c.l.b16 %v950
      %v992 = vunpack.c.l.b16 %v951
      %v993 = vunpack.c.l.b16 %v952
      %v994 = vunpack.c.l.b16 %v953
      %v995 = vunpack.c.l.b16 %v954
      %v996 = vunpack.c.l.b16 %v955
      %v997 = vpack.c.b16 %v990, %v989
      %v998 = vpack.c.b16 %v992, %v991
      %v999 = vpack.c.b16 %v994, %v993
      %v1000 = vpack.c.b16 %v996, %v995
      %v1021 = vunpack.c.l.b16 %v965
      %v1022 = vunpack.c.l.b16 %v966
      %v1023 = vunpack.c.l.b16 %v967
      %v1024 = vunpack.c.l.b16 %v968
      %v1025 = vunpack.c.l.b16 %v969
      %v1026 = vunpack.c.l.b16 %v970
      %v1027 = vunpack.c.l.b16 %v971
      %v1028 = vunpack.c.l.b16 %v972
      %v1029 = vunpack.c.l.b16 %v973
      %v1030 = vunpack.c.l.b16 %v974
      %v1031 = vunpack.c.l.b16 %v975
      %v1032 = vunpack.c.l.b16 %v976
      %v1033 = vunpack.c.l.b16 %v977
      %v1034 = vunpack.c.l.b16 %v978
      %v1035 = vunpack.c.l.b16 %v979
      %v1036 = vunpack.c.l.b16 %v980
      %v1037 = vpack.c.b16 %v1022, %v1021
      %v1038 = vpack.c.b16 %v1024, %v1023
      %v1039 = vpack.c.b16 %v1026, %v1025
      %v1040 = vpack.c.b16 %v1028, %v1027
      %v1041 = vpack.c.b16 %v1030, %v1029
      %v1042 = vpack.c.b16 %v1032, %v1031
      %v1043 = vpack.c.b16 %v1034, %v1033
      %v1044 = vpack.c.b16 %v1036, %v1035
      %1053 = vmatprep.subr.bf16.mxu0 0
      %1054 = vmatpush1.bf16.msra.mxu0 %v1037
      %1055 = vmatprep.subr.bf16.mxu0 0
      %1056 = vmatpush1.bf16.msra.mxu0 %v1038
      %1057 = vmatprep.subr.bf16.mxu0 0
      %1058 = vmatpush1.bf16.msra.mxu0 %v1039
      %1059 = vmatprep.subr.bf16.mxu0 0
      %1060 = vmatpush1.bf16.msra.mxu0 %v1040
      %1061 = vmatprep.subr.bf16.mxu0 0
      %1062 = vmatpush1.bf16.msra.mxu0 %v1041
      %1063 = vmatprep.subr.bf16.mxu0 0
      %1064 = vmatpush1.bf16.msra.mxu0 %v1042
      %1065 = vmatprep.subr.bf16.mxu0 0
      %1066 = vmatpush1.bf16.msra.mxu0 %v1043
      %1067 = vmatprep.subr.bf16.mxu0 0
      %1068 = vmatpush1.bf16.msra.mxu0 %v1044
      %1069 = vmatprep.subr.bf16.mxu0 0
      %1070 = vmatpush1.bf16.msra.mxu0 0
      %1071 = vmatprep.subr.bf16.mxu0 0
      %1072 = vmatpush1.bf16.msra.mxu0 0
      %1073 = vmatprep.subr.bf16.mxu0 0
      %1074 = vmatpush1.bf16.msra.mxu0 0
      %1075 = vmatprep.subr.bf16.mxu0 0
      %1076 = vmatpush1.bf16.msra.mxu0 0
      %1077 = vmatprep.subr.bf16.mxu0 0
      %1078 = vmatpush1.bf16.msra.mxu0 0
      %1079 = vmatprep.subr.bf16.mxu0 0
      %1080 = vmatpush1.bf16.msra.mxu0 0
      %1081 = vmatprep.subr.bf16.mxu0 0
      %1082 = vmatpush1.bf16.msra.mxu0 0
      %1083 = vmatprep.subr.bf16.mxu0 0
      %1084 = vmatpush1.bf16.msra.mxu0 0
      %1085 = vmatprep.mubr.bf16.mxu0 0
      %1086 = vmatmul.mubr.bf16.gmra.mrb[0].mxu0 %v997
      %v1087 = vpop.f32.mrb[0].mxu0
      %v1088 = vadd.f32 0.0, %v1087
      %v1089 = vpop.f32.mrb[0].mxu0
      %v1090 = vpop.f32.mrb[0].mxu0
      %v1091 = vadd.f32 0.0, %v1090
      %v1092 = vpop.f32.mrb[0].mxu0
      %1093 = vmatprep.mubr.bf16.mxu0 0
      %1094 = vmatmul.mubr.bf16.gmra.mrb[0].mxu0 %v998
      %v1095 = vpop.f32.mrb[0].mxu0
      %v1096 = vadd.f32 0.0, %v1095
      %v1097 = vpop.f32.mrb[0].mxu0
      %v1098 = vpop.f32.mrb[0].mxu0
      %v1099 = vadd.f32 0.0, %v1098
      %v1100 = vpop.f32.mrb[0].mxu0
      %1101 = vmatprep.mubr.bf16.mxu0 0
      %1102 = vmatmul.mubr.bf16.gmra.mrb[0].mxu0 %v999
      %v1103 = vpop.f32.mrb[0].mxu0
      %v1104 = vadd.f32 0.0, %v1103
      %v1105 = vpop.f32.mrb[0].mxu0
      %v1106 = vpop.f32.mrb[0].mxu0
      %v1107 = vadd.f32 0.0, %v1106
      %v1108 = vpop.f32.mrb[0].mxu0
      %1109 = vmatprep.mubr.bf16.mxu0 0
      %1110 = vmatmul.mubr.bf16.gmra.mrb[0].mxu0 %v1000
      %v1111 = vpop.f32.mrb[0].mxu0
      %v1112 = vadd.f32 0.0, %v1111
      %v1113 = vpop.f32.mrb[0].mxu0
      %v1114 = vpop.f32.mrb[0].mxu0
      %v1115 = vadd.f32 0.0, %v1114
      %v1116 = vpop.f32.mrb[0].mxu0
      %1117 = vdwg.mxu0
      %v1118 = vadd.f32 %v956, %v1088
      %v1119 = vadd.f32 %v957, %v1091
      %v1120 = vadd.f32 %v958, %v1096
      %v1121 = vadd.f32 %v959, %v1099
      %v1122 = vadd.f32 %v960, %v1104
      %v1123 = vadd.f32 %v961, %v1107
      %v1124 = vadd.f32 %v962, %v1112
      %v1125 = vadd.f32 %v963, %v1115
      %1126 = vst [vmem:[#allocation2] sm:$0xff] %v1118
      %1127 = vst [vmem:[#allocation2 + $0x8] sm:$0xff] %v1119
      %1128 = vst [vmem:[#allocation2 + $0x10] sm:$0xff] %v1120
      %1129 = vst [vmem:[#allocation2 + $0x18] sm:$0xff] %v1121
      %1130 = vst [vmem:[#allocation2 + $0x20] sm:$0xff] %v1122
      %1131 = vst [vmem:[#allocation2 + $0x28] sm:$0xff] %v1123
      %1132 = vst [vmem:[#allocation2 + $0x30] sm:$0xff] %v1124
      %1133 = vst [vmem:[#allocation2 + $0x38] sm:$0xff] %v1125
      %v1134 = vld [vmem:[%s947] sm:$0xf]
      %v1135 = vld [vmem:[%s947 + $0x4] sm:$0x1]
      %v1136 = vld [vmem:[%s947 + $0x8] sm:$0xf]
      %v1137 = vld [vmem:[%s947 + $0xc] sm:$0x1]
      %v1138 = vld [vmem:[%s947 + $0x10] sm:$0xf]
      %v1139 = vld [vmem:[%s947 + $0x14] sm:$0x1]
      %v1140 = vld [vmem:[%s947 + $0x18] sm:$0xf]
      %v1141 = vld [vmem:[%s947 + $0x1c] sm:$0x1]
      %v1142 = vld [vmem:[%s947 + $0x20] sm:$0xf]
      %v1143 = vld [vmem:[%s947 + $0x24] sm:$0x1]
      %v1144 = vld [vmem:[%s947 + $0x28] sm:$0xf]
      %v1145 = vld [vmem:[%s947 + $0x2c] sm:$0x1]
      %v1146 = vld [vmem:[%s947 + $0x30] sm:$0xf]
      %v1147 = vld [vmem:[%s947 + $0x34] sm:$0x1]
      %v1148 = vld [vmem:[%s947 + $0x38] sm:$0xf]
      %v1149 = vld [vmem:[%s947 + $0x3c] sm:$0x1]
      %v1151 = vshrl.u32 %v1134, 16
      %v1153 = vrot.slane %v1151, 4
      %v1154 = vshll.u32 %v1134, 16
      %v1156 = vrot.slane %v1154, 5
      %v1157 = vor.u32 %v1153, %v1156
      %v1158 = vrot.slane %v1157, 4
      %v1160 = vshll.u32 %v1135, 16
      %v1162 = vrot.slane %v1160, 5
      %v1163 = vsel %vm427, %v1158, %v1162
      %v1165 = vshrl.u32 %v1136, 16
      %v1167 = vrot.slane %v1165, 4
      %v1168 = vshll.u32 %v1136, 16
      %v1170 = vrot.slane %v1168, 5
      %v1171 = vor.u32 %v1167, %v1170
      %v1172 = vrot.slane %v1171, 4
      %v1174 = vshll.u32 %v1137, 16
      %v1176 = vrot.slane %v1174, 5
      %v1177 = vsel %vm427, %v1172, %v1176
      %v1179 = vshrl.u32 %v1138, 16
      %v1181 = vrot.slane %v1179, 4
      %v1182 = vshll.u32 %v1138, 16
      %v1184 = vrot.slane %v1182, 5
      %v1185 = vor.u32 %v1181, %v1184
      %v1186 = vrot.slane %v1185, 4
      %v1188 = vshll.u32 %v1139, 16
      %v1190 = vrot.slane %v1188, 5
      %v1191 = vsel %vm427, %v1186, %v1190
      %v1193 = vshrl.u32 %v1140, 16
      %v1195 = vrot.slane %v1193, 4
      %v1196 = vshll.u32 %v1140, 16
      %v1198 = vrot.slane %v1196, 5
      %v1199 = vor.u32 %v1195, %v1198
      %v1200 = vrot.slane %v1199, 4
      %v1202 = vshll.u32 %v1141, 16
      %v1204 = vrot.slane %v1202, 5
      %v1205 = vsel %vm427, %v1200, %v1204
      %v1207 = vshrl.u32 %v1142, 16
      %v1209 = vrot.slane %v1207, 4
      %v1210 = vshll.u32 %v1142, 16
      %v1212 = vrot.slane %v1210, 5
      %v1213 = vor.u32 %v1209, %v1212
      %v1214 = vrot.slane %v1213, 4
      %v1216 = vshll.u32 %v1143, 16
      %v1218 = vrot.slane %v1216, 5
      %v1219 = vsel %vm427, %v1214, %v1218
      %v1221 = vshrl.u32 %v1144, 16
      %v1223 = vrot.slane %v1221, 4
      %v1224 = vshll.u32 %v1144, 16
      %v1226 = vrot.slane %v1224, 5
      %v1227 = vor.u32 %v1223, %v1226
      %v1228 = vrot.slane %v1227, 4
      %v1230 = vshll.u32 %v1145, 16
      %v1232 = vrot.slane %v1230, 5
      %v1233 = vsel %vm427, %v1228, %v1232
      %v1235 = vshrl.u32 %v1146, 16
      %v1237 = vrot.slane %v1235, 4
      %v1238 = vshll.u32 %v1146, 16
      %v1240 = vrot.slane %v1238, 5
      %v1241 = vor.u32 %v1237, %v1240
      %v1242 = vrot.slane %v1241, 4
      %v1244 = vshll.u32 %v1147, 16
      %v1246 = vrot.slane %v1244, 5
      %v1247 = vsel %vm427, %v1242, %v1246
      %v1249 = vshrl.u32 %v1148, 16
      %v1251 = vrot.slane %v1249, 4
      %v1252 = vshll.u32 %v1148, 16
      %v1254 = vrot.slane %v1252, 5
      %v1255 = vor.u32 %v1251, %v1254
      %v1256 = vrot.slane %v1255, 4
      %v1258 = vshll.u32 %v1149, 16
      %v1260 = vrot.slane %v1258, 5
      %v1261 = vsel %vm427, %v1256, %v1260
      %v1262 = vld [vmem:[#allocation2] sm:$0xff]
      %v1263 = vld [vmem:[#allocation2 + $0x8] sm:$0xff]
      %v1264 = vld [vmem:[#allocation2 + $0x10] sm:$0xff]
      %v1265 = vld [vmem:[#allocation2 + $0x18] sm:$0xff]
      %v1266 = vld [vmem:[#allocation2 + $0x20] sm:$0xff]
      %v1267 = vld [vmem:[#allocation2 + $0x28] sm:$0xff]
      %v1268 = vld [vmem:[#allocation2 + $0x30] sm:$0xff]
      %v1269 = vld [vmem:[#allocation2 + $0x38] sm:$0xff]
      %s1270 = scalar_lea.vmem %s1, 256
      %v1271 = vld [vmem:[%s1270] sm:$0xf]
      %v1272 = vld [vmem:[%s1270 + $0x4] sm:$0xf]
      %v1273 = vld [vmem:[%s1270 + $0x8] sm:$0xf]
      %v1274 = vld [vmem:[%s1270 + $0xc] sm:$0xf]
      %v1275 = vld [vmem:[%s1270 + $0x10] sm:$0xf]
      %v1276 = vld [vmem:[%s1270 + $0x14] sm:$0xf]
      %v1277 = vld [vmem:[%s1270 + $0x18] sm:$0xf]
      %v1278 = vld [vmem:[%s1270 + $0x1c] sm:$0xf]
      %v1279 = vld [vmem:[%s1270 + $0x20] sm:$0xf]
      %v1280 = vld [vmem:[%s1270 + $0x24] sm:$0xf]
      %v1281 = vld [vmem:[%s1270 + $0x28] sm:$0xf]
      %v1282 = vld [vmem:[%s1270 + $0x2c] sm:$0xf]
      %v1283 = vld [vmem:[%s1270 + $0x30] sm:$0xf]
      %v1284 = vld [vmem:[%s1270 + $0x34] sm:$0xf]
      %v1285 = vld [vmem:[%s1270 + $0x38] sm:$0xf]
      %v1286 = vld [vmem:[%s1270 + $0x3c] sm:$0xf]
      %v1287 = vunpack.c.l.b16 %v1163
      %v1288 = vunpack.c.l.b16 %v1177
      %v1289 = vunpack.c.l.b16 %v1191
      %v1290 = vunpack.c.l.b16 %v1205
      %v1291 = vunpack.c.l.b16 %v1219
      %v1292 = vunpack.c.l.b16 %v1233
      %v1293 = vunpack.c.l.b16 %v1247
      %v1294 = vunpack.c.l.b16 %v1261
      %v1295 = vpack.c.b16 %v1288, %v1287
      %v1296 = vpack.c.b16 %v1290, %v1289
      %v1297 = vpack.c.b16 %v1292, %v1291
      %v1298 = vpack.c.b16 %v1294, %v1293
      %v1319 = vunpack.c.l.b16 %v1271
      %v1320 = vunpack.c.l.b16 %v1272
      %v1321 = vunpack.c.l.b16 %v1273
      %v1322 = vunpack.c.l.b16 %v1274
      %v1323 = vunpack.c.l.b16 %v1275
      %v1324 = vunpack.c.l.b16 %v1276
      %v1325 = vunpack.c.l.b16 %v1277
      %v1326 = vunpack.c.l.b16 %v1278
      %v1327 = vunpack.c.l.b16 %v1279
      %v1328 = vunpack.c.l.b16 %v1280
      %v1329 = vunpack.c.l.b16 %v1281
      %v1330 = vunpack.c.l.b16 %v1282
      %v1331 = vunpack.c.l.b16 %v1283
      %v1332 = vunpack.c.l.b16 %v1284
      %v1333 = vunpack.c.l.b16 %v1285
      %v1334 = vunpack.c.l.b16 %v1286
      %v1335 = vpack.c.b16 %v1320, %v1319
      %v1336 = vpack.c.b16 %v1322, %v1321
      %v1337 = vpack.c.b16 %v1324, %v1323
      %v1338 = vpack.c.b16 %v1326, %v1325
      %v1339 = vpack.c.b16 %v1328, %v1327
      %v1340 = vpack.c.b16 %v1330, %v1329
      %v1341 = vpack.c.b16 %v1332, %v1331
      %v1342 = vpack.c.b16 %v1334, %v1333
      %1351 = vmatprep.subr.bf16.mxu0 0
      %1352 = vmatpush1.bf16.msra.mxu0 %v1335
      %1353 = vmatprep.subr.bf16.mxu0 0
      %1354 = vmatpush1.bf16.msra.mxu0 %v1336
      %1355 = vmatprep.subr.bf16.mxu0 0
      %1356 = vmatpush1.bf16.msra.mxu0 %v1337
      %1357 = vmatprep.subr.bf16.mxu0 0
      %1358 = vmatpush1.bf16.msra.mxu0 %v1338
      %1359 = vmatprep.subr.bf16.mxu0 0
      %1360 = vmatpush1.bf16.msra.mxu0 %v1339
      %1361 = vmatprep.subr.bf16.mxu0 0
      %1362 = vmatpush1.bf16.msra.mxu0 %v1340
      %1363 = vmatprep.subr.bf16.mxu0 0
      %1364 = vmatpush1.bf16.msra.mxu0 %v1341
      %1365 = vmatprep.subr.bf16.mxu0 0
      %1366 = vmatpush1.bf16.msra.mxu0 %v1342
      %1367 = vmatprep.subr.bf16.mxu0 0
      %1368 = vmatpush1.bf16.msra.mxu0 0
      %1369 = vmatprep.subr.bf16.mxu0 0
      %1370 = vmatpush1.bf16.msra.mxu0 0
      %1371 = vmatprep.subr.bf16.mxu0 0
      %1372 = vmatpush1.bf16.msra.mxu0 0
      %1373 = vmatprep.subr.bf16.mxu0 0
      %1374 = vmatpush1.bf16.msra.mxu0 0
      %1375 = vmatprep.subr.bf16.mxu0 0
      %1376 = vmatpush1.bf16.msra.mxu0 0
      %1377 = vmatprep.subr.bf16.mxu0 0
      %1378 = vmatpush1.bf16.msra.mxu0 0
      %1379 = vmatprep.subr.bf16.mxu0 0
      %1380 = vmatpush1.bf16.msra.mxu0 0
      %1381 = vmatprep.subr.bf16.mxu0 0
      %1382 = vmatpush1.bf16.msra.mxu0 0
      %1383 = vmatprep.mubr.bf16.mxu0 0
      %1384 = vmatmul.mubr.bf16.gmra.mrb[0].mxu0 %v1295
      %v1385 = vpop.f32.mrb[0].mxu0
      %v1386 = vadd.f32 0.0, %v1385
      %v1387 = vpop.f32.mrb[0].mxu0
      %v1388 = vpop.f32.mrb[0].mxu0
      %v1389 = vadd.f32 0.0, %v1388
      %v1390 = vpop.f32.mrb[0].mxu0
      %1391 = vmatprep.mubr.bf16.mxu0 0
      %1392 = vmatmul.mubr.bf16.gmra.mrb[0].mxu0 %v1296
      %v1393 = vpop.f32.mrb[0].mxu0
      %v1394 = vadd.f32 0.0, %v1393
      %v1395 = vpop.f32.mrb[0].mxu0
      %v1396 = vpop.f32.mrb[0].mxu0
      %v1397 = vadd.f32 0.0, %v1396
      %v1398 = vpop.f32.mrb[0].mxu0
      %1399 = vmatprep.mubr.bf16.mxu0 0
      %1400 = vmatmul.mubr.bf16.gmra.mrb[0].mxu0 %v1297
      %v1401 = vpop.f32.mrb[0].mxu0
      %v1402 = vadd.f32 0.0, %v1401
      %v1403 = vpop.f32.mrb[0].mxu0
      %v1404 = vpop.f32.mrb[0].mxu0
      %v1405 = vadd.f32 0.0, %v1404
      %v1406 = vpop.f32.mrb[0].mxu0
      %1407 = vmatprep.mubr.bf16.mxu0 0
      %1408 = vmatmul.mubr.bf16.gmra.mrb[0].mxu0 %v1298
      %v1409 = vpop.f32.mrb[0].mxu0
      %v1410 = vadd.f32 0.0, %v1409
      %v1411 = vpop.f32.mrb[0].mxu0
      %v1412 = vpop.f32.mrb[0].mxu0
      %v1413 = vadd.f32 0.0, %v1412
      %v1414 = vpop.f32.mrb[0].mxu0
      %1415 = vdwg.mxu0
      %v1416 = vadd.f32 %v1262, %v1386
      %v1417 = vadd.f32 %v1263, %v1389
      %v1418 = vadd.f32 %v1264, %v1394
      %v1419 = vadd.f32 %v1265, %v1397
      %v1420 = vadd.f32 %v1266, %v1402
      %v1421 = vadd.f32 %v1267, %v1405
      %v1422 = vadd.f32 %v1268, %v1410
      %v1423 = vadd.f32 %v1269, %v1413
      %1424 = vst [vmem:[#allocation2] sm:$0xff] %v1416
      %1425 = vst [vmem:[#allocation2 + $0x8] sm:$0xff] %v1417
      %1426 = vst [vmem:[#allocation2 + $0x10] sm:$0xff] %v1418
      %1427 = vst [vmem:[#allocation2 + $0x18] sm:$0xff] %v1419
      %1428 = vst [vmem:[#allocation2 + $0x20] sm:$0xff] %v1420
      %1429 = vst [vmem:[#allocation2 + $0x28] sm:$0xff] %v1421
      %1430 = vst [vmem:[#allocation2 + $0x30] sm:$0xff] %v1422
      %1431 = vst [vmem:[#allocation2 + $0x38] sm:$0xff] %v1423
      %v1432 = vld [vmem:[%s947] sm:$0xe]
      %v1433 = vld [vmem:[%s947 + $0x4] sm:$0x1]
      %v1434 = vld [vmem:[%s947 + $0x8] sm:$0xe]
      %v1435 = vld [vmem:[%s947 + $0xc] sm:$0x1]
      %v1436 = vld [vmem:[%s947 + $0x10] sm:$0xe]
      %v1437 = vld [vmem:[%s947 + $0x14] sm:$0x1]
      %v1438 = vld [vmem:[%s947 + $0x18] sm:$0xe]
      %v1439 = vld [vmem:[%s947 + $0x1c] sm:$0x1]
      %v1440 = vld [vmem:[%s947 + $0x20] sm:$0xe]
      %v1441 = vld [vmem:[%s947 + $0x24] sm:$0x1]
      %v1442 = vld [vmem:[%s947 + $0x28] sm:$0xe]
      %v1443 = vld [vmem:[%s947 + $0x2c] sm:$0x1]
      %v1444 = vld [vmem:[%s947 + $0x30] sm:$0xe]
      %v1445 = vld [vmem:[%s947 + $0x34] sm:$0x1]
      %v1446 = vld [vmem:[%s947 + $0x38] sm:$0xe]
      %v1447 = vld [vmem:[%s947 + $0x3c] sm:$0x1]
      %v1464 = vrot.slane %v1432, 5
      %v1465 = vrot.slane %v1464, 4
      %v1466 = vrot.slane %v1433, 5
      %v1467 = vsel %vm744, %v1465, %v1466
      %v1468 = vrot.slane %v1434, 5
      %v1469 = vrot.slane %v1468, 4
      %v1470 = vrot.slane %v1435, 5
      %v1471 = vsel %vm744, %v1469, %v1470
      %v1472 = vrot.slane %v1436, 5
      %v1473 = vrot.slane %v1472, 4
      %v1474 = vrot.slane %v1437, 5
      %v1475 = vsel %vm744, %v1473, %v1474
      %v1476 = vrot.slane %v1438, 5
      %v1477 = vrot.slane %v1476, 4
      %v1478 = vrot.slane %v1439, 5
      %v1479 = vsel %vm744, %v1477, %v1478
      %v1480 = vrot.slane %v1440, 5
      %v1481 = vrot.slane %v1480, 4
      %v1482 = vrot.slane %v1441, 5
      %v1483 = vsel %vm744, %v1481, %v1482
      %v1484 = vrot.slane %v1442, 5
      %v1485 = vrot.slane %v1484, 4
      %v1486 = vrot.slane %v1443, 5
      %v1487 = vsel %vm744, %v1485, %v1486
      %v1488 = vrot.slane %v1444, 5
      %v1489 = vrot.slane %v1488, 4
      %v1490 = vrot.slane %v1445, 5
      %v1491 = vsel %vm744, %v1489, %v1490
      %v1492 = vrot.slane %v1446, 5
      %v1493 = vrot.slane %v1492, 4
      %v1494 = vrot.slane %v1447, 5
      %v1495 = vsel %vm744, %v1493, %v1494
      %v1496 = vld [vmem:[#allocation2] sm:$0xff]
      %v1497 = vld [vmem:[#allocation2 + $0x8] sm:$0xff]
      %v1498 = vld [vmem:[#allocation2 + $0x10] sm:$0xff]
      %v1499 = vld [vmem:[#allocation2 + $0x18] sm:$0xff]
      %v1500 = vld [vmem:[#allocation2 + $0x20] sm:$0xff]
      %v1501 = vld [vmem:[#allocation2 + $0x28] sm:$0xff]
      %v1502 = vld [vmem:[#allocation2 + $0x30] sm:$0xff]
      %v1503 = vld [vmem:[#allocation2 + $0x38] sm:$0xff]
      %s1504 = scalar_lea.vmem %s1, 320
      %v1505 = vld [vmem:[%s1504] sm:$0xf]
      %v1506 = vld [vmem:[%s1504 + $0x4] sm:$0xf]
      %v1507 = vld [vmem:[%s1504 + $0x8] sm:$0xf]
      %v1508 = vld [vmem:[%s1504 + $0xc] sm:$0xf]
      %v1509 = vld [vmem:[%s1504 + $0x10] sm:$0xf]
      %v1510 = vld [vmem:[%s1504 + $0x14] sm:$0xf]
      %v1511 = vld [vmem:[%s1504 + $0x18] sm:$0xf]
      %v1512 = vld [vmem:[%s1504 + $0x1c] sm:$0xf]
      %v1513 = vld [vmem:[%s1504 + $0x20] sm:$0xf]
      %v1514 = vld [vmem:[%s1504 + $0x24] sm:$0xf]
      %v1515 = vld [vmem:[%s1504 + $0x28] sm:$0xf]
      %v1516 = vld [vmem:[%s1504 + $0x2c] sm:$0xf]
      %v1517 = vld [vmem:[%s1504 + $0x30] sm:$0xf]
      %v1518 = vld [vmem:[%s1504 + $0x34] sm:$0xf]
      %v1519 = vld [vmem:[%s1504 + $0x38] sm:$0xf]
      %v1520 = vld [vmem:[%s1504 + $0x3c] sm:$0xf]
      %v1521 = vunpack.c.l.b16 %v1467
      %v1522 = vunpack.c.l.b16 %v1471
      %v1523 = vunpack.c.l.b16 %v1475
      %v1524 = vunpack.c.l.b16 %v1479
      %v1525 = vunpack.c.l.b16 %v1483
      %v1526 = vunpack.c.l.b16 %v1487
      %v1527 = vunpack.c.l.b16 %v1491
      %v1528 = vunpack.c.l.b16 %v1495
      %v1529 = vpack.c.b16 %v1522, %v1521
      %v1530 = vpack.c.b16 %v1524, %v1523
      %v1531 = vpack.c.b16 %v1526, %v1525
      %v1532 = vpack.c.b16 %v1528, %v1527
      %v1553 = vunpack.c.l.b16 %v1505
      %v1554 = vunpack.c.l.b16 %v1506
      %v1555 = vunpack.c.l.b16 %v1507
      %v1556 = vunpack.c.l.b16 %v1508
      %v1557 = vunpack.c.l.b16 %v1509
      %v1558 = vunpack.c.l.b16 %v1510
      %v1559 = vunpack.c.l.b16 %v1511
      %v1560 = vunpack.c.l.b16 %v1512
      %v1561 = vunpack.c.l.b16 %v1513
      %v1562 = vunpack.c.l.b16 %v1514
      %v1563 = vunpack.c.l.b16 %v1515
      %v1564 = vunpack.c.l.b16 %v1516
      %v1565 = vunpack.c.l.b16 %v1517
      %v1566 = vunpack.c.l.b16 %v1518
      %v1567 = vunpack.c.l.b16 %v1519
      %v1568 = vunpack.c.l.b16 %v1520
      %v1569 = vpack.c.b16 %v1554, %v1553
      %v1570 = vpack.c.b16 %v1556, %v1555
      %v1571 = vpack.c.b16 %v1558, %v1557
      %v1572 = vpack.c.b16 %v1560, %v1559
      %v1573 = vpack.c.b16 %v1562, %v1561
      %v1574 = vpack.c.b16 %v1564, %v1563
      %v1575 = vpack.c.b16 %v1566, %v1565
      %v1576 = vpack.c.b16 %v1568, %v1567
      %1585 = vmatprep.subr.bf16.mxu0 0
      %1586 = vmatpush1.bf16.msra.mxu0 %v1569
      %1587 = vmatprep.subr.bf16.mxu0 0
      %1588 = vmatpush1.bf16.msra.mxu0 %v1570
      %1589 = vmatprep.subr.bf16.mxu0 0
      %1590 = vmatpush1.bf16.msra.mxu0 %v1571
      %1591 = vmatprep.subr.bf16.mxu0 0
      %1592 = vmatpush1.bf16.msra.mxu0 %v1572
      %1593 = vmatprep.subr.bf16.mxu0 0
      %1594 = vmatpush1.bf16.msra.mxu0 %v1573
      %1595 = vmatprep.subr.bf16.mxu0 0
      %1596 = vmatpush1.bf16.msra.mxu0 %v1574
      %1597 = vmatprep.subr.bf16.mxu0 0
      %1598 = vmatpush1.bf16.msra.mxu0 %v1575
      %1599 = vmatprep.subr.bf16.mxu0 0
      %1600 = vmatpush1.bf16.msra.mxu0 %v1576
      %1601 = vmatprep.subr.bf16.mxu0 0
      %1602 = vmatpush1.bf16.msra.mxu0 0
      %1603 = vmatprep.subr.bf16.mxu0 0
      %1604 = vmatpush1.bf16.msra.mxu0 0
      %1605 = vmatprep.subr.bf16.mxu0 0
      %1606 = vmatpush1.bf16.msra.mxu0 0
      %1607 = vmatprep.subr.bf16.mxu0 0
      %1608 = vmatpush1.bf16.msra.mxu0 0
      %1609 = vmatprep.subr.bf16.mxu0 0
      %1610 = vmatpush1.bf16.msra.mxu0 0
      %1611 = vmatprep.subr.bf16.mxu0 0
      %1612 = vmatpush1.bf16.msra.mxu0 0
      %1613 = vmatprep.subr.bf16.mxu0 0
      %1614 = vmatpush1.bf16.msra.mxu0 0
      %1615 = vmatprep.subr.bf16.mxu0 0
      %1616 = vmatpush1.bf16.msra.mxu0 0
      %1617 = vmatprep.mubr.bf16.mxu0 0
      %1618 = vmatmul.mubr.bf16.gmra.mrb[0].mxu0 %v1529
      %v1619 = vpop.f32.mrb[0].mxu0
      %v1620 = vadd.f32 0.0, %v1619
      %v1621 = vpop.f32.mrb[0].mxu0
      %v1622 = vpop.f32.mrb[0].mxu0
      %v1623 = vadd.f32 0.0, %v1622
      %v1624 = vpop.f32.mrb[0].mxu0
      %1625 = vmatprep.mubr.bf16.mxu0 0
      %1626 = vmatmul.mubr.bf16.gmra.mrb[0].mxu0 %v1530
      %v1627 = vpop.f32.mrb[0].mxu0
      %v1628 = vadd.f32 0.0, %v1627
      %v1629 = vpop.f32.mrb[0].mxu0
      %v1630 = vpop.f32.mrb[0].mxu0
      %v1631 = vadd.f32 0.0, %v1630
      %v1632 = vpop.f32.mrb[0].mxu0
      %1633 = vmatprep.mubr.bf16.mxu0 0
      %1634 = vmatmul.mubr.bf16.gmra.mrb[0].mxu0 %v1531
      %v1635 = vpop.f32.mrb[0].mxu0
      %v1636 = vadd.f32 0.0, %v1635
      %v1637 = vpop.f32.mrb[0].mxu0
      %v1638 = vpop.f32.mrb[0].mxu0
      %v1639 = vadd.f32 0.0, %v1638
      %v1640 = vpop.f32.mrb[0].mxu0
      %1641 = vmatprep.mubr.bf16.mxu0 0
      %1642 = vmatmul.mubr.bf16.gmra.mrb[0].mxu0 %v1532
      %v1643 = vpop.f32.mrb[0].mxu0
      %v1644 = vadd.f32 0.0, %v1643
      %v1645 = vpop.f32.mrb[0].mxu0
      %v1646 = vpop.f32.mrb[0].mxu0
      %v1647 = vadd.f32 0.0, %v1646
      %v1648 = vpop.f32.mrb[0].mxu0
      %1649 = vdwg.mxu0
      %v1650 = vadd.f32 %v1496, %v1620
      %v1651 = vadd.f32 %v1497, %v1623
      %v1652 = vadd.f32 %v1498, %v1628
      %v1653 = vadd.f32 %v1499, %v1631
      %v1654 = vadd.f32 %v1500, %v1636
      %v1655 = vadd.f32 %v1501, %v1639
      %v1656 = vadd.f32 %v1502, %v1644
      %v1657 = vadd.f32 %v1503, %v1647
      %1658 = vst [vmem:[#allocation2] sm:$0xff] %v1650
      %1659 = vst [vmem:[#allocation2 + $0x8] sm:$0xff] %v1651
      %1660 = vst [vmem:[#allocation2 + $0x10] sm:$0xff] %v1652
      %1661 = vst [vmem:[#allocation2 + $0x18] sm:$0xff] %v1653
      %1662 = vst [vmem:[#allocation2 + $0x20] sm:$0xff] %v1654
      %1663 = vst [vmem:[#allocation2 + $0x28] sm:$0xff] %v1655
      %1664 = vst [vmem:[#allocation2 + $0x30] sm:$0xff] %v1656
      %1665 = vst [vmem:[#allocation2 + $0x38] sm:$0xff] %v1657
      %s1666 = scalar_lea.vmem %s203, 16
      %v1667 = vld [vmem:[%s1666] sm:$0xf]
      %v1668 = vld [vmem:[%s1666 + $0x8] sm:$0xf]
      %v1669 = vld [vmem:[%s1666 + $0x10] sm:$0xf]
      %v1670 = vld [vmem:[%s1666 + $0x18] sm:$0xf]
      %v1671 = vld [vmem:[%s1666 + $0x20] sm:$0xf]
      %v1672 = vld [vmem:[%s1666 + $0x28] sm:$0xf]
      %v1673 = vld [vmem:[%s1666 + $0x30] sm:$0xf]
      %v1674 = vld [vmem:[%s1666 + $0x38] sm:$0xf]
      %v1675 = vld [vmem:[#allocation2] sm:$0xff]
      %v1676 = vld [vmem:[#allocation2 + $0x8] sm:$0xff]
      %v1677 = vld [vmem:[#allocation2 + $0x10] sm:$0xff]
      %v1678 = vld [vmem:[#allocation2 + $0x18] sm:$0xff]
      %v1679 = vld [vmem:[#allocation2 + $0x20] sm:$0xff]
      %v1680 = vld [vmem:[#allocation2 + $0x28] sm:$0xff]
      %v1681 = vld [vmem:[#allocation2 + $0x30] sm:$0xff]
      %v1682 = vld [vmem:[#allocation2 + $0x38] sm:$0xff]
      %s1683 = scalar_lea.vmem %s1, 384
      %v1684 = vld [vmem:[%s1683] sm:$0xf]
      %v1685 = vld [vmem:[%s1683 + $0x4] sm:$0xf]
      %v1686 = vld [vmem:[%s1683 + $0x8] sm:$0xf]
      %v1687 = vld [vmem:[%s1683 + $0xc] sm:$0xf]
      %v1688 = vld [vmem:[%s1683 + $0x10] sm:$0xf]
      %v1689 = vld [vmem:[%s1683 + $0x14] sm:$0xf]
      %v1690 = vld [vmem:[%s1683 + $0x18] sm:$0xf]
      %v1691 = vld [vmem:[%s1683 + $0x1c] sm:$0xf]
      %v1692 = vld [vmem:[%s1683 + $0x20] sm:$0xf]
      %v1693 = vld [vmem:[%s1683 + $0x24] sm:$0xf]
      %v1694 = vld [vmem:[%s1683 + $0x28] sm:$0xf]
      %v1695 = vld [vmem:[%s1683 + $0x2c] sm:$0xf]
      %v1696 = vld [vmem:[%s1683 + $0x30] sm:$0xf]
      %v1697 = vld [vmem:[%s1683 + $0x34] sm:$0xf]
      %v1698 = vld [vmem:[%s1683 + $0x38] sm:$0xf]
      %v1699 = vld [vmem:[%s1683 + $0x3c] sm:$0xf]
      %v1708 = vunpack.c.l.b16 %v1667
      %v1709 = vunpack.c.l.b16 %v1668
      %v1710 = vunpack.c.l.b16 %v1669
      %v1711 = vunpack.c.l.b16 %v1670
      %v1712 = vunpack.c.l.b16 %v1671
      %v1713 = vunpack.c.l.b16 %v1672
      %v1714 = vunpack.c.l.b16 %v1673
      %v1715 = vunpack.c.l.b16 %v1674
      %v1716 = vpack.c.b16 %v1709, %v1708
      %v1717 = vpack.c.b16 %v1711, %v1710
      %v1718 = vpack.c.b16 %v1713, %v1712
      %v1719 = vpack.c.b16 %v1715, %v1714
      %v1740 = vunpack.c.l.b16 %v1684
      %v1741 = vunpack.c.l.b16 %v1685
      %v1742 = vunpack.c.l.b16 %v1686
      %v1743 = vunpack.c.l.b16 %v1687
      %v1744 = vunpack.c.l.b16 %v1688
      %v1745 = vunpack.c.l.b16 %v1689
      %v1746 = vunpack.c.l.b16 %v1690
      %v1747 = vunpack.c.l.b16 %v1691
      %v1748 = vunpack.c.l.b16 %v1692
      %v1749 = vunpack.c.l.b16 %v1693
      %v1750 = vunpack.c.l.b16 %v1694
      %v1751 = vunpack.c.l.b16 %v1695
      %v1752 = vunpack.c.l.b16 %v1696
      %v1753 = vunpack.c.l.b16 %v1697
      %v1754 = vunpack.c.l.b16 %v1698
      %v1755 = vunpack.c.l.b16 %v1699
      %v1756 = vpack.c.b16 %v1741, %v1740
      %v1757 = vpack.c.b16 %v1743, %v1742
      %v1758 = vpack.c.b16 %v1745, %v1744
      %v1759 = vpack.c.b16 %v1747, %v1746
      %v1760 = vpack.c.b16 %v1749, %v1748
      %v1761 = vpack.c.b16 %v1751, %v1750
      %v1762 = vpack.c.b16 %v1753, %v1752
      %v1763 = vpack.c.b16 %v1755, %v1754
      %1772 = vmatprep.subr.bf16.mxu0 0
      %1773 = vmatpush1.bf16.msra.mxu0 %v1756
      %1774 = vmatprep.subr.bf16.mxu0 0
      %1775 = vmatpush1.bf16.msra.mxu0 %v1757
      %1776 = vmatprep.subr.bf16.mxu0 0
      %1777 = vmatpush1.bf16.msra.mxu0 %v1758
      %1778 = vmatprep.subr.bf16.mxu0 0
      %1779 = vmatpush1.bf16.msra.mxu0 %v1759
      %1780 = vmatprep.subr.bf16.mxu0 0
      %1781 = vmatpush1.bf16.msra.mxu0 %v1760
      %1782 = vmatprep.subr.bf16.mxu0 0
      %1783 = vmatpush1.bf16.msra.mxu0 %v1761
      %1784 = vmatprep.subr.bf16.mxu0 0
      %1785 = vmatpush1.bf16.msra.mxu0 %v1762
      %1786 = vmatprep.subr.bf16.mxu0 0
      %1787 = vmatpush1.bf16.msra.mxu0 %v1763
      %1788 = vmatprep.subr.bf16.mxu0 0
      %1789 = vmatpush1.bf16.msra.mxu0 0
      %1790 = vmatprep.subr.bf16.mxu0 0
      %1791 = vmatpush1.bf16.msra.mxu0 0
      %1792 = vmatprep.subr.bf16.mxu0 0
      %1793 = vmatpush1.bf16.msra.mxu0 0
      %1794 = vmatprep.subr.bf16.mxu0 0
      %1795 = vmatpush1.bf16.msra.mxu0 0
      %1796 = vmatprep.subr.bf16.mxu0 0
      %1797 = vmatpush1.bf16.msra.mxu0 0
      %1798 = vmatprep.subr.bf16.mxu0 0
      %1799 = vmatpush1.bf16.msra.mxu0 0
      %1800 = vmatprep.subr.bf16.mxu0 0
      %1801 = vmatpush1.bf16.msra.mxu0 0
      %1802 = vmatprep.subr.bf16.mxu0 0
      %1803 = vmatpush1.bf16.msra.mxu0 0
      %1804 = vmatprep.mubr.bf16.mxu0 0
      %1805 = vmatmul.mubr.bf16.gmra.mrb[0].mxu0 %v1716
      %v1806 = vpop.f32.mrb[0].mxu0
      %v1807 = vadd.f32 0.0, %v1806
      %v1808 = vpop.f32.mrb[0].mxu0
      %v1809 = vpop.f32.mrb[0].mxu0
      %v1810 = vadd.f32 0.0, %v1809
      %v1811 = vpop.f32.mrb[0].mxu0
      %1812 = vmatprep.mubr.bf16.mxu0 0
      %1813 = vmatmul.mubr.bf16.gmra.mrb[0].mxu0 %v1717
      %v1814 = vpop.f32.mrb[0].mxu0
      %v1815 = vadd.f32 0.0, %v1814
      %v1816 = vpop.f32.mrb[0].mxu0
      %v1817 = vpop.f32.mrb[0].mxu0
      %v1818 = vadd.f32 0.0, %v1817
      %v1819 = vpop.f32.mrb[0].mxu0
      %1820 = vmatprep.mubr.bf16.mxu0 0
      %1821 = vmatmul.mubr.bf16.gmra.mrb[0].mxu0 %v1718
      %v1822 = vpop.f32.mrb[0].mxu0
      %v1823 = vadd.f32 0.0, %v1822
      %v1824 = vpop.f32.mrb[0].mxu0
      %v1825 = vpop.f32.mrb[0].mxu0
      %v1826 = vadd.f32 0.0, %v1825
      %v1827 = vpop.f32.mrb[0].mxu0
      %1828 = vmatprep.mubr.bf16.mxu0 0
      %1829 = vmatmul.mubr.bf16.gmra.mrb[0].mxu0 %v1719
      %v1830 = vpop.f32.mrb[0].mxu0
      %v1831 = vadd.f32 0.0, %v1830
      %v1832 = vpop.f32.mrb[0].mxu0
      %v1833 = vpop.f32.mrb[0].mxu0
      %v1834 = vadd.f32 0.0, %v1833
      %v1835 = vpop.f32.mrb[0].mxu0
      %1836 = vdwg.mxu0
      %v1837 = vadd.f32 %v1675, %v1807
      %v1838 = vadd.f32 %v1676, %v1810
      %v1839 = vadd.f32 %v1677, %v1815
      %v1840 = vadd.f32 %v1678, %v1818
      %v1841 = vadd.f32 %v1679, %v1823
      %v1842 = vadd.f32 %v1680, %v1826
      %v1843 = vadd.f32 %v1681, %v1831
      %v1844 = vadd.f32 %v1682, %v1834
      %1845 = vst [vmem:[#allocation2] sm:$0xff] %v1837
      %1846 = vst [vmem:[#allocation2 + $0x8] sm:$0xff] %v1838
      %1847 = vst [vmem:[#allocation2 + $0x10] sm:$0xff] %v1839
      %1848 = vst [vmem:[#allocation2 + $0x18] sm:$0xff] %v1840
      %1849 = vst [vmem:[#allocation2 + $0x20] sm:$0xff] %v1841
      %1850 = vst [vmem:[#allocation2 + $0x28] sm:$0xff] %v1842
      %1851 = vst [vmem:[#allocation2 + $0x30] sm:$0xff] %v1843
      %1852 = vst [vmem:[#allocation2 + $0x38] sm:$0xff] %v1844
      %v1853 = vld [vmem:[%s1666] sm:$0xf]
      %v1854 = vld [vmem:[%s1666 + $0x4] sm:$0x1]
      %v1855 = vld [vmem:[%s1666 + $0x8] sm:$0xf]
      %v1856 = vld [vmem:[%s1666 + $0xc] sm:$0x1]
      %v1857 = vld [vmem:[%s1666 + $0x10] sm:$0xf]
      %v1858 = vld [vmem:[%s1666 + $0x14] sm:$0x1]
      %v1859 = vld [vmem:[%s1666 + $0x18] sm:$0xf]
      %v1860 = vld [vmem:[%s1666 + $0x1c] sm:$0x1]
      %v1861 = vld [vmem:[%s1666 + $0x20] sm:$0xf]
      %v1862 = vld [vmem:[%s1666 + $0x24] sm:$0x1]
      %v1863 = vld [vmem:[%s1666 + $0x28] sm:$0xf]
      %v1864 = vld [vmem:[%s1666 + $0x2c] sm:$0x1]
      %v1865 = vld [vmem:[%s1666 + $0x30] sm:$0xf]
      %v1866 = vld [vmem:[%s1666 + $0x34] sm:$0x1]
      %v1867 = vld [vmem:[%s1666 + $0x38] sm:$0xf]
      %v1868 = vld [vmem:[%s1666 + $0x3c] sm:$0x1]
      %v1870 = vshrl.u32 %v1853, 16
      %v1872 = vrot.slane %v1870, 4
      %v1873 = vshll.u32 %v1853, 16
      %v1875 = vrot.slane %v1873, 5
      %v1876 = vor.u32 %v1872, %v1875
      %v1877 = vrot.slane %v1876, 4
      %v1879 = vshll.u32 %v1854, 16
      %v1881 = vrot.slane %v1879, 5
      %v1882 = vsel %vm427, %v1877, %v1881
      %v1884 = vshrl.u32 %v1855, 16
      %v1886 = vrot.slane %v1884, 4
      %v1887 = vshll.u32 %v1855, 16
      %v1889 = vrot.slane %v1887, 5
      %v1890 = vor.u32 %v1886, %v1889
      %v1891 = vrot.slane %v1890, 4
      %v1893 = vshll.u32 %v1856, 16
      %v1895 = vrot.slane %v1893, 5
      %v1896 = vsel %vm427, %v1891, %v1895
      %v1898 = vshrl.u32 %v1857, 16
      %v1900 = vrot.slane %v1898, 4
      %v1901 = vshll.u32 %v1857, 16
      %v1903 = vrot.slane %v1901, 5
      %v1904 = vor.u32 %v1900, %v1903
      %v1905 = vrot.slane %v1904, 4
      %v1907 = vshll.u32 %v1858, 16
      %v1909 = vrot.slane %v1907, 5
      %v1910 = vsel %vm427, %v1905, %v1909
      %v1912 = vshrl.u32 %v1859, 16
      %v1914 = vrot.slane %v1912, 4
      %v1915 = vshll.u32 %v1859, 16
      %v1917 = vrot.slane %v1915, 5
      %v1918 = vor.u32 %v1914, %v1917
      %v1919 = vrot.slane %v1918, 4
      %v1921 = vshll.u32 %v1860, 16
      %v1923 = vrot.slane %v1921, 5
      %v1924 = vsel %vm427, %v1919, %v1923
      %v1926 = vshrl.u32 %v1861, 16
      %v1928 = vrot.slane %v1926, 4
      %v1929 = vshll.u32 %v1861, 16
      %v1931 = vrot.slane %v1929, 5
      %v1932 = vor.u32 %v1928, %v1931
      %v1933 = vrot.slane %v1932, 4
      %v1935 = vshll.u32 %v1862, 16
      %v1937 = vrot.slane %v1935, 5
      %v1938 = vsel %vm427, %v1933, %v1937
      %v1940 = vshrl.u32 %v1863, 16
      %v1942 = vrot.slane %v1940, 4
      %v1943 = vshll.u32 %v1863, 16
      %v1945 = vrot.slane %v1943, 5
      %v1946 = vor.u32 %v1942, %v1945
      %v1947 = vrot.slane %v1946, 4
      %v1949 = vshll.u32 %v1864, 16
      %v1951 = vrot.slane %v1949, 5
      %v1952 = vsel %vm427, %v1947, %v1951
      %v1954 = vshrl.u32 %v1865, 16
      %v1956 = vrot.slane %v1954, 4
      %v1957 = vshll.u32 %v1865, 16
      %v1959 = vrot.slane %v1957, 5
      %v1960 = vor.u32 %v1956, %v1959
      %v1961 = vrot.slane %v1960, 4
      %v1963 = vshll.u32 %v1866, 16
      %v1965 = vrot.slane %v1963, 5
      %v1966 = vsel %vm427, %v1961, %v1965
      %v1968 = vshrl.u32 %v1867, 16
      %v1970 = vrot.slane %v1968, 4
      %v1971 = vshll.u32 %v1867, 16
      %v1973 = vrot.slane %v1971, 5
      %v1974 = vor.u32 %v1970, %v1973
      %v1975 = vrot.slane %v1974, 4
      %v1977 = vshll.u32 %v1868, 16
      %v1979 = vrot.slane %v1977, 5
      %v1980 = vsel %vm427, %v1975, %v1979
      %v1981 = vld [vmem:[#allocation2] sm:$0xff]
      %v1982 = vld [vmem:[#allocation2 + $0x8] sm:$0xff]
      %v1983 = vld [vmem:[#allocation2 + $0x10] sm:$0xff]
      %v1984 = vld [vmem:[#allocation2 + $0x18] sm:$0xff]
      %v1985 = vld [vmem:[#allocation2 + $0x20] sm:$0xff]
      %v1986 = vld [vmem:[#allocation2 + $0x28] sm:$0xff]
      %v1987 = vld [vmem:[#allocation2 + $0x30] sm:$0xff]
      %v1988 = vld [vmem:[#allocation2 + $0x38] sm:$0xff]
      %s1989 = scalar_lea.vmem %s1, 448
      %v1990 = vld [vmem:[%s1989] sm:$0xf]
      %v1991 = vld [vmem:[%s1989 + $0x4] sm:$0xf]
      %v1992 = vld [vmem:[%s1989 + $0x8] sm:$0xf]
      %v1993 = vld [vmem:[%s1989 + $0xc] sm:$0xf]
      %v1994 = vld [vmem:[%s1989 + $0x10] sm:$0xf]
      %v1995 = vld [vmem:[%s1989 + $0x14] sm:$0xf]
      %v1996 = vld [vmem:[%s1989 + $0x18] sm:$0xf]
      %v1997 = vld [vmem:[%s1989 + $0x1c] sm:$0xf]
      %v1998 = vld [vmem:[%s1989 + $0x20] sm:$0xf]
      %v1999 = vld [vmem:[%s1989 + $0x24] sm:$0xf]
      %v2000 = vld [vmem:[%s1989 + $0x28] sm:$0xf]
      %v2001 = vld [vmem:[%s1989 + $0x2c] sm:$0xf]
      %v2002 = vld [vmem:[%s1989 + $0x30] sm:$0xf]
      %v2003 = vld [vmem:[%s1989 + $0x34] sm:$0xf]
      %v2004 = vld [vmem:[%s1989 + $0x38] sm:$0xf]
      %v2005 = vld [vmem:[%s1989 + $0x3c] sm:$0xf]
      %v2006 = vunpack.c.l.b16 %v1882
      %v2007 = vunpack.c.l.b16 %v1896
      %v2008 = vunpack.c.l.b16 %v1910
      %v2009 = vunpack.c.l.b16 %v1924
      %v2010 = vunpack.c.l.b16 %v1938
      %v2011 = vunpack.c.l.b16 %v1952
      %v2012 = vunpack.c.l.b16 %v1966
      %v2013 = vunpack.c.l.b16 %v1980
      %v2014 = vpack.c.b16 %v2007, %v2006
      %v2015 = vpack.c.b16 %v2009, %v2008
      %v2016 = vpack.c.b16 %v2011, %v2010
      %v2017 = vpack.c.b16 %v2013, %v2012
      %v2038 = vunpack.c.l.b16 %v1990
      %v2039 = vunpack.c.l.b16 %v1991
      %v2040 = vunpack.c.l.b16 %v1992
      %v2041 = vunpack.c.l.b16 %v1993
      %v2042 = vunpack.c.l.b16 %v1994
      %v2043 = vunpack.c.l.b16 %v1995
      %v2044 = vunpack.c.l.b16 %v1996
      %v2045 = vunpack.c.l.b16 %v1997
      %v2046 = vunpack.c.l.b16 %v1998
      %v2047 = vunpack.c.l.b16 %v1999
      %v2048 = vunpack.c.l.b16 %v2000
      %v2049 = vunpack.c.l.b16 %v2001
      %v2050 = vunpack.c.l.b16 %v2002
      %v2051 = vunpack.c.l.b16 %v2003
      %v2052 = vunpack.c.l.b16 %v2004
      %v2053 = vunpack.c.l.b16 %v2005
      %v2054 = vpack.c.b16 %v2039, %v2038
      %v2055 = vpack.c.b16 %v2041, %v2040
      %v2056 = vpack.c.b16 %v2043, %v2042
      %v2057 = vpack.c.b16 %v2045, %v2044
      %v2058 = vpack.c.b16 %v2047, %v2046
      %v2059 = vpack.c.b16 %v2049, %v2048
      %v2060 = vpack.c.b16 %v2051, %v2050
      %v2061 = vpack.c.b16 %v2053, %v2052
      %2070 = vmatprep.subr.bf16.mxu0 0
      %2071 = vmatpush1.bf16.msra.mxu0 %v2054
      %2072 = vmatprep.subr.bf16.mxu0 0
      %2073 = vmatpush1.bf16.msra.mxu0 %v2055
      %2074 = vmatprep.subr.bf16.mxu0 0
      %2075 = vmatpush1.bf16.msra.mxu0 %v2056
      %2076 = vmatprep.subr.bf16.mxu0 0
      %2077 = vmatpush1.bf16.msra.mxu0 %v2057
      %2078 = vmatprep.subr.bf16.mxu0 0
      %2079 = vmatpush1.bf16.msra.mxu0 %v2058
      %2080 = vmatprep.subr.bf16.mxu0 0
      %2081 = vmatpush1.bf16.msra.mxu0 %v2059
      %2082 = vmatprep.subr.bf16.mxu0 0
      %2083 = vmatpush1.bf16.msra.mxu0 %v2060
      %2084 = vmatprep.subr.bf16.mxu0 0
      %2085 = vmatpush1.bf16.msra.mxu0 %v2061
      %2086 = vmatprep.subr.bf16.mxu0 0
      %2087 = vmatpush1.bf16.msra.mxu0 0
      %2088 = vmatprep.subr.bf16.mxu0 0
      %2089 = vmatpush1.bf16.msra.mxu0 0
      %2090 = vmatprep.subr.bf16.mxu0 0
      %2091 = vmatpush1.bf16.msra.mxu0 0
      %2092 = vmatprep.subr.bf16.mxu0 0
      %2093 = vmatpush1.bf16.msra.mxu0 0
      %2094 = vmatprep.subr.bf16.mxu0 0
      %2095 = vmatpush1.bf16.msra.mxu0 0
      %2096 = vmatprep.subr.bf16.mxu0 0
      %2097 = vmatpush1.bf16.msra.mxu0 0
      %2098 = vmatprep.subr.bf16.mxu0 0
      %2099 = vmatpush1.bf16.msra.mxu0 0
      %2100 = vmatprep.subr.bf16.mxu0 0
      %2101 = vmatpush1.bf16.msra.mxu0 0
      %2102 = vmatprep.mubr.bf16.mxu0 0
      %2103 = vmatmul.mubr.bf16.gmra.mrb[0].mxu0 %v2014
      %v2104 = vpop.f32.mrb[0].mxu0
      %v2105 = vadd.f32 0.0, %v2104
      %v2106 = vpop.f32.mrb[0].mxu0
      %v2107 = vpop.f32.mrb[0].mxu0
      %v2108 = vadd.f32 0.0, %v2107
      %v2109 = vpop.f32.mrb[0].mxu0
      %2110 = vmatprep.mubr.bf16.mxu0 0
      %2111 = vmatmul.mubr.bf16.gmra.mrb[0].mxu0 %v2015
      %v2112 = vpop.f32.mrb[0].mxu0
      %v2113 = vadd.f32 0.0, %v2112
      %v2114 = vpop.f32.mrb[0].mxu0
      %v2115 = vpop.f32.mrb[0].mxu0
      %v2116 = vadd.f32 0.0, %v2115
      %v2117 = vpop.f32.mrb[0].mxu0
      %2118 = vmatprep.mubr.bf16.mxu0 0
      %2119 = vmatmul.mubr.bf16.gmra.mrb[0].mxu0 %v2016
      %v2120 = vpop.f32.mrb[0].mxu0
      %v2121 = vadd.f32 0.0, %v2120
      %v2122 = vpop.f32.mrb[0].mxu0
      %v2123 = vpop.f32.mrb[0].mxu0
      %v2124 = vadd.f32 0.0, %v2123
      %v2125 = vpop.f32.mrb[0].mxu0
      %2126 = vmatprep.mubr.bf16.mxu0 0
      %2127 = vmatmul.mubr.bf16.gmra.mrb[0].mxu0 %v2017
      %v2128 = vpop.f32.mrb[0].mxu0
      %v2129 = vadd.f32 0.0, %v2128
      %v2130 = vpop.f32.mrb[0].mxu0
      %v2131 = vpop.f32.mrb[0].mxu0
      %v2132 = vadd.f32 0.0, %v2131
      %v2133 = vpop.f32.mrb[0].mxu0
      %2134 = vdwg.mxu0
      %v2135 = vadd.f32 %v1981, %v2105
      %v2136 = vadd.f32 %v1982, %v2108
      %v2137 = vadd.f32 %v1983, %v2113
      %v2138 = vadd.f32 %v1984, %v2116
      %v2139 = vadd.f32 %v1985, %v2121
      %v2140 = vadd.f32 %v1986, %v2124
      %v2141 = vadd.f32 %v1987, %v2129
      %v2142 = vadd.f32 %v1988, %v2132
      %2143 = vst [vmem:[#allocation2] sm:$0xff] %v2135
      %2144 = vst [vmem:[#allocation2 + $0x8] sm:$0xff] %v2136
      %2145 = vst [vmem:[#allocation2 + $0x10] sm:$0xff] %v2137
      %2146 = vst [vmem:[#allocation2 + $0x18] sm:$0xff] %v2138
      %2147 = vst [vmem:[#allocation2 + $0x20] sm:$0xff] %v2139
      %2148 = vst [vmem:[#allocation2 + $0x28] sm:$0xff] %v2140
      %2149 = vst [vmem:[#allocation2 + $0x30] sm:$0xff] %v2141
      %2150 = vst [vmem:[#allocation2 + $0x38] sm:$0xff] %v2142
      %v2151 = vld [vmem:[%s1666] sm:$0xe]
      %v2152 = vld [vmem:[%s1666 + $0x4] sm:$0x1]
      %v2153 = vld [vmem:[%s1666 + $0x8] sm:$0xe]
      %v2154 = vld [vmem:[%s1666 + $0xc] sm:$0x1]
      %v2155 = vld [vmem:[%s1666 + $0x10] sm:$0xe]
      %v2156 = vld [vmem:[%s1666 + $0x14] sm:$0x1]
      %v2157 = vld [vmem:[%s1666 + $0x18] sm:$0xe]
      %v2158 = vld [vmem:[%s1666 + $0x1c] sm:$0x1]
      %v2159 = vld [vmem:[%s1666 + $0x20] sm:$0xe]
      %v2160 = vld [vmem:[%s1666 + $0x24] sm:$0x1]
      %v2161 = vld [vmem:[%s1666 + $0x28] sm:$0xe]
      %v2162 = vld [vmem:[%s1666 + $0x2c] sm:$0x1]
      %v2163 = vld [vmem:[%s1666 + $0x30] sm:$0xe]
      %v2164 = vld [vmem:[%s1666 + $0x34] sm:$0x1]
      %v2165 = vld [vmem:[%s1666 + $0x38] sm:$0xe]
      %v2166 = vld [vmem:[%s1666 + $0x3c] sm:$0x1]
      %v2183 = vrot.slane %v2151, 5
      %v2184 = vrot.slane %v2183, 4
      %v2185 = vrot.slane %v2152, 5
      %v2186 = vsel %vm744, %v2184, %v2185
      %v2187 = vrot.slane %v2153, 5
      %v2188 = vrot.slane %v2187, 4
      %v2189 = vrot.slane %v2154, 5
      %v2190 = vsel %vm744, %v2188, %v2189
      %v2191 = vrot.slane %v2155, 5
      %v2192 = vrot.slane %v2191, 4
      %v2193 = vrot.slane %v2156, 5
      %v2194 = vsel %vm744, %v2192, %v2193
      %v2195 = vrot.slane %v2157, 5
      %v2196 = vrot.slane %v2195, 4
      %v2197 = vrot.slane %v2158, 5
      %v2198 = vsel %vm744, %v2196, %v2197
      %v2199 = vrot.slane %v2159, 5
      %v2200 = vrot.slane %v2199, 4
      %v2201 = vrot.slane %v2160, 5
      %v2202 = vsel %vm744, %v2200, %v2201
      %v2203 = vrot.slane %v2161, 5
      %v2204 = vrot.slane %v2203, 4
      %v2205 = vrot.slane %v2162, 5
      %v2206 = vsel %vm744, %v2204, %v2205
      %v2207 = vrot.slane %v2163, 5
      %v2208 = vrot.slane %v2207, 4
      %v2209 = vrot.slane %v2164, 5
      %v2210 = vsel %vm744, %v2208, %v2209
      %v2211 = vrot.slane %v2165, 5
      %v2212 = vrot.slane %v2211, 4
      %v2213 = vrot.slane %v2166, 5
      %v2214 = vsel %vm744, %v2212, %v2213
      %v2215 = vld [vmem:[#allocation2] sm:$0xff]
      %v2216 = vld [vmem:[#allocation2 + $0x8] sm:$0xff]
      %v2217 = vld [vmem:[#allocation2 + $0x10] sm:$0xff]
      %v2218 = vld [vmem:[#allocation2 + $0x18] sm:$0xff]
      %v2219 = vld [vmem:[#allocation2 + $0x20] sm:$0xff]
      %v2220 = vld [vmem:[#allocation2 + $0x28] sm:$0xff]
      %v2221 = vld [vmem:[#allocation2 + $0x30] sm:$0xff]
      %v2222 = vld [vmem:[#allocation2 + $0x38] sm:$0xff]
      %s2223 = scalar_lea.vmem %s1, 512
      %v2224 = vld [vmem:[%s2223] sm:$0xf]
      %v2225 = vld [vmem:[%s2223 + $0x4] sm:$0xf]
      %v2226 = vld [vmem:[%s2223 + $0x8] sm:$0xf]
      %v2227 = vld [vmem:[%s2223 + $0xc] sm:$0xf]
      %v2228 = vld [vmem:[%s2223 + $0x10] sm:$0xf]
      %v2229 = vld [vmem:[%s2223 + $0x14] sm:$0xf]
      %v2230 = vld [vmem:[%s2223 + $0x18] sm:$0xf]
      %v2231 = vld [vmem:[%s2223 + $0x1c] sm:$0xf]
      %v2232 = vld [vmem:[%s2223 + $0x20] sm:$0xf]
      %v2233 = vld [vmem:[%s2223 + $0x24] sm:$0xf]
      %v2234 = vld [vmem:[%s2223 + $0x28] sm:$0xf]
      %v2235 = vld [vmem:[%s2223 + $0x2c] sm:$0xf]
      %v2236 = vld [vmem:[%s2223 + $0x30] sm:$0xf]
      %v2237 = vld [vmem:[%s2223 + $0x34] sm:$0xf]
      %v2238 = vld [vmem:[%s2223 + $0x38] sm:$0xf]
      %v2239 = vld [vmem:[%s2223 + $0x3c] sm:$0xf]
      %v2240 = vunpack.c.l.b16 %v2186
      %v2241 = vunpack.c.l.b16 %v2190
      %v2242 = vunpack.c.l.b16 %v2194
      %v2243 = vunpack.c.l.b16 %v2198
      %v2244 = vunpack.c.l.b16 %v2202
      %v2245 = vunpack.c.l.b16 %v2206
      %v2246 = vunpack.c.l.b16 %v2210
      %v2247 = vunpack.c.l.b16 %v2214
      %v2248 = vpack.c.b16 %v2241, %v2240
      %v2249 = vpack.c.b16 %v2243, %v2242
      %v2250 = vpack.c.b16 %v2245, %v2244
      %v2251 = vpack.c.b16 %v2247, %v2246
      %v2272 = vunpack.c.l.b16 %v2224
      %v2273 = vunpack.c.l.b16 %v2225
      %v2274 = vunpack.c.l.b16 %v2226
      %v2275 = vunpack.c.l.b16 %v2227
      %v2276 = vunpack.c.l.b16 %v2228
      %v2277 = vunpack.c.l.b16 %v2229
      %v2278 = vunpack.c.l.b16 %v2230
      %v2279 = vunpack.c.l.b16 %v2231
      %v2280 = vunpack.c.l.b16 %v2232
      %v2281 = vunpack.c.l.b16 %v2233
      %v2282 = vunpack.c.l.b16 %v2234
      %v2283 = vunpack.c.l.b16 %v2235
      %v2284 = vunpack.c.l.b16 %v2236
      %v2285 = vunpack.c.l.b16 %v2237
      %v2286 = vunpack.c.l.b16 %v2238
      %v2287 = vunpack.c.l.b16 %v2239
      %v2288 = vpack.c.b16 %v2273, %v2272
      %v2289 = vpack.c.b16 %v2275, %v2274
      %v2290 = vpack.c.b16 %v2277, %v2276
      %v2291 = vpack.c.b16 %v2279, %v2278
      %v2292 = vpack.c.b16 %v2281, %v2280
      %v2293 = vpack.c.b16 %v2283, %v2282
      %v2294 = vpack.c.b16 %v2285, %v2284
      %v2295 = vpack.c.b16 %v2287, %v2286
      %2304 = vmatprep.subr.bf16.mxu0 0
      %2305 = vmatpush1.bf16.msra.mxu0 %v2288
      %2306 = vmatprep.subr.bf16.mxu0 0
      %2307 = vmatpush1.bf16.msra.mxu0 %v2289
      %2308 = vmatprep.subr.bf16.mxu0 0
      %2309 = vmatpush1.bf16.msra.mxu0 %v2290
      %2310 = vmatprep.subr.bf16.mxu0 0
      %2311 = vmatpush1.bf16.msra.mxu0 %v2291
      %2312 = vmatprep.subr.bf16.mxu0 0
      %2313 = vmatpush1.bf16.msra.mxu0 %v2292
      %2314 = vmatprep.subr.bf16.mxu0 0
      %2315 = vmatpush1.bf16.msra.mxu0 %v2293
      %2316 = vmatprep.subr.bf16.mxu0 0
      %2317 = vmatpush1.bf16.msra.mxu0 %v2294
      %2318 = vmatprep.subr.bf16.mxu0 0
      %2319 = vmatpush1.bf16.msra.mxu0 %v2295
      %2320 = vmatprep.subr.bf16.mxu0 0
      %2321 = vmatpush1.bf16.msra.mxu0 0
      %2322 = vmatprep.subr.bf16.mxu0 0
      %2323 = vmatpush1.bf16.msra.mxu0 0
      %2324 = vmatprep.subr.bf16.mxu0 0
      %2325 = vmatpush1.bf16.msra.mxu0 0
      %2326 = vmatprep.subr.bf16.mxu0 0
      %2327 = vmatpush1.bf16.msra.mxu0 0
      %2328 = vmatprep.subr.bf16.mxu0 0
      %2329 = vmatpush1.bf16.msra.mxu0 0
      %2330 = vmatprep.subr.bf16.mxu0 0
      %2331 = vmatpush1.bf16.msra.mxu0 0
      %2332 = vmatprep.subr.bf16.mxu0 0
      %2333 = vmatpush1.bf16.msra.mxu0 0
      %2334 = vmatprep.subr.bf16.mxu0 0
      %2335 = vmatpush1.bf16.msra.mxu0 0
      %2336 = vmatprep.mubr.bf16.mxu0 0
      %2337 = vmatmul.mubr.bf16.gmra.mrb[0].mxu0 %v2248
      %v2338 = vpop.f32.mrb[0].mxu0
      %v2339 = vadd.f32 0.0, %v2338
      %v2340 = vpop.f32.mrb[0].mxu0
      %v2341 = vpop.f32.mrb[0].mxu0
      %v2342 = vadd.f32 0.0, %v2341
      %v2343 = vpop.f32.mrb[0].mxu0
      %2344 = vmatprep.mubr.bf16.mxu0 0
      %2345 = vmatmul.mubr.bf16.gmra.mrb[0].mxu0 %v2249
      %v2346 = vpop.f32.mrb[0].mxu0
      %v2347 = vadd.f32 0.0, %v2346
      %v2348 = vpop.f32.mrb[0].mxu0
      %v2349 = vpop.f32.mrb[0].mxu0
      %v2350 = vadd.f32 0.0, %v2349
      %v2351 = vpop.f32.mrb[0].mxu0
      %2352 = vmatprep.mubr.bf16.mxu0 0
      %2353 = vmatmul.mubr.bf16.gmra.mrb[0].mxu0 %v2250
      %v2354 = vpop.f32.mrb[0].mxu0
      %v2355 = vadd.f32 0.0, %v2354
      %v2356 = vpop.f32.mrb[0].mxu0
      %v2357 = vpop.f32.mrb[0].mxu0
      %v2358 = vadd.f32 0.0, %v2357
      %v2359 = vpop.f32.mrb[0].mxu0
      %2360 = vmatprep.mubr.bf16.mxu0 0
      %2361 = vmatmul.mubr.bf16.gmra.mrb[0].mxu0 %v2251
      %v2362 = vpop.f32.mrb[0].mxu0
      %v2363 = vadd.f32 0.0, %v2362
      %v2364 = vpop.f32.mrb[0].mxu0
      %v2365 = vpop.f32.mrb[0].mxu0
      %v2366 = vadd.f32 0.0, %v2365
      %v2367 = vpop.f32.mrb[0].mxu0
      %2368 = vdwg.mxu0
      %v2369 = vadd.f32 %v2215, %v2339
      %v2370 = vadd.f32 %v2216, %v2342
      %v2371 = vadd.f32 %v2217, %v2347
      %v2372 = vadd.f32 %v2218, %v2350
      %v2373 = vadd.f32 %v2219, %v2355
      %v2374 = vadd.f32 %v2220, %v2358
      %v2375 = vadd.f32 %v2221, %v2363
      %v2376 = vadd.f32 %v2222, %v2366
      %2377 = vst [vmem:[#allocation2] sm:$0xff] %v2369
      %2378 = vst [vmem:[#allocation2 + $0x8] sm:$0xff] %v2370
      %2379 = vst [vmem:[#allocation2 + $0x10] sm:$0xff] %v2371
      %2380 = vst [vmem:[#allocation2 + $0x18] sm:$0xff] %v2372
      %2381 = vst [vmem:[#allocation2 + $0x20] sm:$0xff] %v2373
      %2382 = vst [vmem:[#allocation2 + $0x28] sm:$0xff] %v2374
      %2383 = vst [vmem:[#allocation2 + $0x30] sm:$0xff] %v2375
      %2384 = vst [vmem:[#allocation2 + $0x38] sm:$0xff] %v2376
      %v2385 = vld [vmem:[#allocation2] sm:$0xff]
      %v2386 = vld [vmem:[#allocation2 + $0x8] sm:$0xff]
      %v2387 = vld [vmem:[#allocation2 + $0x10] sm:$0xff]
      %v2388 = vld [vmem:[#allocation2 + $0x18] sm:$0xff]
      %v2389 = vld [vmem:[#allocation2 + $0x20] sm:$0xff]
      %v2390 = vld [vmem:[#allocation2 + $0x28] sm:$0xff]
      %v2391 = vld [vmem:[#allocation2 + $0x30] sm:$0xff]
      %v2392 = vld [vmem:[#allocation2 + $0x38] sm:$0xff]
      %v2393 = vpack.c.bf16 %v2385, %v2385
      %v2394 = vpack.c.bf16 %v2386, %v2386
      %v2395 = vpack.c.bf16 %v2387, %v2387
      %v2396 = vpack.c.bf16 %v2388, %v2388
      %v2397 = vpack.c.bf16 %v2389, %v2389
      %v2398 = vpack.c.bf16 %v2390, %v2390
      %v2399 = vpack.c.bf16 %v2391, %v2391
      %v2400 = vpack.c.bf16 %v2392, %v2392
      %2401 = vst [vmem:[%s208] sm:$0xf] %v2393
      %2402 = vst [vmem:[%s208 + $0x4] sm:$0xf] %v2394
      %2403 = vst [vmem:[%s208 + $0x8] sm:$0xf] %v2395
      %2404 = vst [vmem:[%s208 + $0xc] sm:$0xf] %v2396
      %2405 = vst [vmem:[%s208 + $0x10] sm:$0xf] %v2397
      %2406 = vst [vmem:[%s208 + $0x14] sm:$0xf] %v2398
      %2407 = vst [vmem:[%s208 + $0x18] sm:$0xf] %v2399
      %2408 = vst [vmem:[%s208 + $0x1c] sm:$0xf] %v2400
      %v2409 = vadd.f32 %v2385, %v2386
      %v2410 = vadd.f32 %v2409, %v2387
      %v2411 = vadd.f32 %v2410, %v2388
      %v2412 = vadd.f32 %v2411, %v2389
      %v2413 = vadd.f32 %v2412, %v2390
      %v2414 = vadd.f32 %v2413, %v2391
      %v2415 = vadd.f32 %v2414, %v2392
      %v2416 = vrot.slane %v2415, 4
      %v2417 = vadd.f32 %v2415, %v2416
      %v2418 = vrot.slane %v2417, 2
      %v2419 = vadd.f32 %v2417, %v2418
      %v2420 = vrot.slane %v2419, 1
      %v2421 = vadd.f32 %v2419, %v2420
      %2422 = vst [vmem:[%s211] sm:$0x1] %v2421
      %v2423 = vmul.f32 %v2385, %v2385
      %v2424 = vmul.f32 %v2386, %v2386
      %v2425 = vmul.f32 %v2387, %v2387
      %v2426 = vmul.f32 %v2388, %v2388
      %v2427 = vmul.f32 %v2389, %v2389
      %v2428 = vmul.f32 %v2390, %v2390
      %v2429 = vmul.f32 %v2391, %v2391
      %v2430 = vmul.f32 %v2392, %v2392
      %v2431 = vadd.f32 %v2423, %v2424
      %v2432 = vadd.f32 %v2431, %v2425
      %v2433 = vadd.f32 %v2432, %v2426
      %v2434 = vadd.f32 %v2433, %v2427
      %v2435 = vadd.f32 %v2434, %v2428
      %v2436 = vadd.f32 %v2435, %v2429
      %v2437 = vadd.f32 %v2436, %v2430
      %v2438 = vrot.slane %v2437, 4
      %v2439 = vadd.f32 %v2437, %v2438
      %v2440 = vrot.slane %v2439, 2
      %v2441 = vadd.f32 %v2439, %v2440
      %v2442 = vrot.slane %v2441, 1
      %v2443 = vadd.f32 %v2441, %v2442
      %2444 = vst [vmem:[%s214] sm:$0x1] %v2443
      %p2445 = scmp.lt.s32.totalorder %s16, 1
      %s2446 = scalar_select %p2445, %s16, 1
      %s2447 = smul.addr %s2446, 8
      %s2448 = smul.addr %s2447, 4
      %s2449 = scalar_lea.vmem %s2, %s2448
      %p2450 = scmp.lt.s32.totalorder %s16, 1
      %s2451 = scalar_select %p2450, %s16, 1
      %s2452 = scalar_lea.vmem %s3, %s2451
      %p2453 = scmp.lt.s32.totalorder %s16, 1
      %s2454 = scalar_select %p2453, %s16, 1
      %s2455 = scalar_lea.vmem %s4, %s2454
      // Predicated region
      $region29: #{basic_block_forward.4} parent=27 // pred_check
        %p2456 = pneg %p81
      $region30: #{basic_block_forward.4} parent=27 // pred_check_branch
        %2458 = sbr.rel (%p2456) target = $region32
      $region31: #{basic_block_forward.4} parent=27 // pred_region
        _
      $region32: #{basic_block_forward.4} parent=27 // pred_fallthru
        _
      // Predicated region
      $region33: #{basic_block_forward.4} parent=27 // pred_check
        %p2459 = pneg %p107
      $region34: #{basic_block_forward.4} parent=27 // pred_check_branch
        %2461 = sbr.rel (%p2459) target = $region36
      $region35: #{basic_block_forward.4} parent=27 // pred_region
        _
      $region36: #{basic_block_forward.4} parent=27 // pred_fallthru
        _
      // Predicated region
      $region37: #{basic_block_forward.4} parent=27 // pred_check
        %p2462 = pneg %p133
      $region38: #{basic_block_forward.4} parent=27 // pred_check_branch
        %2464 = sbr.rel (%p2462) target = $region40
      $region39: #{basic_block_forward.4} parent=27 // pred_region
        _
      $region40: #{basic_block_forward.4} parent=27 // pred_fallthru
        _
    $region28: #{basic_block_forward.4} parent=5 // pred_fallthru
      _
    %p2465 = scmp.le.s32.totalorder 2, %s11
    // Predicated region
    $region41: #{basic_block_forward.4} parent=5 // pred_check
      %p2466 = pneg %p2465
    $region42: #{basic_block_forward.4} parent=5 // pred_check_branch
      %2468 = sbr.rel (%p2466) target = $region44
    $region43: #{basic_block_forward.4} parent=5 // pred_region
      %s2469 = ssub.s32 %s11, 2
      // Predicated region
      $region45: #{basic_block_forward.4} parent=43 // pred_check
        %p2470 = pneg %p87
      $region46: #{basic_block_forward.4} parent=43 // pred_check_branch
        %2472 = sbr.rel (%p2470) target = $region48
      $region47: #{basic_block_forward.4} parent=43 // pred_region
        %p2473 = scmp.lt.s32.totalorder %s17, 1
        %s2474 = scalar_select %p2473, %s17, 1
        %s2475 = smul.addr %s2474, 8
        %s2476 = smul.addr %s2475, 4
        %s2477 = scalar_lea.vmem %s2, %s2476
      $region48: #{basic_block_forward.4} parent=43 // pred_fallthru
        _
      // Predicated region
      $region49: #{basic_block_forward.4} parent=43 // pred_check
        %p2478 = pneg %p113
      $region50: #{basic_block_forward.4} parent=43 // pred_check_branch
        %2480 = sbr.rel (%p2478) target = $region52
      $region51: #{basic_block_forward.4} parent=43 // pred_region
        %p2481 = scmp.lt.s32.totalorder %s17, 1
        %s2482 = scalar_select %p2481, %s17, 1
        %s2483 = scalar_lea.vmem %s3, %s2482
      $region52: #{basic_block_forward.4} parent=43 // pred_fallthru
        _
      // Predicated region
      $region53: #{basic_block_forward.4} parent=43 // pred_check
        %p2484 = pneg %p139
      $region54: #{basic_block_forward.4} parent=43 // pred_check_branch
        %2486 = sbr.rel (%p2484) target = $region56
      $region55: #{basic_block_forward.4} parent=43 // pred_region
        %p2487 = scmp.lt.s32.totalorder %s17, 1
        %s2488 = scalar_select %p2487, %s17, 1
        %s2489 = scalar_lea.vmem %s4, %s2488
      $region56: #{basic_block_forward.4} parent=43 // pred_fallthru
        _
    $region44: #{basic_block_forward.4} parent=5 // pred_fallthru
      _
  $region6: #{basic_block_forward.4} parent=0 // loop_footer
    %s15 = sadd.s32 1, %s11
  $region7: #{basic_block_forward.4} parent=0 // loop_footer_branch
    %10 = sbr.rel target = $region3
  $region8: #{basic_block_forward.4} parent=0 // loop_exit
    _

</llo_original>
